<compile_context>
chip_gen: v7x
topology: tpu7x:2x2x1
jax: 0.10.0
libtpu: 0.0.40
codegen_flags: <defaults>
</compile_context>

<pallas_src>
import math

import jax
import jax.numpy as jnp
import numpy as np
from jax.experimental import pallas as pl
from jax.experimental.pallas import tpu as pltpu


# ---------------------------------------------------------------------------
# VMEM limit: generation-aware (v7x: 64 MiB phys; v5e/v6e: 128 MiB phys).
# ---------------------------------------------------------------------------
_DEFAULT_VMEM_LIMIT = 48 * 1024 * 1024
_VMEM_LIMIT_CACHE = [None]


def _vmem_limit_bytes():
    if _VMEM_LIMIT_CACHE[0] is None:
        limit = _DEFAULT_VMEM_LIMIT
        try:
            cap = getattr(pltpu.get_tpu_info(), "vmem_capacity_bytes", None)
            if cap:
                # ~60% of physical VMEM, capped to keep scheduler headroom.
                limit = int(min(max(cap * 6 // 10, 32 * 1024 * 1024), 100 * 1024 * 1024))
        except Exception:
            pass
        _VMEM_LIMIT_CACHE[0] = limit
    return _VMEM_LIMIT_CACHE[0]


def _choose_time_chunk(T, B, tt_req):
    """Pick a time-chunk tt and padded length Tp.

    If the whole sequence fits in one chunk, use a single block (no (8,128)
    divisibility constraint).  Otherwise make tt*B a multiple of 8 (sublane
    alignment for interior blocks) while minimising time padding."""
    if tt_req >= T:
        return T, T
    m = 8 // math.gcd(B, 8)            # smallest tt step so tt*B % 8 == 0
    nc = -(-T // tt_req)               # ceil
    tt = -(-(-(-T // nc)) // m) * m    # ceil(ceil(T/nc)/m)*m
    Tp = nc * tt
    return tt, Tp


# ---------------------------------------------------------------------------
# Fused bidirectional GRU layer kernel:
#   per time-chunk: gi projection GEMM (throughput) + serial recurrence with a
#   single block-diagonal hidden matmul per step for both directions.
# ---------------------------------------------------------------------------
def _make_layer_kernel(tt, nc, B, H, first, emit_out):
    H2, H3 = 2 * H, 3 * H

    def kernel(*refs):
        if first:
            (lens_ref, xf_ref, xb_ref, wf_ref, wb_ref,
             bgif_ref, bgib_ref, whh_ref, bnf_ref, bnb_ref) = refs[:10]
            rest = refs[10:]
        else:
            (lens_ref, af_ref, bf_ref, ab_ref, bb_ref,
             wft_ref, wfb_ref, wbt_ref, wbb_ref,
             bgif_ref, bgib_ref, whh_ref, bnf_ref, bnb_ref) = refs[:14]
            rest = refs[14:]
        if emit_out:
            outf_ref, outb_ref, hfin_ref, gif_scr, gib_scr, hcat_scr = rest
        else:
            hfin_ref, gif_scr, gib_scr, hcat_scr = rest

        c = pl.program_id(0)

        @pl.when(c == 0)
        def _init():
            hcat_scr[...] = jnp.zeros_like(hcat_scr)

        # ---- chunk prologue: input projection (off the serial chain, f32 acc,
        #      never leaves VMEM).  gi already contains b_ih (+ b_hh for r/z).
        if first:
            gif_scr[...] = (jnp.dot(xf_ref[...], wf_ref[...],
                                    preferred_element_type=jnp.float32) + bgif_ref[...])
            gib_scr[...] = (jnp.dot(xb_ref[...], wb_ref[...],
                                    preferred_element_type=jnp.float32) + bgib_ref[...])
        else:
            gif_scr[...] = (jnp.dot(af_ref[...], wft_ref[...], preferred_element_type=jnp.float32)
                            + jnp.dot(bf_ref[...], wfb_ref[...], preferred_element_type=jnp.float32)
                            + bgif_ref[...])
            gib_scr[...] = (jnp.dot(ab_ref[...], wbt_ref[...], preferred_element_type=jnp.float32)
                            + jnp.dot(bb_ref[...], wbb_ref[...], preferred_element_type=jnp.float32)
                            + bgib_ref[...])

        lens = lens_ref[...]                                   # (B, 1) int32, loaded once
        bnf = jnp.broadcast_to(bnf_ref[...], (B, H))           # hoisted broadcasts
        bnb = jnp.broadcast_to(bnb_ref[...], (B, H))

        h_cat = hcat_scr[...]                                  # (B, 2H) f32 carry [h_f | h_b]
        t0_f = c * tt                                          # global time of fwd chunk start
        t0_b = (nc - 1 - c) * tt                               # global time of bwd chunk start

        # Fully unrolled chunk; fwd and bwd serial chains interleaved.  One MXU
        # push per step (block-diagonal weight, columns [rz_f | rz_b | n_f | n_b]),
        # one sigmoid per direction over the lane-contiguous [r|z] slab.
        for s in range(tt):
            j = tt - 1 - s
            gh = jnp.dot(h_cat.astype(jnp.bfloat16), whh_ref[...],
                         preferred_element_type=jnp.float32)            # (B, 6H)
            gif = gif_scr[s * B:(s + 1) * B, :]                          # (B, 3H)
            gib = gib_scr[j * B:(j + 1) * B, :]
            rz_f = jax.nn.sigmoid(gif[:, :H2] + gh[:, :H2])
            rz_b = jax.nn.sigmoid(gib[:, :H2] + gh[:, H2:2 * H2])
            n_f = jnp.tanh(gif[:, H2:] + rz_f[:, :H] * (gh[:, 2 * H2:2 * H2 + H] + bnf))
            n_b = jnp.tanh(gib[:, H2:] + rz_b[:, :H] * (gh[:, 2 * H2 + H:] + bnb))
            z_f = rz_f[:, H:]
            z_b = rz_b[:, H:]
            h_f = h_cat[:, :H]
            h_b = h_cat[:, H:]
            # pack_padded_sequence semantics: hidden only advances where t < len.
            hf_new = jnp.where(t0_f + s < lens, (1.0 - z_f) * n_f + z_f * h_f, h_f)
            hb_new = jnp.where(t0_b + j < lens, (1.0 - z_b) * n_b + z_b * h_b, h_b)
            h_cat = jnp.concatenate([hf_new, hb_new], axis=-1)
            if emit_out:
                outf_ref[s * B:(s + 1) * B, :] = hf_new.astype(jnp.bfloat16)
                outb_ref[j * B:(j + 1) * B, :] = hb_new.astype(jnp.bfloat16)

        hcat_scr[...] = h_cat

        @pl.when(c == nc - 1)
        def _finalize():
            hfin_ref[...] = h_cat                              # single lane-dense (B, 2H) store

    return kernel


def _run_layer(layer_inputs, lens, wf_parts, wb_parts, bgi_f, bgi_b,
               whh_blk, bn_f, bn_b, *, tt, nc, B, H, first, emit_out):
    rowsB = tt * B
    rows = nc * rowsB
    H3 = 3 * H

    def fwd_spec(feat):
        return pl.BlockSpec((rowsB, feat), lambda c: (c, 0))

    def bwd_spec(feat):
        return pl.BlockSpec((rowsB, feat), lambda c: (nc - 1 - c, 0))

    def const_spec(shape):
        return pl.BlockSpec(shape, lambda c: (0, 0))

    in_specs = [const_spec((B, 1))]
    args = [lens]
    if first:
        (x2d,) = layer_inputs
        din = x2d.shape[1]
        in_specs += [fwd_spec(din), bwd_spec(din)]
        args += [x2d, x2d]
    else:
        of, ob = layer_inputs
        in_specs += [fwd_spec(H), fwd_spec(H), bwd_spec(H), bwd_spec(H)]
        args += [of, ob, of, ob]
    weights = tuple(wf_parts) + tuple(wb_parts)
    in_specs += [const_spec(w.shape) for w in weights]
    args += list(weights)
    in_specs += [const_spec(bgi_f.shape), const_spec(bgi_b.shape),
                 const_spec(whh_blk.shape), const_spec(bn_f.shape), const_spec(bn_b.shape)]
    args += [bgi_f, bgi_b, whh_blk, bn_f, bn_b]

    out_shape = []
    out_specs = []
    if emit_out:
        out_shape += [jax.ShapeDtypeStruct((rows, H), jnp.bfloat16),
                      jax.ShapeDtypeStruct((rows, H), jnp.bfloat16)]
        out_specs += [fwd_spec(H), bwd_spec(H)]
    out_shape.append(jax.ShapeDtypeStruct((B, 2 * H), jnp.float32))
    out_specs.append(const_spec((B, 2 * H)))

    res = pl.pallas_call(
        _make_layer_kernel(tt, nc, B, H, first, emit_out),
        out_shape=out_shape,
        grid_spec=pltpu.PrefetchScalarGridSpec(
            num_scalar_prefetch=0,
            grid=(nc,),
            in_specs=in_specs,
            out_specs=out_specs,
            scratch_shapes=[pltpu.VMEM((rowsB, H3), jnp.float32),   # gi_fwd (chunk, f32)
                            pltpu.VMEM((rowsB, H3), jnp.float32),   # gi_bwd
                            pltpu.VMEM((B, 2 * H), jnp.float32)],   # [h_f | h_b] carry
        ),
        compiler_params=pltpu.CompilerParams(
            dimension_semantics=("arbitrary",),
            vmem_limit_bytes=_vmem_limit_bytes()),
    )(*args)
    if emit_out:
        out_f, out_b, hfin = res
        return out_f, out_b, hfin
    (hfin,) = res
    return None, None, hfin


# ---------------------------------------------------------------------------
# Fused head kernel:  mu = Linear(h_n); var = softplus(Linear(h_n)).
# ---------------------------------------------------------------------------
def _head_kernel(h_ref, w_ref, b_ref, mu_ref, var_ref):
    od = mu_ref.shape[-1]
    hv = jnp.dot(h_ref[...], w_ref[...], preferred_element_type=jnp.float32) + b_ref[...]
    mu_ref[...] = hv[:, :od]
    v = hv[:, od:]
    var_ref[...] = jnp.maximum(v, 0.0) + jnp.log1p(jnp.exp(-jnp.abs(v)))   # softplus


# ---------------------------------------------------------------------------
# Parameter plumbing
# ---------------------------------------------------------------------------
def _prep_direction(d, first_layer, H):
    w_ih, w_hh, b_ih, b_hh = d["w_ih"], d["w_hh"], d["b_ih"], d["b_hh"]
    # Fold b_ih plus the r/z parts of b_hh into the projection bias; only
    # b_hh_n must stay separate (it sits inside the r * (...) term).
    b_gi = (b_ih + jnp.concatenate([b_hh[:2 * H], jnp.zeros((H,), jnp.float32)])).reshape(1, 3 * H)
    b_hn = b_hh[2 * H:].reshape(1, H)
    w_hh_bf = w_hh.astype(jnp.bfloat16)
    if first_layer:
        w_parts = (w_ih.astype(jnp.bfloat16),)
    else:
        w_parts = (w_ih[:H].astype(jnp.bfloat16), w_ih[H:].astype(jnp.bfloat16))
    return w_parts, w_hh_bf, b_gi, b_hn


def _build_whh_block(whf, whb):
    """Block-diagonal (2H, 6H) recurrent weight with lane-tile-aligned column
    order [rz_f (2H) | rz_b (2H) | n_f (H) | n_b (H)]; zeros are exact so the
    fused matmul is bit-identical to two separate (H,3H) matmuls."""
    H = whf.shape[0]
    z2 = jnp.zeros((H, 2 * H), whf.dtype)
    z1 = jnp.zeros((H, H), whf.dtype)
    top = jnp.concatenate([whf[:, :2 * H], z2, whf[:, 2 * H:], z1], axis=1)
    bot = jnp.concatenate([z2, whb[:, :2 * H], z1, whb[:, 2 * H:]], axis=1)
    return jnp.concatenate([top, bot], axis=0)


# ---------------------------------------------------------------------------
# Wrapper
# ---------------------------------------------------------------------------
def bowman_encoder_forward(params, x, x_len, *, tt=32):
    """x: (B, T, in_dim) f32, x_len: (B,) int -> (mu, var).  posterior == 'gaussian'."""
    B, T, din = x.shape
    H = params["layers"][0]["fwd"]["w_hh"].shape[0]
    lens = x_len.reshape(B, 1).astype(jnp.int32)

    tt_eff, Tp = _choose_time_chunk(T, B, tt)
    nc = Tp // tt_eff

    # time-major, pad T to a multiple of the time chunk (padded steps are masked)
    x_tm = jnp.transpose(x, (1, 0, 2)).astype(jnp.float32)     # (T, B, D)
    if Tp != T:
        x_tm = jnp.pad(x_tm, ((0, Tp - T), (0, 0), (0, 0)))
    x2d = x_tm.reshape(Tp * B, din).astype(jnp.bfloat16)       # (rows, D) bf16 once

    n_layers = len(params["layers"])
    layer_inputs = (x2d,)
    finals = []
    for li, lp in enumerate(params["layers"]):
        is_last = li == n_layers - 1
        wpf, whhf, bgif, bhnf = _prep_direction(lp["fwd"], li == 0, H)
        wpb, whhb, bgib, bhnb = _prep_direction(lp["bwd"], li == 0, H)
        whh_blk = _build_whh_block(whhf, whhb)
        out_f, out_b, hfin = _run_layer(
            layer_inputs, lens, wpf, wpb, bgif, bgib, whh_blk, bhnf, bhnb,
            tt=tt_eff, nc=nc, B=B, H=H, first=(li == 0), emit_out=not is_last)
        finals.append(hfin)
        if not is_last:
            layer_inputs = (out_f, out_b)                      # bf16 (rows, H) each

    # h_n.transpose(0,1).view(B,-1): feature order [l0_fwd, l0_bwd, l1_fwd, l1_bwd, ...]
    h_n = jnp.concatenate(finals, axis=-1)                     # (B, 2*l_dim*H)

    out_dim = params["w_mu"].shape[-1]
    w_head = jnp.concatenate([params["w_mu"], params["w_var"]], axis=1)
    b_head = jnp.concatenate([params["b_mu"], params["b_var"]]).reshape(1, 2 * out_dim)
    mu, var = pl.pallas_call(
        _head_kernel,
        out_shape=(jax.ShapeDtypeStruct((B, out_dim), jnp.float32),
                   jax.ShapeDtypeStruct((B, out_dim), jnp.float32)),
    )(h_n, w_head, b_head)
    return mu, var


# ---------------------------------------------------------------------------
# Deterministic parameter init (shapes mirror nn.GRU(..., bidirectional=True) + heads)
# ---------------------------------------------------------------------------
def init_params(key, in_dim, h_dim, out_dim, l_dim):
    """Gate order [r | z | n] along the 3H axis, weights stored transposed (x @ W)
    and snapped to bf16-representable values (the kernels feed the MXU in bf16)."""
    bound = 1.0 / np.sqrt(h_dim)
    keys = iter(jax.random.split(key, 2 * l_dim * 4 + 4))

    def u(shape, b):
        return jax.random.uniform(next(keys), shape, jnp.float32, -b, b)

    def q_bf16(w):   # snap to bf16 grid, keep f32 master copy
        return w.astype(jnp.bfloat16).astype(jnp.float32)

    layers = []
    for layer in range(l_dim):
        d_in = in_dim if layer == 0 else 2 * h_dim
        layer_p = {}
        for name in ("fwd", "bwd"):
            layer_p[name] = {
                "w_ih": q_bf16(u((d_in, 3 * h_dim), bound)),
                "w_hh": q_bf16(u((h_dim, 3 * h_dim), bound)),
                "b_ih": u((3 * h_dim,), bound),
                "b_hh": u((3 * h_dim,), bound),
            }
        layers.append(layer_p)

    feat = 2 * l_dim * h_dim
    lb = 1.0 / np.sqrt(feat)
    return {
        "layers": layers,
        "w_mu": u((feat, out_dim), lb),
        "b_mu": u((out_dim,), lb),
        "w_var": u((feat, out_dim), lb),
        "b_var": u((out_dim,), lb),
    }


# ---------------------------------------------------------------------------
# Pure-JAX f32 reference (same math) for a correctness check
# ---------------------------------------------------------------------------
def _ref_gru_dir(inp_tbd, lens, w_ih, w_hh, b_ih, b_hh, reverse):
    T, B, _ = inp_tbd.shape
    H = w_hh.shape[0]
    h = jnp.zeros((B, H), jnp.float32)
    outs = [None] * T
    ts = range(T - 1, -1, -1) if reverse else range(T)
    for t in ts:
        gi = inp_tbd[t] @ w_ih + b_ih
        gh = h @ w_hh + b_hh
        r = jax.nn.sigmoid(gi[:, :H] + gh[:, :H])
        z = jax.nn.sigmoid(gi[:, H:2 * H] + gh[:, H:2 * H])
        n = jnp.tanh(gi[:, 2 * H:] + r * gh[:, 2 * H:])
        h_new = (1.0 - z) * n + z * h
        h = jnp.where(t < lens, h_new, h)
        outs[t] = h
    return jnp.stack(outs, 0), h


def ref_forward(params, x, x_len):
    B, T, _ = x.shape
    lens = x_len.reshape(B, 1).astype(jnp.int32)
    inp = jnp.transpose(x, (1, 0, 2)).astype(jnp.float32)
    finals = []
    for lp in params["layers"]:
        outs = []
        for name, reverse in (("fwd", False), ("bwd", True)):
            d = lp[name]
            o, hf = _ref_gru_dir(inp, lens, d["w_ih"], d["w_hh"], d["b_ih"], d["b_hh"], reverse)
            outs.append(o)
            finals.append(hf)
        inp = jnp.concatenate(outs, axis=-1)
    h_n = jnp.concatenate(finals, axis=-1)
    mu = h_n @ params["w_mu"] + params["b_mu"]
    var = jax.nn.softplus(h_n @ params["w_var"] + params["b_var"])
    return mu, var


# ---------------------------------------------------------------------------
if __name__ == "__main__":
    B, T = 2, 13                       # T deliberately not a multiple of the time chunk
    in_dim, h_dim, out_dim, l_dim = 32, 64, 16, 2

    key = jax.random.PRNGKey(0)
    k_x, k_p = jax.random.split(key)
    x = jax.random.normal(k_x, (B, T, in_dim), jnp.float32)
    x_len = jnp.array([13, 9], jnp.int32)          # sorted descending (pack_padded_sequence)
    params = init_params(k_p, in_dim, h_dim, out_dim, l_dim)

    mu_ref, var_ref = ref_forward(params, x, x_len)

    # default tt=32 -> single-chunk path; tt=4 -> multi-chunk (pipelined DMA) path
    for tt in (32, 4):
        mu, var = bowman_encoder_forward(params, x, x_len, tt=tt)
        jax.block_until_ready((mu, var))
        np.testing.assert_allclose(np.asarray(mu), np.asarray(mu_ref), rtol=3e-2, atol=3e-2)
        np.testing.assert_allclose(np.asarray(var), np.asarray(var_ref), rtol=3e-2, atol=3e-2)

    print("KERNEL_OK")
</pallas_src>

<mosaic_0001>
module attributes {stable_mosaic.version = 11 : i64} {
  func.func @kernel(%arg0: i32, %arg1: memref<2x1xi32, #tpu.memory_space<vmem>>, %arg2: memref<26x32xbf16, #tpu.memory_space<vmem>>, %arg3: memref<26x32xbf16, #tpu.memory_space<vmem>>, %arg4: memref<32x192xbf16, #tpu.memory_space<vmem>>, %arg5: memref<32x192xbf16, #tpu.memory_space<vmem>>, %arg6: memref<1x192xf32, #tpu.memory_space<vmem>>, %arg7: memref<1x192xf32, #tpu.memory_space<vmem>>, %arg8: memref<128x384xbf16, #tpu.memory_space<vmem>>, %arg9: memref<1x64xf32, #tpu.memory_space<vmem>>, %arg10: memref<1x64xf32, #tpu.memory_space<vmem>>, %arg11: memref<26x64xbf16, #tpu.memory_space<vmem>>, %arg12: memref<26x64xbf16, #tpu.memory_space<vmem>>, %arg13: memref<2x128xf32, #tpu.memory_space<vmem>>, %arg14: memref<26x192xf32, #tpu.memory_space<vmem>>, %arg15: memref<26x192xf32, #tpu.memory_space<vmem>>, %arg16: memref<2x128xf32, #tpu.memory_space<vmem>>) attributes {dimension_semantics = [#tpu.dimension_semantics<arbitrary>], iteration_bounds = array<i64: 1>, scalar_prefetch = 0 : i64, scratch_operands = 3 : i64, tpu.core_type = #tpu.core_type<tc>, window_params = [{pipeline_mode = #tpu.pipeline_mode<synchronous>, transform_indices = @transform_0, window_bounds = array<i64: 2, 1>}, {transform_indices = @transform_1, window_bounds = array<i64: 26, 32>}, {transform_indices = @transform_2, window_bounds = array<i64: 26, 32>}, {pipeline_mode = #tpu.pipeline_mode<synchronous>, transform_indices = @transform_3, window_bounds = array<i64: 32, 192>}, {pipeline_mode = #tpu.pipeline_mode<synchronous>, transform_indices = @transform_4, window_bounds = array<i64: 32, 192>}, {pipeline_mode = #tpu.pipeline_mode<synchronous>, transform_indices = @transform_5, window_bounds = array<i64: 1, 192>}, {pipeline_mode = #tpu.pipeline_mode<synchronous>, transform_indices = @transform_6, window_bounds = array<i64: 1, 192>}, {pipeline_mode = #tpu.pipeline_mode<synchronous>, transform_indices = @transform_7, window_bounds = array<i64: 128, 384>}, {pipeline_mode = #tpu.pipeline_mode<synchronous>, transform_indices = @transform_8, window_bounds = array<i64: 1, 64>}, {pipeline_mode = #tpu.pipeline_mode<synchronous>, transform_indices = @transform_9, window_bounds = array<i64: 1, 64>}, {transform_indices = @transform_10, window_bounds = array<i64: 26, 64>}, {transform_indices = @transform_11, window_bounds = array<i64: 26, 64>}, {pipeline_mode = #tpu.pipeline_mode<synchronous>, transform_indices = @transform_12, window_bounds = array<i64: 2, 128>}]} {
    %c0_i32 = arith.constant 0 : i32
    %0 = arith.cmpi eq, %arg0, %c0_i32 : i32
    %1 = arith.extui %0 : i1 to i32
    %c0_i32_0 = arith.constant 0 : i32
    %2 = arith.cmpi ne, %1, %c0_i32_0 : i32
    scf.if %2 {
      %cst_228 = arith.constant 0.000000e+00 : f32
      %890 = vector.broadcast %cst_228 : f32 to vector<2x128xf32>
      %c0_229 = arith.constant 0 : index
      %c0_230 = arith.constant 0 : index
      %891 = vector.load %arg16[%c0_229, %c0_230] : memref<2x128xf32, #tpu.memory_space<vmem>>, vector<2x128xf32>
      tpu.vector_store %arg16[%c0_229, %c0_230], %890 {strides = array<i32>} : memref<2x128xf32, #tpu.memory_space<vmem>>, vector<2x128xf32>,
    } else {
    }
    %c0 = arith.constant 0 : index
    %c0_1 = arith.constant 0 : index
    %3 = vector.load %arg2[%c0, %c0_1] : memref<26x32xbf16, #tpu.memory_space<vmem>>, vector<26x32xbf16>
    %c0_2 = arith.constant 0 : index
    %c0_3 = arith.constant 0 : index
    %4 = vector.load %arg4[%c0_2, %c0_3] : memref<32x192xbf16, #tpu.memory_space<vmem>>, vector<32x192xbf16>
    %cst = arith.constant dense<0.000000e+00> : vector<26x192xf32>
    %5 = tpu.matmul %3, %4, %cst {dimension_numbers = #tpu.dot_dimension_numbers<[1], [0], [0], [1], [0, 0, 1, 1], [], []>} : vector<26x32xbf16>, vector<32x192xbf16>, vector<26x192xf32> -> vector<26x192xf32>
    %c0_4 = arith.constant 0 : index
    %c0_5 = arith.constant 0 : index
    %6 = vector.load %arg6[%c0_4, %c0_5] : memref<1x192xf32, #tpu.memory_space<vmem>>, vector<1x192xf32>
    %7 = vector.broadcast %6 : vector<1x192xf32> to vector<26x192xf32>
    %8 = arith.addf %5, %7 : vector<26x192xf32>
    %c0_6 = arith.constant 0 : index
    %c0_7 = arith.constant 0 : index
    %9 = vector.load %arg14[%c0_6, %c0_7] : memref<26x192xf32, #tpu.memory_space<vmem>>, vector<26x192xf32>
    tpu.vector_store %arg14[%c0_6, %c0_7], %8 {strides = array<i32>} : memref<26x192xf32, #tpu.memory_space<vmem>>, vector<26x192xf32>,
    %c0_8 = arith.constant 0 : index
    %c0_9 = arith.constant 0 : index
    %10 = vector.load %arg3[%c0_8, %c0_9] : memref<26x32xbf16, #tpu.memory_space<vmem>>, vector<26x32xbf16>
    %c0_10 = arith.constant 0 : index
    %c0_11 = arith.constant 0 : index
    %11 = vector.load %arg5[%c0_10, %c0_11] : memref<32x192xbf16, #tpu.memory_space<vmem>>, vector<32x192xbf16>
    %cst_12 = arith.constant dense<0.000000e+00> : vector<26x192xf32>
    %12 = tpu.matmul %10, %11, %cst_12 {dimension_numbers = #tpu.dot_dimension_numbers<[1], [0], [0], [1], [0, 0, 1, 1], [], []>} : vector<26x32xbf16>, vector<32x192xbf16>, vector<26x192xf32> -> vector<26x192xf32>
    %c0_13 = arith.constant 0 : index
    %c0_14 = arith.constant 0 : index
    %13 = vector.load %arg7[%c0_13, %c0_14] : memref<1x192xf32, #tpu.memory_space<vmem>>, vector<1x192xf32>
    %14 = vector.broadcast %13 : vector<1x192xf32> to vector<26x192xf32>
    %15 = arith.addf %12, %14 : vector<26x192xf32>
    %c0_15 = arith.constant 0 : index
    %c0_16 = arith.constant 0 : index
    %16 = vector.load %arg15[%c0_15, %c0_16] : memref<26x192xf32, #tpu.memory_space<vmem>>, vector<26x192xf32>
    tpu.vector_store %arg15[%c0_15, %c0_16], %15 {strides = array<i32>} : memref<26x192xf32, #tpu.memory_space<vmem>>, vector<26x192xf32>,
    %c0_17 = arith.constant 0 : index
    %c0_18 = arith.constant 0 : index
    %17 = vector.load %arg1[%c0_17, %c0_18] : memref<2x1xi32, #tpu.memory_space<vmem>>, vector<2x1xi32>
    %c0_19 = arith.constant 0 : index
    %c0_20 = arith.constant 0 : index
    %18 = vector.load %arg9[%c0_19, %c0_20] : memref<1x64xf32, #tpu.memory_space<vmem>>, vector<1x64xf32>
    %19 = vector.shape_cast %18 : vector<1x64xf32> to vector<1x64xf32>
    %20 = vector.broadcast %19 : vector<1x64xf32> to vector<2x64xf32>
    %c0_21 = arith.constant 0 : index
    %c0_22 = arith.constant 0 : index
    %21 = vector.load %arg10[%c0_21, %c0_22] : memref<1x64xf32, #tpu.memory_space<vmem>>, vector<1x64xf32>
    %22 = vector.shape_cast %21 : vector<1x64xf32> to vector<1x64xf32>
    %23 = vector.broadcast %22 : vector<1x64xf32> to vector<2x64xf32>
    %c0_23 = arith.constant 0 : index
    %c0_24 = arith.constant 0 : index
    %24 = vector.load %arg16[%c0_23, %c0_24] : memref<2x128xf32, #tpu.memory_space<vmem>>, vector<2x128xf32>
    %c13_i32 = arith.constant 13 : i32
    %25 = arith.muli %arg0, %c13_i32 : i32
    %c0_i32_25 = arith.constant 0 : i32
    %26 = arith.subi %c0_i32_25, %arg0 : i32
    %c13_i32_26 = arith.constant 13 : i32
    %27 = arith.muli %26, %c13_i32_26 : i32
    %28 = arith.truncf %24 : vector<2x128xf32> to vector<2x128xbf16>
    %c0_27 = arith.constant 0 : index
    %c0_28 = arith.constant 0 : index
    %29 = vector.load %arg8[%c0_27, %c0_28] : memref<128x384xbf16, #tpu.memory_space<vmem>>, vector<128x384xbf16>
    %cst_29 = arith.constant dense<0.000000e+00> : vector<2x384xf32>
    %30 = tpu.matmul %28, %29, %cst_29 {dimension_numbers = #tpu.dot_dimension_numbers<[1], [0], [0], [1], [0, 0, 1, 1], [], []>} : vector<2x128xbf16>, vector<128x384xbf16>, vector<2x384xf32> -> vector<2x384xf32>
    %c0_30 = arith.constant 0 : index
    %c0_31 = arith.constant 0 : index
    %31 = vector.load %arg14[%c0_30, %c0_31] : memref<26x192xf32, #tpu.memory_space<vmem>>, vector<2x192xf32>
    %c24 = arith.constant 24 : index
    %c0_32 = arith.constant 0 : index
    %32 = vector.load %arg15[%c24, %c0_32] : memref<26x192xf32, #tpu.memory_space<vmem>>, vector<2x192xf32>
    %33 = vector.extract_strided_slice %31 {offsets = [0, 0], sizes = [2, 128], strides = [1, 1]} : vector<2x192xf32> to vector<2x128xf32>
    %34 = vector.extract_strided_slice %30 {offsets = [0, 0], sizes = [2, 128], strides = [1, 1]} : vector<2x384xf32> to vector<2x128xf32>
    %35 = arith.addf %33, %34 : vector<2x128xf32>
    %36 = arith.negf %35 : vector<2x128xf32>
    %37 = math.exp %36 : vector<2x128xf32>
    %cst_33 = arith.constant 1.000000e+00 : f32
    %38 = vector.broadcast %cst_33 : f32 to vector<2x128xf32>
    %39 = arith.addf %38, %37 : vector<2x128xf32>
    %40 = arith.divf %38, %39 : vector<2x128xf32>
    %41 = vector.extract_strided_slice %32 {offsets = [0, 0], sizes = [2, 128], strides = [1, 1]} : vector<2x192xf32> to vector<2x128xf32>
    %42 = vector.extract_strided_slice %30 {offsets = [0, 128], sizes = [2, 128], strides = [1, 1]} : vector<2x384xf32> to vector<2x128xf32>
    %43 = arith.addf %41, %42 : vector<2x128xf32>
    %44 = arith.negf %43 : vector<2x128xf32>
    %45 = math.exp %44 : vector<2x128xf32>
    %cst_34 = arith.constant 1.000000e+00 : f32
    %46 = vector.broadcast %cst_34 : f32 to vector<2x128xf32>
    %47 = arith.addf %46, %45 : vector<2x128xf32>
    %48 = arith.divf %46, %47 : vector<2x128xf32>
    %49 = vector.extract_strided_slice %31 {offsets = [0, 128], sizes = [2, 64], strides = [1, 1]} : vector<2x192xf32> to vector<2x64xf32>
    %50 = vector.extract_strided_slice %40 {offsets = [0, 0], sizes = [2, 64], strides = [1, 1]} : vector<2x128xf32> to vector<2x64xf32>
    %51 = vector.extract_strided_slice %30 {offsets = [0, 256], sizes = [2, 64], strides = [1, 1]} : vector<2x384xf32> to vector<2x64xf32>
    %52 = arith.addf %51, %20 : vector<2x64xf32>
    %53 = arith.mulf %50, %52 : vector<2x64xf32>
    %54 = arith.addf %49, %53 : vector<2x64xf32>
    %55 = math.tanh %54 : vector<2x64xf32>
    %56 = vector.extract_strided_slice %32 {offsets = [0, 128], sizes = [2, 64], strides = [1, 1]} : vector<2x192xf32> to vector<2x64xf32>
    %57 = vector.extract_strided_slice %48 {offsets = [0, 0], sizes = [2, 64], strides = [1, 1]} : vector<2x128xf32> to vector<2x64xf32>
    %58 = vector.extract_strided_slice %30 {offsets = [0, 320], sizes = [2, 64], strides = [1, 1]} : vector<2x384xf32> to vector<2x64xf32>
    %59 = arith.addf %58, %23 : vector<2x64xf32>
    %60 = arith.mulf %57, %59 : vector<2x64xf32>
    %61 = arith.addf %56, %60 : vector<2x64xf32>
    %62 = math.tanh %61 : vector<2x64xf32>
    %63 = vector.extract_strided_slice %40 {offsets = [0, 64], sizes = [2, 64], strides = [1, 1]} : vector<2x128xf32> to vector<2x64xf32>
    %64 = vector.extract_strided_slice %48 {offsets = [0, 64], sizes = [2, 64], strides = [1, 1]} : vector<2x128xf32> to vector<2x64xf32>
    %65 = vector.extract_strided_slice %24 {offsets = [0, 0], sizes = [2, 64], strides = [1, 1]} : vector<2x128xf32> to vector<2x64xf32>
    %66 = vector.extract_strided_slice %24 {offsets = [0, 64], sizes = [2, 64], strides = [1, 1]} : vector<2x128xf32> to vector<2x64xf32>
    %c0_i32_35 = arith.constant 0 : i32
    %67 = arith.addi %25, %c0_i32_35 : i32
    %68 = vector.broadcast %67 : i32 to vector<2x1xi32>
    %69 = arith.cmpi slt, %68, %17 : vector<2x1xi32>
    %cst_36 = arith.constant 1.000000e+00 : f32
    %70 = vector.broadcast %cst_36 : f32 to vector<2x64xf32>
    %71 = arith.subf %70, %63 : vector<2x64xf32>
    %72 = arith.mulf %71, %55 : vector<2x64xf32>
    %73 = arith.mulf %63, %65 : vector<2x64xf32>
    %74 = arith.addf %72, %73 : vector<2x64xf32>
    %75 = vector.shape_cast %69 : vector<2x1xi1> to vector<2x1xi1>
    %76 = vector.broadcast %75 : vector<2x1xi1> to vector<2x64xi1>
    %77 = arith.select %76, %74, %65 : vector<2x64xi1>, vector<2x64xf32>
    %c12_i32 = arith.constant 12 : i32
    %78 = arith.addi %27, %c12_i32 : i32
    %79 = vector.broadcast %78 : i32 to vector<2x1xi32>
    %80 = arith.cmpi slt, %79, %17 : vector<2x1xi32>
    %cst_37 = arith.constant 1.000000e+00 : f32
    %81 = vector.broadcast %cst_37 : f32 to vector<2x64xf32>
    %82 = arith.subf %81, %64 : vector<2x64xf32>
    %83 = arith.mulf %82, %62 : vector<2x64xf32>
    %84 = arith.mulf %64, %66 : vector<2x64xf32>
    %85 = arith.addf %83, %84 : vector<2x64xf32>
    %86 = vector.shape_cast %80 : vector<2x1xi1> to vector<2x1xi1>
    %87 = vector.broadcast %86 : vector<2x1xi1> to vector<2x64xi1>
    %88 = arith.select %87, %85, %66 : vector<2x64xi1>, vector<2x64xf32>
    %89 = tpu.concatenate %77, %88 in 1 : vector<2x64xf32>, vector<2x64xf32> -> vector<2x128xf32>
    %90 = arith.truncf %77 : vector<2x64xf32> to vector<2x64xbf16>
    %c0_38 = arith.constant 0 : index
    %c0_39 = arith.constant 0 : index
    %91 = vector.load %arg11[%c0_38, %c0_39] : memref<26x64xbf16, #tpu.memory_space<vmem>>, vector<2x64xbf16>
    tpu.vector_store %arg11[%c0_38, %c0_39], %90 {strides = array<i32>} : memref<26x64xbf16, #tpu.memory_space<vmem>>, vector<2x64xbf16>,
    %92 = arith.truncf %88 : vector<2x64xf32> to vector<2x64xbf16>
    %c24_40 = arith.constant 24 : index
    %c0_41 = arith.constant 0 : index
    %93 = vector.load %arg12[%c24_40, %c0_41] : memref<26x64xbf16, #tpu.memory_space<vmem>>, vector<2x64xbf16>
    tpu.vector_store %arg12[%c24_40, %c0_41], %92 {strides = array<i32>} : memref<26x64xbf16, #tpu.memory_space<vmem>>, vector<2x64xbf16>,
    %94 = arith.truncf %89 : vector<2x128xf32> to vector<2x128xbf16>
    %c0_42 = arith.constant 0 : index
    %c0_43 = arith.constant 0 : index
    %95 = vector.load %arg8[%c0_42, %c0_43] : memref<128x384xbf16, #tpu.memory_space<vmem>>, vector<128x384xbf16>
    %cst_44 = arith.constant dense<0.000000e+00> : vector<2x384xf32>
    %96 = tpu.matmul %94, %95, %cst_44 {dimension_numbers = #tpu.dot_dimension_numbers<[1], [0], [0], [1], [0, 0, 1, 1], [], []>} : vector<2x128xbf16>, vector<128x384xbf16>, vector<2x384xf32> -> vector<2x384xf32>
    %c2 = arith.constant 2 : index
    %c0_45 = arith.constant 0 : index
    %97 = vector.load %arg14[%c2, %c0_45] : memref<26x192xf32, #tpu.memory_space<vmem>>, vector<2x192xf32>
    %c22 = arith.constant 22 : index
    %c0_46 = arith.constant 0 : index
    %98 = vector.load %arg15[%c22, %c0_46] : memref<26x192xf32, #tpu.memory_space<vmem>>, vector<2x192xf32>
    %99 = vector.extract_strided_slice %97 {offsets = [0, 0], sizes = [2, 128], strides = [1, 1]} : vector<2x192xf32> to vector<2x128xf32>
    %100 = vector.extract_strided_slice %96 {offsets = [0, 0], sizes = [2, 128], strides = [1, 1]} : vector<2x384xf32> to vector<2x128xf32>
    %101 = arith.addf %99, %100 : vector<2x128xf32>
    %102 = arith.negf %101 : vector<2x128xf32>
    %103 = math.exp %102 : vector<2x128xf32>
    %cst_47 = arith.constant 1.000000e+00 : f32
    %104 = vector.broadcast %cst_47 : f32 to vector<2x128xf32>
    %105 = arith.addf %104, %103 : vector<2x128xf32>
    %106 = arith.divf %104, %105 : vector<2x128xf32>
    %107 = vector.extract_strided_slice %98 {offsets = [0, 0], sizes = [2, 128], strides = [1, 1]} : vector<2x192xf32> to vector<2x128xf32>
    %108 = vector.extract_strided_slice %96 {offsets = [0, 128], sizes = [2, 128], strides = [1, 1]} : vector<2x384xf32> to vector<2x128xf32>
    %109 = arith.addf %107, %108 : vector<2x128xf32>
    %110 = arith.negf %109 : vector<2x128xf32>
    %111 = math.exp %110 : vector<2x128xf32>
    %cst_48 = arith.constant 1.000000e+00 : f32
    %112 = vector.broadcast %cst_48 : f32 to vector<2x128xf32>
    %113 = arith.addf %112, %111 : vector<2x128xf32>
    %114 = arith.divf %112, %113 : vector<2x128xf32>
    %115 = vector.extract_strided_slice %97 {offsets = [0, 128], sizes = [2, 64], strides = [1, 1]} : vector<2x192xf32> to vector<2x64xf32>
    %116 = vector.extract_strided_slice %106 {offsets = [0, 0], sizes = [2, 64], strides = [1, 1]} : vector<2x128xf32> to vector<2x64xf32>
    %117 = vector.extract_strided_slice %96 {offsets = [0, 256], sizes = [2, 64], strides = [1, 1]} : vector<2x384xf32> to vector<2x64xf32>
    %118 = arith.addf %117, %20 : vector<2x64xf32>
    %119 = arith.mulf %116, %118 : vector<2x64xf32>
    %120 = arith.addf %115, %119 : vector<2x64xf32>
    %121 = math.tanh %120 : vector<2x64xf32>
    %122 = vector.extract_strided_slice %98 {offsets = [0, 128], sizes = [2, 64], strides = [1, 1]} : vector<2x192xf32> to vector<2x64xf32>
    %123 = vector.extract_strided_slice %114 {offsets = [0, 0], sizes = [2, 64], strides = [1, 1]} : vector<2x128xf32> to vector<2x64xf32>
    %124 = vector.extract_strided_slice %96 {offsets = [0, 320], sizes = [2, 64], strides = [1, 1]} : vector<2x384xf32> to vector<2x64xf32>
    %125 = arith.addf %124, %23 : vector<2x64xf32>
    %126 = arith.mulf %123, %125 : vector<2x64xf32>
    %127 = arith.addf %122, %126 : vector<2x64xf32>
    %128 = math.tanh %127 : vector<2x64xf32>
    %129 = vector.extract_strided_slice %106 {offsets = [0, 64], sizes = [2, 64], strides = [1, 1]} : vector<2x128xf32> to vector<2x64xf32>
    %130 = vector.extract_strided_slice %114 {offsets = [0, 64], sizes = [2, 64], strides = [1, 1]} : vector<2x128xf32> to vector<2x64xf32>
    %131 = vector.extract_strided_slice %89 {offsets = [0, 0], sizes = [2, 64], strides = [1, 1]} : vector<2x128xf32> to vector<2x64xf32>
    %132 = vector.extract_strided_slice %89 {offsets = [0, 64], sizes = [2, 64], strides = [1, 1]} : vector<2x128xf32> to vector<2x64xf32>
    %c1_i32 = arith.constant 1 : i32
    %133 = arith.addi %25, %c1_i32 : i32
    %134 = vector.broadcast %133 : i32 to vector<2x1xi32>
    %135 = arith.cmpi slt, %134, %17 : vector<2x1xi32>
    %cst_49 = arith.constant 1.000000e+00 : f32
    %136 = vector.broadcast %cst_49 : f32 to vector<2x64xf32>
    %137 = arith.subf %136, %129 : vector<2x64xf32>
    %138 = arith.mulf %137, %121 : vector<2x64xf32>
    %139 = arith.mulf %129, %131 : vector<2x64xf32>
    %140 = arith.addf %138, %139 : vector<2x64xf32>
    %141 = vector.shape_cast %135 : vector<2x1xi1> to vector<2x1xi1>
    %142 = vector.broadcast %141 : vector<2x1xi1> to vector<2x64xi1>
    %143 = arith.select %142, %140, %131 : vector<2x64xi1>, vector<2x64xf32>
    %c11_i32 = arith.constant 11 : i32
    %144 = arith.addi %27, %c11_i32 : i32
    %145 = vector.broadcast %144 : i32 to vector<2x1xi32>
    %146 = arith.cmpi slt, %145, %17 : vector<2x1xi32>
    %cst_50 = arith.constant 1.000000e+00 : f32
    %147 = vector.broadcast %cst_50 : f32 to vector<2x64xf32>
    %148 = arith.subf %147, %130 : vector<2x64xf32>
    %149 = arith.mulf %148, %128 : vector<2x64xf32>
    %150 = arith.mulf %130, %132 : vector<2x64xf32>
    %151 = arith.addf %149, %150 : vector<2x64xf32>
    %152 = vector.shape_cast %146 : vector<2x1xi1> to vector<2x1xi1>
    %153 = vector.broadcast %152 : vector<2x1xi1> to vector<2x64xi1>
    %154 = arith.select %153, %151, %132 : vector<2x64xi1>, vector<2x64xf32>
    %155 = tpu.concatenate %143, %154 in 1 : vector<2x64xf32>, vector<2x64xf32> -> vector<2x128xf32>
    %156 = arith.truncf %143 : vector<2x64xf32> to vector<2x64xbf16>
    %c2_51 = arith.constant 2 : index
    %c0_52 = arith.constant 0 : index
    %157 = vector.load %arg11[%c2_51, %c0_52] : memref<26x64xbf16, #tpu.memory_space<vmem>>, vector<2x64xbf16>
    tpu.vector_store %arg11[%c2_51, %c0_52], %156 {strides = array<i32>} : memref<26x64xbf16, #tpu.memory_space<vmem>>, vector<2x64xbf16>,
    %158 = arith.truncf %154 : vector<2x64xf32> to vector<2x64xbf16>
    %c22_53 = arith.constant 22 : index
    %c0_54 = arith.constant 0 : index
    %159 = vector.load %arg12[%c22_53, %c0_54] : memref<26x64xbf16, #tpu.memory_space<vmem>>, vector<2x64xbf16>
    tpu.vector_store %arg12[%c22_53, %c0_54], %158 {strides = array<i32>} : memref<26x64xbf16, #tpu.memory_space<vmem>>, vector<2x64xbf16>,
    %160 = arith.truncf %155 : vector<2x128xf32> to vector<2x128xbf16>
    %c0_55 = arith.constant 0 : index
    %c0_56 = arith.constant 0 : index
    %161 = vector.load %arg8[%c0_55, %c0_56] : memref<128x384xbf16, #tpu.memory_space<vmem>>, vector<128x384xbf16>
    %cst_57 = arith.constant dense<0.000000e+00> : vector<2x384xf32>
    %162 = tpu.matmul %160, %161, %cst_57 {dimension_numbers = #tpu.dot_dimension_numbers<[1], [0], [0], [1], [0, 0, 1, 1], [], []>} : vector<2x128xbf16>, vector<128x384xbf16>, vector<2x384xf32> -> vector<2x384xf32>
    %c4 = arith.constant 4 : index
    %c0_58 = arith.constant 0 : index
    %163 = vector.load %arg14[%c4, %c0_58] : memref<26x192xf32, #tpu.memory_space<vmem>>, vector<2x192xf32>
    %c20 = arith.constant 20 : index
    %c0_59 = arith.constant 0 : index
    %164 = vector.load %arg15[%c20, %c0_59] : memref<26x192xf32, #tpu.memory_space<vmem>>, vector<2x192xf32>
    %165 = vector.extract_strided_slice %163 {offsets = [0, 0], sizes = [2, 128], strides = [1, 1]} : vector<2x192xf32> to vector<2x128xf32>
    %166 = vector.extract_strided_slice %162 {offsets = [0, 0], sizes = [2, 128], strides = [1, 1]} : vector<2x384xf32> to vector<2x128xf32>
    %167 = arith.addf %165, %166 : vector<2x128xf32>
    %168 = arith.negf %167 : vector<2x128xf32>
    %169 = math.exp %168 : vector<2x128xf32>
    %cst_60 = arith.constant 1.000000e+00 : f32
    %170 = vector.broadcast %cst_60 : f32 to vector<2x128xf32>
    %171 = arith.addf %170, %169 : vector<2x128xf32>
    %172 = arith.divf %170, %171 : vector<2x128xf32>
    %173 = vector.extract_strided_slice %164 {offsets = [0, 0], sizes = [2, 128], strides = [1, 1]} : vector<2x192xf32> to vector<2x128xf32>
    %174 = vector.extract_strided_slice %162 {offsets = [0, 128], sizes = [2, 128], strides = [1, 1]} : vector<2x384xf32> to vector<2x128xf32>
    %175 = arith.addf %173, %174 : vector<2x128xf32>
    %176 = arith.negf %175 : vector<2x128xf32>
    %177 = math.exp %176 : vector<2x128xf32>
    %cst_61 = arith.constant 1.000000e+00 : f32
    %178 = vector.broadcast %cst_61 : f32 to vector<2x128xf32>
    %179 = arith.addf %178, %177 : vector<2x128xf32>
    %180 = arith.divf %178, %179 : vector<2x128xf32>
    %181 = vector.extract_strided_slice %163 {offsets = [0, 128], sizes = [2, 64], strides = [1, 1]} : vector<2x192xf32> to vector<2x64xf32>
    %182 = vector.extract_strided_slice %172 {offsets = [0, 0], sizes = [2, 64], strides = [1, 1]} : vector<2x128xf32> to vector<2x64xf32>
    %183 = vector.extract_strided_slice %162 {offsets = [0, 256], sizes = [2, 64], strides = [1, 1]} : vector<2x384xf32> to vector<2x64xf32>
    %184 = arith.addf %183, %20 : vector<2x64xf32>
    %185 = arith.mulf %182, %184 : vector<2x64xf32>
    %186 = arith.addf %181, %185 : vector<2x64xf32>
    %187 = math.tanh %186 : vector<2x64xf32>
    %188 = vector.extract_strided_slice %164 {offsets = [0, 128], sizes = [2, 64], strides = [1, 1]} : vector<2x192xf32> to vector<2x64xf32>
    %189 = vector.extract_strided_slice %180 {offsets = [0, 0], sizes = [2, 64], strides = [1, 1]} : vector<2x128xf32> to vector<2x64xf32>
    %190 = vector.extract_strided_slice %162 {offsets = [0, 320], sizes = [2, 64], strides = [1, 1]} : vector<2x384xf32> to vector<2x64xf32>
    %191 = arith.addf %190, %23 : vector<2x64xf32>
    %192 = arith.mulf %189, %191 : vector<2x64xf32>
    %193 = arith.addf %188, %192 : vector<2x64xf32>
    %194 = math.tanh %193 : vector<2x64xf32>
    %195 = vector.extract_strided_slice %172 {offsets = [0, 64], sizes = [2, 64], strides = [1, 1]} : vector<2x128xf32> to vector<2x64xf32>
    %196 = vector.extract_strided_slice %180 {offsets = [0, 64], sizes = [2, 64], strides = [1, 1]} : vector<2x128xf32> to vector<2x64xf32>
    %197 = vector.extract_strided_slice %155 {offsets = [0, 0], sizes = [2, 64], strides = [1, 1]} : vector<2x128xf32> to vector<2x64xf32>
    %198 = vector.extract_strided_slice %155 {offsets = [0, 64], sizes = [2, 64], strides = [1, 1]} : vector<2x128xf32> to vector<2x64xf32>
    %c2_i32 = arith.constant 2 : i32
    %199 = arith.addi %25, %c2_i32 : i32
    %200 = vector.broadcast %199 : i32 to vector<2x1xi32>
    %201 = arith.cmpi slt, %200, %17 : vector<2x1xi32>
    %cst_62 = arith.constant 1.000000e+00 : f32
    %202 = vector.broadcast %cst_62 : f32 to vector<2x64xf32>
    %203 = arith.subf %202, %195 : vector<2x64xf32>
    %204 = arith.mulf %203, %187 : vector<2x64xf32>
    %205 = arith.mulf %195, %197 : vector<2x64xf32>
    %206 = arith.addf %204, %205 : vector<2x64xf32>
    %207 = vector.shape_cast %201 : vector<2x1xi1> to vector<2x1xi1>
    %208 = vector.broadcast %207 : vector<2x1xi1> to vector<2x64xi1>
    %209 = arith.select %208, %206, %197 : vector<2x64xi1>, vector<2x64xf32>
    %c10_i32 = arith.constant 10 : i32
    %210 = arith.addi %27, %c10_i32 : i32
    %211 = vector.broadcast %210 : i32 to vector<2x1xi32>
    %212 = arith.cmpi slt, %211, %17 : vector<2x1xi32>
    %cst_63 = arith.constant 1.000000e+00 : f32
    %213 = vector.broadcast %cst_63 : f32 to vector<2x64xf32>
    %214 = arith.subf %213, %196 : vector<2x64xf32>
    %215 = arith.mulf %214, %194 : vector<2x64xf32>
    %216 = arith.mulf %196, %198 : vector<2x64xf32>
    %217 = arith.addf %215, %216 : vector<2x64xf32>
    %218 = vector.shape_cast %212 : vector<2x1xi1> to vector<2x1xi1>
    %219 = vector.broadcast %218 : vector<2x1xi1> to vector<2x64xi1>
    %220 = arith.select %219, %217, %198 : vector<2x64xi1>, vector<2x64xf32>
    %221 = tpu.concatenate %209, %220 in 1 : vector<2x64xf32>, vector<2x64xf32> -> vector<2x128xf32>
    %222 = arith.truncf %209 : vector<2x64xf32> to vector<2x64xbf16>
    %c4_64 = arith.constant 4 : index
    %c0_65 = arith.constant 0 : index
    %223 = vector.load %arg11[%c4_64, %c0_65] : memref<26x64xbf16, #tpu.memory_space<vmem>>, vector<2x64xbf16>
    tpu.vector_store %arg11[%c4_64, %c0_65], %222 {strides = array<i32>} : memref<26x64xbf16, #tpu.memory_space<vmem>>, vector<2x64xbf16>,
    %224 = arith.truncf %220 : vector<2x64xf32> to vector<2x64xbf16>
    %c20_66 = arith.constant 20 : index
    %c0_67 = arith.constant 0 : index
    %225 = vector.load %arg12[%c20_66, %c0_67] : memref<26x64xbf16, #tpu.memory_space<vmem>>, vector<2x64xbf16>
    tpu.vector_store %arg12[%c20_66, %c0_67], %224 {strides = array<i32>} : memref<26x64xbf16, #tpu.memory_space<vmem>>, vector<2x64xbf16>,
    %226 = arith.truncf %221 : vector<2x128xf32> to vector<2x128xbf16>
    %c0_68 = arith.constant 0 : index
    %c0_69 = arith.constant 0 : index
    %227 = vector.load %arg8[%c0_68, %c0_69] : memref<128x384xbf16, #tpu.memory_space<vmem>>, vector<128x384xbf16>
    %cst_70 = arith.constant dense<0.000000e+00> : vector<2x384xf32>
    %228 = tpu.matmul %226, %227, %cst_70 {dimension_numbers = #tpu.dot_dimension_numbers<[1], [0], [0], [1], [0, 0, 1, 1], [], []>} : vector<2x128xbf16>, vector<128x384xbf16>, vector<2x384xf32> -> vector<2x384xf32>
    %c6 = arith.constant 6 : index
    %c0_71 = arith.constant 0 : index
    %229 = vector.load %arg14[%c6, %c0_71] : memref<26x192xf32, #tpu.memory_space<vmem>>, vector<2x192xf32>
    %c18 = arith.constant 18 : index
    %c0_72 = arith.constant 0 : index
    %230 = vector.load %arg15[%c18, %c0_72] : memref<26x192xf32, #tpu.memory_space<vmem>>, vector<2x192xf32>
    %231 = vector.extract_strided_slice %229 {offsets = [0, 0], sizes = [2, 128], strides = [1, 1]} : vector<2x192xf32> to vector<2x128xf32>
    %232 = vector.extract_strided_slice %228 {offsets = [0, 0], sizes = [2, 128], strides = [1, 1]} : vector<2x384xf32> to vector<2x128xf32>
    %233 = arith.addf %231, %232 : vector<2x128xf32>
    %234 = arith.negf %233 : vector<2x128xf32>
    %235 = math.exp %234 : vector<2x128xf32>
    %cst_73 = arith.constant 1.000000e+00 : f32
    %236 = vector.broadcast %cst_73 : f32 to vector<2x128xf32>
    %237 = arith.addf %236, %235 : vector<2x128xf32>
    %238 = arith.divf %236, %237 : vector<2x128xf32>
    %239 = vector.extract_strided_slice %230 {offsets = [0, 0], sizes = [2, 128], strides = [1, 1]} : vector<2x192xf32> to vector<2x128xf32>
    %240 = vector.extract_strided_slice %228 {offsets = [0, 128], sizes = [2, 128], strides = [1, 1]} : vector<2x384xf32> to vector<2x128xf32>
    %241 = arith.addf %239, %240 : vector<2x128xf32>
    %242 = arith.negf %241 : vector<2x128xf32>
    %243 = math.exp %242 : vector<2x128xf32>
    %cst_74 = arith.constant 1.000000e+00 : f32
    %244 = vector.broadcast %cst_74 : f32 to vector<2x128xf32>
    %245 = arith.addf %244, %243 : vector<2x128xf32>
    %246 = arith.divf %244, %245 : vector<2x128xf32>
    %247 = vector.extract_strided_slice %229 {offsets = [0, 128], sizes = [2, 64], strides = [1, 1]} : vector<2x192xf32> to vector<2x64xf32>
    %248 = vector.extract_strided_slice %238 {offsets = [0, 0], sizes = [2, 64], strides = [1, 1]} : vector<2x128xf32> to vector<2x64xf32>
    %249 = vector.extract_strided_slice %228 {offsets = [0, 256], sizes = [2, 64], strides = [1, 1]} : vector<2x384xf32> to vector<2x64xf32>
    %250 = arith.addf %249, %20 : vector<2x64xf32>
    %251 = arith.mulf %248, %250 : vector<2x64xf32>
    %252 = arith.addf %247, %251 : vector<2x64xf32>
    %253 = math.tanh %252 : vector<2x64xf32>
    %254 = vector.extract_strided_slice %230 {offsets = [0, 128], sizes = [2, 64], strides = [1, 1]} : vector<2x192xf32> to vector<2x64xf32>
    %255 = vector.extract_strided_slice %246 {offsets = [0, 0], sizes = [2, 64], strides = [1, 1]} : vector<2x128xf32> to vector<2x64xf32>
    %256 = vector.extract_strided_slice %228 {offsets = [0, 320], sizes = [2, 64], strides = [1, 1]} : vector<2x384xf32> to vector<2x64xf32>
    %257 = arith.addf %256, %23 : vector<2x64xf32>
    %258 = arith.mulf %255, %257 : vector<2x64xf32>
    %259 = arith.addf %254, %258 : vector<2x64xf32>
    %260 = math.tanh %259 : vector<2x64xf32>
    %261 = vector.extract_strided_slice %238 {offsets = [0, 64], sizes = [2, 64], strides = [1, 1]} : vector<2x128xf32> to vector<2x64xf32>
    %262 = vector.extract_strided_slice %246 {offsets = [0, 64], sizes = [2, 64], strides = [1, 1]} : vector<2x128xf32> to vector<2x64xf32>
    %263 = vector.extract_strided_slice %221 {offsets = [0, 0], sizes = [2, 64], strides = [1, 1]} : vector<2x128xf32> to vector<2x64xf32>
    %264 = vector.extract_strided_slice %221 {offsets = [0, 64], sizes = [2, 64], strides = [1, 1]} : vector<2x128xf32> to vector<2x64xf32>
    %c3_i32 = arith.constant 3 : i32
    %265 = arith.addi %25, %c3_i32 : i32
    %266 = vector.broadcast %265 : i32 to vector<2x1xi32>
    %267 = arith.cmpi slt, %266, %17 : vector<2x1xi32>
    %cst_75 = arith.constant 1.000000e+00 : f32
    %268 = vector.broadcast %cst_75 : f32 to vector<2x64xf32>
    %269 = arith.subf %268, %261 : vector<2x64xf32>
    %270 = arith.mulf %269, %253 : vector<2x64xf32>
    %271 = arith.mulf %261, %263 : vector<2x64xf32>
    %272 = arith.addf %270, %271 : vector<2x64xf32>
    %273 = vector.shape_cast %267 : vector<2x1xi1> to vector<2x1xi1>
    %274 = vector.broadcast %273 : vector<2x1xi1> to vector<2x64xi1>
    %275 = arith.select %274, %272, %263 : vector<2x64xi1>, vector<2x64xf32>
    %c9_i32 = arith.constant 9 : i32
    %276 = arith.addi %27, %c9_i32 : i32
    %277 = vector.broadcast %276 : i32 to vector<2x1xi32>
    %278 = arith.cmpi slt, %277, %17 : vector<2x1xi32>
    %cst_76 = arith.constant 1.000000e+00 : f32
    %279 = vector.broadcast %cst_76 : f32 to vector<2x64xf32>
    %280 = arith.subf %279, %262 : vector<2x64xf32>
    %281 = arith.mulf %280, %260 : vector<2x64xf32>
    %282 = arith.mulf %262, %264 : vector<2x64xf32>
    %283 = arith.addf %281, %282 : vector<2x64xf32>
    %284 = vector.shape_cast %278 : vector<2x1xi1> to vector<2x1xi1>
    %285 = vector.broadcast %284 : vector<2x1xi1> to vector<2x64xi1>
    %286 = arith.select %285, %283, %264 : vector<2x64xi1>, vector<2x64xf32>
    %287 = tpu.concatenate %275, %286 in 1 : vector<2x64xf32>, vector<2x64xf32> -> vector<2x128xf32>
    %288 = arith.truncf %275 : vector<2x64xf32> to vector<2x64xbf16>
    %c6_77 = arith.constant 6 : index
    %c0_78 = arith.constant 0 : index
    %289 = vector.load %arg11[%c6_77, %c0_78] : memref<26x64xbf16, #tpu.memory_space<vmem>>, vector<2x64xbf16>
    tpu.vector_store %arg11[%c6_77, %c0_78], %288 {strides = array<i32>} : memref<26x64xbf16, #tpu.memory_space<vmem>>, vector<2x64xbf16>,
    %290 = arith.truncf %286 : vector<2x64xf32> to vector<2x64xbf16>
    %c18_79 = arith.constant 18 : index
    %c0_80 = arith.constant 0 : index
    %291 = vector.load %arg12[%c18_79, %c0_80] : memref<26x64xbf16, #tpu.memory_space<vmem>>, vector<2x64xbf16>
    tpu.vector_store %arg12[%c18_79, %c0_80], %290 {strides = array<i32>} : memref<26x64xbf16, #tpu.memory_space<vmem>>, vector<2x64xbf16>,
    %292 = arith.truncf %287 : vector<2x128xf32> to vector<2x128xbf16>
    %c0_81 = arith.constant 0 : index
    %c0_82 = arith.constant 0 : index
    %293 = vector.load %arg8[%c0_81, %c0_82] : memref<128x384xbf16, #tpu.memory_space<vmem>>, vector<128x384xbf16>
    %cst_83 = arith.constant dense<0.000000e+00> : vector<2x384xf32>
    %294 = tpu.matmul %292, %293, %cst_83 {dimension_numbers = #tpu.dot_dimension_numbers<[1], [0], [0], [1], [0, 0, 1, 1], [], []>} : vector<2x128xbf16>, vector<128x384xbf16>, vector<2x384xf32> -> vector<2x384xf32>
    %c8 = arith.constant 8 : index
    %c0_84 = arith.constant 0 : index
    %295 = vector.load %arg14[%c8, %c0_84] : memref<26x192xf32, #tpu.memory_space<vmem>>, vector<2x192xf32>
    %c16 = arith.constant 16 : index
    %c0_85 = arith.constant 0 : index
    %296 = vector.load %arg15[%c16, %c0_85] : memref<26x192xf32, #tpu.memory_space<vmem>>, vector<2x192xf32>
    %297 = vector.extract_strided_slice %295 {offsets = [0, 0], sizes = [2, 128], strides = [1, 1]} : vector<2x192xf32> to vector<2x128xf32>
    %298 = vector.extract_strided_slice %294 {offsets = [0, 0], sizes = [2, 128], strides = [1, 1]} : vector<2x384xf32> to vector<2x128xf32>
    %299 = arith.addf %297, %298 : vector<2x128xf32>
    %300 = arith.negf %299 : vector<2x128xf32>
    %301 = math.exp %300 : vector<2x128xf32>
    %cst_86 = arith.constant 1.000000e+00 : f32
    %302 = vector.broadcast %cst_86 : f32 to vector<2x128xf32>
    %303 = arith.addf %302, %301 : vector<2x128xf32>
    %304 = arith.divf %302, %303 : vector<2x128xf32>
    %305 = vector.extract_strided_slice %296 {offsets = [0, 0], sizes = [2, 128], strides = [1, 1]} : vector<2x192xf32> to vector<2x128xf32>
    %306 = vector.extract_strided_slice %294 {offsets = [0, 128], sizes = [2, 128], strides = [1, 1]} : vector<2x384xf32> to vector<2x128xf32>
    %307 = arith.addf %305, %306 : vector<2x128xf32>
    %308 = arith.negf %307 : vector<2x128xf32>
    %309 = math.exp %308 : vector<2x128xf32>
    %cst_87 = arith.constant 1.000000e+00 : f32
    %310 = vector.broadcast %cst_87 : f32 to vector<2x128xf32>
    %311 = arith.addf %310, %309 : vector<2x128xf32>
    %312 = arith.divf %310, %311 : vector<2x128xf32>
    %313 = vector.extract_strided_slice %295 {offsets = [0, 128], sizes = [2, 64], strides = [1, 1]} : vector<2x192xf32> to vector<2x64xf32>
    %314 = vector.extract_strided_slice %304 {offsets = [0, 0], sizes = [2, 64], strides = [1, 1]} : vector<2x128xf32> to vector<2x64xf32>
    %315 = vector.extract_strided_slice %294 {offsets = [0, 256], sizes = [2, 64], strides = [1, 1]} : vector<2x384xf32> to vector<2x64xf32>
    %316 = arith.addf %315, %20 : vector<2x64xf32>
    %317 = arith.mulf %314, %316 : vector<2x64xf32>
    %318 = arith.addf %313, %317 : vector<2x64xf32>
    %319 = math.tanh %318 : vector<2x64xf32>
    %320 = vector.extract_strided_slice %296 {offsets = [0, 128], sizes = [2, 64], strides = [1, 1]} : vector<2x192xf32> to vector<2x64xf32>
    %321 = vector.extract_strided_slice %312 {offsets = [0, 0], sizes = [2, 64], strides = [1, 1]} : vector<2x128xf32> to vector<2x64xf32>
    %322 = vector.extract_strided_slice %294 {offsets = [0, 320], sizes = [2, 64], strides = [1, 1]} : vector<2x384xf32> to vector<2x64xf32>
    %323 = arith.addf %322, %23 : vector<2x64xf32>
    %324 = arith.mulf %321, %323 : vector<2x64xf32>
    %325 = arith.addf %320, %324 : vector<2x64xf32>
    %326 = math.tanh %325 : vector<2x64xf32>
    %327 = vector.extract_strided_slice %304 {offsets = [0, 64], sizes = [2, 64], strides = [1, 1]} : vector<2x128xf32> to vector<2x64xf32>
    %328 = vector.extract_strided_slice %312 {offsets = [0, 64], sizes = [2, 64], strides = [1, 1]} : vector<2x128xf32> to vector<2x64xf32>
    %329 = vector.extract_strided_slice %287 {offsets = [0, 0], sizes = [2, 64], strides = [1, 1]} : vector<2x128xf32> to vector<2x64xf32>
    %330 = vector.extract_strided_slice %287 {offsets = [0, 64], sizes = [2, 64], strides = [1, 1]} : vector<2x128xf32> to vector<2x64xf32>
    %c4_i32 = arith.constant 4 : i32
    %331 = arith.addi %25, %c4_i32 : i32
    %332 = vector.broadcast %331 : i32 to vector<2x1xi32>
    %333 = arith.cmpi slt, %332, %17 : vector<2x1xi32>
    %cst_88 = arith.constant 1.000000e+00 : f32
    %334 = vector.broadcast %cst_88 : f32 to vector<2x64xf32>
    %335 = arith.subf %334, %327 : vector<2x64xf32>
    %336 = arith.mulf %335, %319 : vector<2x64xf32>
    %337 = arith.mulf %327, %329 : vector<2x64xf32>
    %338 = arith.addf %336, %337 : vector<2x64xf32>
    %339 = vector.shape_cast %333 : vector<2x1xi1> to vector<2x1xi1>
    %340 = vector.broadcast %339 : vector<2x1xi1> to vector<2x64xi1>
    %341 = arith.select %340, %338, %329 : vector<2x64xi1>, vector<2x64xf32>
    %c8_i32 = arith.constant 8 : i32
    %342 = arith.addi %27, %c8_i32 : i32
    %343 = vector.broadcast %342 : i32 to vector<2x1xi32>
    %344 = arith.cmpi slt, %343, %17 : vector<2x1xi32>
    %cst_89 = arith.constant 1.000000e+00 : f32
    %345 = vector.broadcast %cst_89 : f32 to vector<2x64xf32>
    %346 = arith.subf %345, %328 : vector<2x64xf32>
    %347 = arith.mulf %346, %326 : vector<2x64xf32>
    %348 = arith.mulf %328, %330 : vector<2x64xf32>
    %349 = arith.addf %347, %348 : vector<2x64xf32>
    %350 = vector.shape_cast %344 : vector<2x1xi1> to vector<2x1xi1>
    %351 = vector.broadcast %350 : vector<2x1xi1> to vector<2x64xi1>
    %352 = arith.select %351, %349, %330 : vector<2x64xi1>, vector<2x64xf32>
    %353 = tpu.concatenate %341, %352 in 1 : vector<2x64xf32>, vector<2x64xf32> -> vector<2x128xf32>
    %354 = arith.truncf %341 : vector<2x64xf32> to vector<2x64xbf16>
    %c8_90 = arith.constant 8 : index
    %c0_91 = arith.constant 0 : index
    %355 = vector.load %arg11[%c8_90, %c0_91] : memref<26x64xbf16, #tpu.memory_space<vmem>>, vector<2x64xbf16>
    tpu.vector_store %arg11[%c8_90, %c0_91], %354 {strides = array<i32>} : memref<26x64xbf16, #tpu.memory_space<vmem>>, vector<2x64xbf16>,
    %356 = arith.truncf %352 : vector<2x64xf32> to vector<2x64xbf16>
    %c16_92 = arith.constant 16 : index
    %c0_93 = arith.constant 0 : index
    %357 = vector.load %arg12[%c16_92, %c0_93] : memref<26x64xbf16, #tpu.memory_space<vmem>>, vector<2x64xbf16>
    tpu.vector_store %arg12[%c16_92, %c0_93], %356 {strides = array<i32>} : memref<26x64xbf16, #tpu.memory_space<vmem>>, vector<2x64xbf16>,
    %358 = arith.truncf %353 : vector<2x128xf32> to vector<2x128xbf16>
    %c0_94 = arith.constant 0 : index
    %c0_95 = arith.constant 0 : index
    %359 = vector.load %arg8[%c0_94, %c0_95] : memref<128x384xbf16, #tpu.memory_space<vmem>>, vector<128x384xbf16>
    %cst_96 = arith.constant dense<0.000000e+00> : vector<2x384xf32>
    %360 = tpu.matmul %358, %359, %cst_96 {dimension_numbers = #tpu.dot_dimension_numbers<[1], [0], [0], [1], [0, 0, 1, 1], [], []>} : vector<2x128xbf16>, vector<128x384xbf16>, vector<2x384xf32> -> vector<2x384xf32>
    %c10 = arith.constant 10 : index
    %c0_97 = arith.constant 0 : index
    %361 = vector.load %arg14[%c10, %c0_97] : memref<26x192xf32, #tpu.memory_space<vmem>>, vector<2x192xf32>
    %c14 = arith.constant 14 : index
    %c0_98 = arith.constant 0 : index
    %362 = vector.load %arg15[%c14, %c0_98] : memref<26x192xf32, #tpu.memory_space<vmem>>, vector<2x192xf32>
    %363 = vector.extract_strided_slice %361 {offsets = [0, 0], sizes = [2, 128], strides = [1, 1]} : vector<2x192xf32> to vector<2x128xf32>
    %364 = vector.extract_strided_slice %360 {offsets = [0, 0], sizes = [2, 128], strides = [1, 1]} : vector<2x384xf32> to vector<2x128xf32>
    %365 = arith.addf %363, %364 : vector<2x128xf32>
    %366 = arith.negf %365 : vector<2x128xf32>
    %367 = math.exp %366 : vector<2x128xf32>
    %cst_99 = arith.constant 1.000000e+00 : f32
    %368 = vector.broadcast %cst_99 : f32 to vector<2x128xf32>
    %369 = arith.addf %368, %367 : vector<2x128xf32>
    %370 = arith.divf %368, %369 : vector<2x128xf32>
    %371 = vector.extract_strided_slice %362 {offsets = [0, 0], sizes = [2, 128], strides = [1, 1]} : vector<2x192xf32> to vector<2x128xf32>
    %372 = vector.extract_strided_slice %360 {offsets = [0, 128], sizes = [2, 128], strides = [1, 1]} : vector<2x384xf32> to vector<2x128xf32>
    %373 = arith.addf %371, %372 : vector<2x128xf32>
    %374 = arith.negf %373 : vector<2x128xf32>
    %375 = math.exp %374 : vector<2x128xf32>
    %cst_100 = arith.constant 1.000000e+00 : f32
    %376 = vector.broadcast %cst_100 : f32 to vector<2x128xf32>
    %377 = arith.addf %376, %375 : vector<2x128xf32>
    %378 = arith.divf %376, %377 : vector<2x128xf32>
    %379 = vector.extract_strided_slice %361 {offsets = [0, 128], sizes = [2, 64], strides = [1, 1]} : vector<2x192xf32> to vector<2x64xf32>
    %380 = vector.extract_strided_slice %370 {offsets = [0, 0], sizes = [2, 64], strides = [1, 1]} : vector<2x128xf32> to vector<2x64xf32>
    %381 = vector.extract_strided_slice %360 {offsets = [0, 256], sizes = [2, 64], strides = [1, 1]} : vector<2x384xf32> to vector<2x64xf32>
    %382 = arith.addf %381, %20 : vector<2x64xf32>
    %383 = arith.mulf %380, %382 : vector<2x64xf32>
    %384 = arith.addf %379, %383 : vector<2x64xf32>
    %385 = math.tanh %384 : vector<2x64xf32>
    %386 = vector.extract_strided_slice %362 {offsets = [0, 128], sizes = [2, 64], strides = [1, 1]} : vector<2x192xf32> to vector<2x64xf32>
    %387 = vector.extract_strided_slice %378 {offsets = [0, 0], sizes = [2, 64], strides = [1, 1]} : vector<2x128xf32> to vector<2x64xf32>
    %388 = vector.extract_strided_slice %360 {offsets = [0, 320], sizes = [2, 64], strides = [1, 1]} : vector<2x384xf32> to vector<2x64xf32>
    %389 = arith.addf %388, %23 : vector<2x64xf32>
    %390 = arith.mulf %387, %389 : vector<2x64xf32>
    %391 = arith.addf %386, %390 : vector<2x64xf32>
    %392 = math.tanh %391 : vector<2x64xf32>
    %393 = vector.extract_strided_slice %370 {offsets = [0, 64], sizes = [2, 64], strides = [1, 1]} : vector<2x128xf32> to vector<2x64xf32>
    %394 = vector.extract_strided_slice %378 {offsets = [0, 64], sizes = [2, 64], strides = [1, 1]} : vector<2x128xf32> to vector<2x64xf32>
    %395 = vector.extract_strided_slice %353 {offsets = [0, 0], sizes = [2, 64], strides = [1, 1]} : vector<2x128xf32> to vector<2x64xf32>
    %396 = vector.extract_strided_slice %353 {offsets = [0, 64], sizes = [2, 64], strides = [1, 1]} : vector<2x128xf32> to vector<2x64xf32>
    %c5_i32 = arith.constant 5 : i32
    %397 = arith.addi %25, %c5_i32 : i32
    %398 = vector.broadcast %397 : i32 to vector<2x1xi32>
    %399 = arith.cmpi slt, %398, %17 : vector<2x1xi32>
    %cst_101 = arith.constant 1.000000e+00 : f32
    %400 = vector.broadcast %cst_101 : f32 to vector<2x64xf32>
    %401 = arith.subf %400, %393 : vector<2x64xf32>
    %402 = arith.mulf %401, %385 : vector<2x64xf32>
    %403 = arith.mulf %393, %395 : vector<2x64xf32>
    %404 = arith.addf %402, %403 : vector<2x64xf32>
    %405 = vector.shape_cast %399 : vector<2x1xi1> to vector<2x1xi1>
    %406 = vector.broadcast %405 : vector<2x1xi1> to vector<2x64xi1>
    %407 = arith.select %406, %404, %395 : vector<2x64xi1>, vector<2x64xf32>
    %c7_i32 = arith.constant 7 : i32
    %408 = arith.addi %27, %c7_i32 : i32
    %409 = vector.broadcast %408 : i32 to vector<2x1xi32>
    %410 = arith.cmpi slt, %409, %17 : vector<2x1xi32>
    %cst_102 = arith.constant 1.000000e+00 : f32
    %411 = vector.broadcast %cst_102 : f32 to vector<2x64xf32>
    %412 = arith.subf %411, %394 : vector<2x64xf32>
    %413 = arith.mulf %412, %392 : vector<2x64xf32>
    %414 = arith.mulf %394, %396 : vector<2x64xf32>
    %415 = arith.addf %413, %414 : vector<2x64xf32>
    %416 = vector.shape_cast %410 : vector<2x1xi1> to vector<2x1xi1>
    %417 = vector.broadcast %416 : vector<2x1xi1> to vector<2x64xi1>
    %418 = arith.select %417, %415, %396 : vector<2x64xi1>, vector<2x64xf32>
    %419 = tpu.concatenate %407, %418 in 1 : vector<2x64xf32>, vector<2x64xf32> -> vector<2x128xf32>
    %420 = arith.truncf %407 : vector<2x64xf32> to vector<2x64xbf16>
    %c10_103 = arith.constant 10 : index
    %c0_104 = arith.constant 0 : index
    %421 = vector.load %arg11[%c10_103, %c0_104] : memref<26x64xbf16, #tpu.memory_space<vmem>>, vector<2x64xbf16>
    tpu.vector_store %arg11[%c10_103, %c0_104], %420 {strides = array<i32>} : memref<26x64xbf16, #tpu.memory_space<vmem>>, vector<2x64xbf16>,
    %422 = arith.truncf %418 : vector<2x64xf32> to vector<2x64xbf16>
    %c14_105 = arith.constant 14 : index
    %c0_106 = arith.constant 0 : index
    %423 = vector.load %arg12[%c14_105, %c0_106] : memref<26x64xbf16, #tpu.memory_space<vmem>>, vector<2x64xbf16>
    tpu.vector_store %arg12[%c14_105, %c0_106], %422 {strides = array<i32>} : memref<26x64xbf16, #tpu.memory_space<vmem>>, vector<2x64xbf16>,
    %424 = arith.truncf %419 : vector<2x128xf32> to vector<2x128xbf16>
    %c0_107 = arith.constant 0 : index
    %c0_108 = arith.constant 0 : index
    %425 = vector.load %arg8[%c0_107, %c0_108] : memref<128x384xbf16, #tpu.memory_space<vmem>>, vector<128x384xbf16>
    %cst_109 = arith.constant dense<0.000000e+00> : vector<2x384xf32>
    %426 = tpu.matmul %424, %425, %cst_109 {dimension_numbers = #tpu.dot_dimension_numbers<[1], [0], [0], [1], [0, 0, 1, 1], [], []>} : vector<2x128xbf16>, vector<128x384xbf16>, vector<2x384xf32> -> vector<2x384xf32>
    %c12 = arith.constant 12 : index
    %c0_110 = arith.constant 0 : index
    %427 = vector.load %arg14[%c12, %c0_110] : memref<26x192xf32, #tpu.memory_space<vmem>>, vector<2x192xf32>
    %c12_111 = arith.constant 12 : index
    %c0_112 = arith.constant 0 : index
    %428 = vector.load %arg15[%c12_111, %c0_112] : memref<26x192xf32, #tpu.memory_space<vmem>>, vector<2x192xf32>
    %429 = vector.extract_strided_slice %427 {offsets = [0, 0], sizes = [2, 128], strides = [1, 1]} : vector<2x192xf32> to vector<2x128xf32>
    %430 = vector.extract_strided_slice %426 {offsets = [0, 0], sizes = [2, 128], strides = [1, 1]} : vector<2x384xf32> to vector<2x128xf32>
    %431 = arith.addf %429, %430 : vector<2x128xf32>
    %432 = arith.negf %431 : vector<2x128xf32>
    %433 = math.exp %432 : vector<2x128xf32>
    %cst_113 = arith.constant 1.000000e+00 : f32
    %434 = vector.broadcast %cst_113 : f32 to vector<2x128xf32>
    %435 = arith.addf %434, %433 : vector<2x128xf32>
    %436 = arith.divf %434, %435 : vector<2x128xf32>
    %437 = vector.extract_strided_slice %428 {offsets = [0, 0], sizes = [2, 128], strides = [1, 1]} : vector<2x192xf32> to vector<2x128xf32>
    %438 = vector.extract_strided_slice %426 {offsets = [0, 128], sizes = [2, 128], strides = [1, 1]} : vector<2x384xf32> to vector<2x128xf32>
    %439 = arith.addf %437, %438 : vector<2x128xf32>
    %440 = arith.negf %439 : vector<2x128xf32>
    %441 = math.exp %440 : vector<2x128xf32>
    %cst_114 = arith.constant 1.000000e+00 : f32
    %442 = vector.broadcast %cst_114 : f32 to vector<2x128xf32>
    %443 = arith.addf %442, %441 : vector<2x128xf32>
    %444 = arith.divf %442, %443 : vector<2x128xf32>
    %445 = vector.extract_strided_slice %427 {offsets = [0, 128], sizes = [2, 64], strides = [1, 1]} : vector<2x192xf32> to vector<2x64xf32>
    %446 = vector.extract_strided_slice %436 {offsets = [0, 0], sizes = [2, 64], strides = [1, 1]} : vector<2x128xf32> to vector<2x64xf32>
    %447 = vector.extract_strided_slice %426 {offsets = [0, 256], sizes = [2, 64], strides = [1, 1]} : vector<2x384xf32> to vector<2x64xf32>
    %448 = arith.addf %447, %20 : vector<2x64xf32>
    %449 = arith.mulf %446, %448 : vector<2x64xf32>
    %450 = arith.addf %445, %449 : vector<2x64xf32>
    %451 = math.tanh %450 : vector<2x64xf32>
    %452 = vector.extract_strided_slice %428 {offsets = [0, 128], sizes = [2, 64], strides = [1, 1]} : vector<2x192xf32> to vector<2x64xf32>
    %453 = vector.extract_strided_slice %444 {offsets = [0, 0], sizes = [2, 64], strides = [1, 1]} : vector<2x128xf32> to vector<2x64xf32>
    %454 = vector.extract_strided_slice %426 {offsets = [0, 320], sizes = [2, 64], strides = [1, 1]} : vector<2x384xf32> to vector<2x64xf32>
    %455 = arith.addf %454, %23 : vector<2x64xf32>
    %456 = arith.mulf %453, %455 : vector<2x64xf32>
    %457 = arith.addf %452, %456 : vector<2x64xf32>
    %458 = math.tanh %457 : vector<2x64xf32>
    %459 = vector.extract_strided_slice %436 {offsets = [0, 64], sizes = [2, 64], strides = [1, 1]} : vector<2x128xf32> to vector<2x64xf32>
    %460 = vector.extract_strided_slice %444 {offsets = [0, 64], sizes = [2, 64], strides = [1, 1]} : vector<2x128xf32> to vector<2x64xf32>
    %461 = vector.extract_strided_slice %419 {offsets = [0, 0], sizes = [2, 64], strides = [1, 1]} : vector<2x128xf32> to vector<2x64xf32>
    %462 = vector.extract_strided_slice %419 {offsets = [0, 64], sizes = [2, 64], strides = [1, 1]} : vector<2x128xf32> to vector<2x64xf32>
    %c6_i32 = arith.constant 6 : i32
    %463 = arith.addi %25, %c6_i32 : i32
    %464 = vector.broadcast %463 : i32 to vector<2x1xi32>
    %465 = arith.cmpi slt, %464, %17 : vector<2x1xi32>
    %cst_115 = arith.constant 1.000000e+00 : f32
    %466 = vector.broadcast %cst_115 : f32 to vector<2x64xf32>
    %467 = arith.subf %466, %459 : vector<2x64xf32>
    %468 = arith.mulf %467, %451 : vector<2x64xf32>
    %469 = arith.mulf %459, %461 : vector<2x64xf32>
    %470 = arith.addf %468, %469 : vector<2x64xf32>
    %471 = vector.shape_cast %465 : vector<2x1xi1> to vector<2x1xi1>
    %472 = vector.broadcast %471 : vector<2x1xi1> to vector<2x64xi1>
    %473 = arith.select %472, %470, %461 : vector<2x64xi1>, vector<2x64xf32>
    %c6_i32_116 = arith.constant 6 : i32
    %474 = arith.addi %27, %c6_i32_116 : i32
    %475 = vector.broadcast %474 : i32 to vector<2x1xi32>
    %476 = arith.cmpi slt, %475, %17 : vector<2x1xi32>
    %cst_117 = arith.constant 1.000000e+00 : f32
    %477 = vector.broadcast %cst_117 : f32 to vector<2x64xf32>
    %478 = arith.subf %477, %460 : vector<2x64xf32>
    %479 = arith.mulf %478, %458 : vector<2x64xf32>
    %480 = arith.mulf %460, %462 : vector<2x64xf32>
    %481 = arith.addf %479, %480 : vector<2x64xf32>
    %482 = vector.shape_cast %476 : vector<2x1xi1> to vector<2x1xi1>
    %483 = vector.broadcast %482 : vector<2x1xi1> to vector<2x64xi1>
    %484 = arith.select %483, %481, %462 : vector<2x64xi1>, vector<2x64xf32>
    %485 = tpu.concatenate %473, %484 in 1 : vector<2x64xf32>, vector<2x64xf32> -> vector<2x128xf32>
    %486 = arith.truncf %473 : vector<2x64xf32> to vector<2x64xbf16>
    %c12_118 = arith.constant 12 : index
    %c0_119 = arith.constant 0 : index
    %487 = vector.load %arg11[%c12_118, %c0_119] : memref<26x64xbf16, #tpu.memory_space<vmem>>, vector<2x64xbf16>
    tpu.vector_store %arg11[%c12_118, %c0_119], %486 {strides = array<i32>} : memref<26x64xbf16, #tpu.memory_space<vmem>>, vector<2x64xbf16>,
    %488 = arith.truncf %484 : vector<2x64xf32> to vector<2x64xbf16>
    %c12_120 = arith.constant 12 : index
    %c0_121 = arith.constant 0 : index
    %489 = vector.load %arg12[%c12_120, %c0_121] : memref<26x64xbf16, #tpu.memory_space<vmem>>, vector<2x64xbf16>
    tpu.vector_store %arg12[%c12_120, %c0_121], %488 {strides = array<i32>} : memref<26x64xbf16, #tpu.memory_space<vmem>>, vector<2x64xbf16>,
    %490 = arith.truncf %485 : vector<2x128xf32> to vector<2x128xbf16>
    %c0_122 = arith.constant 0 : index
    %c0_123 = arith.constant 0 : index
    %491 = vector.load %arg8[%c0_122, %c0_123] : memref<128x384xbf16, #tpu.memory_space<vmem>>, vector<128x384xbf16>
    %cst_124 = arith.constant dense<0.000000e+00> : vector<2x384xf32>
    %492 = tpu.matmul %490, %491, %cst_124 {dimension_numbers = #tpu.dot_dimension_numbers<[1], [0], [0], [1], [0, 0, 1, 1], [], []>} : vector<2x128xbf16>, vector<128x384xbf16>, vector<2x384xf32> -> vector<2x384xf32>
    %c14_125 = arith.constant 14 : index
    %c0_126 = arith.constant 0 : index
    %493 = vector.load %arg14[%c14_125, %c0_126] : memref<26x192xf32, #tpu.memory_space<vmem>>, vector<2x192xf32>
    %c10_127 = arith.constant 10 : index
    %c0_128 = arith.constant 0 : index
    %494 = vector.load %arg15[%c10_127, %c0_128] : memref<26x192xf32, #tpu.memory_space<vmem>>, vector<2x192xf32>
    %495 = vector.extract_strided_slice %493 {offsets = [0, 0], sizes = [2, 128], strides = [1, 1]} : vector<2x192xf32> to vector<2x128xf32>
    %496 = vector.extract_strided_slice %492 {offsets = [0, 0], sizes = [2, 128], strides = [1, 1]} : vector<2x384xf32> to vector<2x128xf32>
    %497 = arith.addf %495, %496 : vector<2x128xf32>
    %498 = arith.negf %497 : vector<2x128xf32>
    %499 = math.exp %498 : vector<2x128xf32>
    %cst_129 = arith.constant 1.000000e+00 : f32
    %500 = vector.broadcast %cst_129 : f32 to vector<2x128xf32>
    %501 = arith.addf %500, %499 : vector<2x128xf32>
    %502 = arith.divf %500, %501 : vector<2x128xf32>
    %503 = vector.extract_strided_slice %494 {offsets = [0, 0], sizes = [2, 128], strides = [1, 1]} : vector<2x192xf32> to vector<2x128xf32>
    %504 = vector.extract_strided_slice %492 {offsets = [0, 128], sizes = [2, 128], strides = [1, 1]} : vector<2x384xf32> to vector<2x128xf32>
    %505 = arith.addf %503, %504 : vector<2x128xf32>
    %506 = arith.negf %505 : vector<2x128xf32>
    %507 = math.exp %506 : vector<2x128xf32>
    %cst_130 = arith.constant 1.000000e+00 : f32
    %508 = vector.broadcast %cst_130 : f32 to vector<2x128xf32>
    %509 = arith.addf %508, %507 : vector<2x128xf32>
    %510 = arith.divf %508, %509 : vector<2x128xf32>
    %511 = vector.extract_strided_slice %493 {offsets = [0, 128], sizes = [2, 64], strides = [1, 1]} : vector<2x192xf32> to vector<2x64xf32>
    %512 = vector.extract_strided_slice %502 {offsets = [0, 0], sizes = [2, 64], strides = [1, 1]} : vector<2x128xf32> to vector<2x64xf32>
    %513 = vector.extract_strided_slice %492 {offsets = [0, 256], sizes = [2, 64], strides = [1, 1]} : vector<2x384xf32> to vector<2x64xf32>
    %514 = arith.addf %513, %20 : vector<2x64xf32>
    %515 = arith.mulf %512, %514 : vector<2x64xf32>
    %516 = arith.addf %511, %515 : vector<2x64xf32>
    %517 = math.tanh %516 : vector<2x64xf32>
    %518 = vector.extract_strided_slice %494 {offsets = [0, 128], sizes = [2, 64], strides = [1, 1]} : vector<2x192xf32> to vector<2x64xf32>
    %519 = vector.extract_strided_slice %510 {offsets = [0, 0], sizes = [2, 64], strides = [1, 1]} : vector<2x128xf32> to vector<2x64xf32>
    %520 = vector.extract_strided_slice %492 {offsets = [0, 320], sizes = [2, 64], strides = [1, 1]} : vector<2x384xf32> to vector<2x64xf32>
    %521 = arith.addf %520, %23 : vector<2x64xf32>
    %522 = arith.mulf %519, %521 : vector<2x64xf32>
    %523 = arith.addf %518, %522 : vector<2x64xf32>
    %524 = math.tanh %523 : vector<2x64xf32>
    %525 = vector.extract_strided_slice %502 {offsets = [0, 64], sizes = [2, 64], strides = [1, 1]} : vector<2x128xf32> to vector<2x64xf32>
    %526 = vector.extract_strided_slice %510 {offsets = [0, 64], sizes = [2, 64], strides = [1, 1]} : vector<2x128xf32> to vector<2x64xf32>
    %527 = vector.extract_strided_slice %485 {offsets = [0, 0], sizes = [2, 64], strides = [1, 1]} : vector<2x128xf32> to vector<2x64xf32>
    %528 = vector.extract_strided_slice %485 {offsets = [0, 64], sizes = [2, 64], strides = [1, 1]} : vector<2x128xf32> to vector<2x64xf32>
    %c7_i32_131 = arith.constant 7 : i32
    %529 = arith.addi %25, %c7_i32_131 : i32
    %530 = vector.broadcast %529 : i32 to vector<2x1xi32>
    %531 = arith.cmpi slt, %530, %17 : vector<2x1xi32>
    %cst_132 = arith.constant 1.000000e+00 : f32
    %532 = vector.broadcast %cst_132 : f32 to vector<2x64xf32>
    %533 = arith.subf %532, %525 : vector<2x64xf32>
    %534 = arith.mulf %533, %517 : vector<2x64xf32>
    %535 = arith.mulf %525, %527 : vector<2x64xf32>
    %536 = arith.addf %534, %535 : vector<2x64xf32>
    %537 = vector.shape_cast %531 : vector<2x1xi1> to vector<2x1xi1>
    %538 = vector.broadcast %537 : vector<2x1xi1> to vector<2x64xi1>
    %539 = arith.select %538, %536, %527 : vector<2x64xi1>, vector<2x64xf32>
    %c5_i32_133 = arith.constant 5 : i32
    %540 = arith.addi %27, %c5_i32_133 : i32
    %541 = vector.broadcast %540 : i32 to vector<2x1xi32>
    %542 = arith.cmpi slt, %541, %17 : vector<2x1xi32>
    %cst_134 = arith.constant 1.000000e+00 : f32
    %543 = vector.broadcast %cst_134 : f32 to vector<2x64xf32>
    %544 = arith.subf %543, %526 : vector<2x64xf32>
    %545 = arith.mulf %544, %524 : vector<2x64xf32>
    %546 = arith.mulf %526, %528 : vector<2x64xf32>
    %547 = arith.addf %545, %546 : vector<2x64xf32>
    %548 = vector.shape_cast %542 : vector<2x1xi1> to vector<2x1xi1>
    %549 = vector.broadcast %548 : vector<2x1xi1> to vector<2x64xi1>
    %550 = arith.select %549, %547, %528 : vector<2x64xi1>, vector<2x64xf32>
    %551 = tpu.concatenate %539, %550 in 1 : vector<2x64xf32>, vector<2x64xf32> -> vector<2x128xf32>
    %552 = arith.truncf %539 : vector<2x64xf32> to vector<2x64xbf16>
    %c14_135 = arith.constant 14 : index
    %c0_136 = arith.constant 0 : index
    %553 = vector.load %arg11[%c14_135, %c0_136] : memref<26x64xbf16, #tpu.memory_space<vmem>>, vector<2x64xbf16>
    tpu.vector_store %arg11[%c14_135, %c0_136], %552 {strides = array<i32>} : memref<26x64xbf16, #tpu.memory_space<vmem>>, vector<2x64xbf16>,
    %554 = arith.truncf %550 : vector<2x64xf32> to vector<2x64xbf16>
    %c10_137 = arith.constant 10 : index
    %c0_138 = arith.constant 0 : index
    %555 = vector.load %arg12[%c10_137, %c0_138] : memref<26x64xbf16, #tpu.memory_space<vmem>>, vector<2x64xbf16>
    tpu.vector_store %arg12[%c10_137, %c0_138], %554 {strides = array<i32>} : memref<26x64xbf16, #tpu.memory_space<vmem>>, vector<2x64xbf16>,
    %556 = arith.truncf %551 : vector<2x128xf32> to vector<2x128xbf16>
    %c0_139 = arith.constant 0 : index
    %c0_140 = arith.constant 0 : index
    %557 = vector.load %arg8[%c0_139, %c0_140] : memref<128x384xbf16, #tpu.memory_space<vmem>>, vector<128x384xbf16>
    %cst_141 = arith.constant dense<0.000000e+00> : vector<2x384xf32>
    %558 = tpu.matmul %556, %557, %cst_141 {dimension_numbers = #tpu.dot_dimension_numbers<[1], [0], [0], [1], [0, 0, 1, 1], [], []>} : vector<2x128xbf16>, vector<128x384xbf16>, vector<2x384xf32> -> vector<2x384xf32>
    %c16_142 = arith.constant 16 : index
    %c0_143 = arith.constant 0 : index
    %559 = vector.load %arg14[%c16_142, %c0_143] : memref<26x192xf32, #tpu.memory_space<vmem>>, vector<2x192xf32>
    %c8_144 = arith.constant 8 : index
    %c0_145 = arith.constant 0 : index
    %560 = vector.load %arg15[%c8_144, %c0_145] : memref<26x192xf32, #tpu.memory_space<vmem>>, vector<2x192xf32>
    %561 = vector.extract_strided_slice %559 {offsets = [0, 0], sizes = [2, 128], strides = [1, 1]} : vector<2x192xf32> to vector<2x128xf32>
    %562 = vector.extract_strided_slice %558 {offsets = [0, 0], sizes = [2, 128], strides = [1, 1]} : vector<2x384xf32> to vector<2x128xf32>
    %563 = arith.addf %561, %562 : vector<2x128xf32>
    %564 = arith.negf %563 : vector<2x128xf32>
    %565 = math.exp %564 : vector<2x128xf32>
    %cst_146 = arith.constant 1.000000e+00 : f32
    %566 = vector.broadcast %cst_146 : f32 to vector<2x128xf32>
    %567 = arith.addf %566, %565 : vector<2x128xf32>
    %568 = arith.divf %566, %567 : vector<2x128xf32>
    %569 = vector.extract_strided_slice %560 {offsets = [0, 0], sizes = [2, 128], strides = [1, 1]} : vector<2x192xf32> to vector<2x128xf32>
    %570 = vector.extract_strided_slice %558 {offsets = [0, 128], sizes = [2, 128], strides = [1, 1]} : vector<2x384xf32> to vector<2x128xf32>
    %571 = arith.addf %569, %570 : vector<2x128xf32>
    %572 = arith.negf %571 : vector<2x128xf32>
    %573 = math.exp %572 : vector<2x128xf32>
    %cst_147 = arith.constant 1.000000e+00 : f32
    %574 = vector.broadcast %cst_147 : f32 to vector<2x128xf32>
    %575 = arith.addf %574, %573 : vector<2x128xf32>
    %576 = arith.divf %574, %575 : vector<2x128xf32>
    %577 = vector.extract_strided_slice %559 {offsets = [0, 128], sizes = [2, 64], strides = [1, 1]} : vector<2x192xf32> to vector<2x64xf32>
    %578 = vector.extract_strided_slice %568 {offsets = [0, 0], sizes = [2, 64], strides = [1, 1]} : vector<2x128xf32> to vector<2x64xf32>
    %579 = vector.extract_strided_slice %558 {offsets = [0, 256], sizes = [2, 64], strides = [1, 1]} : vector<2x384xf32> to vector<2x64xf32>
    %580 = arith.addf %579, %20 : vector<2x64xf32>
    %581 = arith.mulf %578, %580 : vector<2x64xf32>
    %582 = arith.addf %577, %581 : vector<2x64xf32>
    %583 = math.tanh %582 : vector<2x64xf32>
    %584 = vector.extract_strided_slice %560 {offsets = [0, 128], sizes = [2, 64], strides = [1, 1]} : vector<2x192xf32> to vector<2x64xf32>
    %585 = vector.extract_strided_slice %576 {offsets = [0, 0], sizes = [2, 64], strides = [1, 1]} : vector<2x128xf32> to vector<2x64xf32>
    %586 = vector.extract_strided_slice %558 {offsets = [0, 320], sizes = [2, 64], strides = [1, 1]} : vector<2x384xf32> to vector<2x64xf32>
    %587 = arith.addf %586, %23 : vector<2x64xf32>
    %588 = arith.mulf %585, %587 : vector<2x64xf32>
    %589 = arith.addf %584, %588 : vector<2x64xf32>
    %590 = math.tanh %589 : vector<2x64xf32>
    %591 = vector.extract_strided_slice %568 {offsets = [0, 64], sizes = [2, 64], strides = [1, 1]} : vector<2x128xf32> to vector<2x64xf32>
    %592 = vector.extract_strided_slice %576 {offsets = [0, 64], sizes = [2, 64], strides = [1, 1]} : vector<2x128xf32> to vector<2x64xf32>
    %593 = vector.extract_strided_slice %551 {offsets = [0, 0], sizes = [2, 64], strides = [1, 1]} : vector<2x128xf32> to vector<2x64xf32>
    %594 = vector.extract_strided_slice %551 {offsets = [0, 64], sizes = [2, 64], strides = [1, 1]} : vector<2x128xf32> to vector<2x64xf32>
    %c8_i32_148 = arith.constant 8 : i32
    %595 = arith.addi %25, %c8_i32_148 : i32
    %596 = vector.broadcast %595 : i32 to vector<2x1xi32>
    %597 = arith.cmpi slt, %596, %17 : vector<2x1xi32>
    %cst_149 = arith.constant 1.000000e+00 : f32
    %598 = vector.broadcast %cst_149 : f32 to vector<2x64xf32>
    %599 = arith.subf %598, %591 : vector<2x64xf32>
    %600 = arith.mulf %599, %583 : vector<2x64xf32>
    %601 = arith.mulf %591, %593 : vector<2x64xf32>
    %602 = arith.addf %600, %601 : vector<2x64xf32>
    %603 = vector.shape_cast %597 : vector<2x1xi1> to vector<2x1xi1>
    %604 = vector.broadcast %603 : vector<2x1xi1> to vector<2x64xi1>
    %605 = arith.select %604, %602, %593 : vector<2x64xi1>, vector<2x64xf32>
    %c4_i32_150 = arith.constant 4 : i32
    %606 = arith.addi %27, %c4_i32_150 : i32
    %607 = vector.broadcast %606 : i32 to vector<2x1xi32>
    %608 = arith.cmpi slt, %607, %17 : vector<2x1xi32>
    %cst_151 = arith.constant 1.000000e+00 : f32
    %609 = vector.broadcast %cst_151 : f32 to vector<2x64xf32>
    %610 = arith.subf %609, %592 : vector<2x64xf32>
    %611 = arith.mulf %610, %590 : vector<2x64xf32>
    %612 = arith.mulf %592, %594 : vector<2x64xf32>
    %613 = arith.addf %611, %612 : vector<2x64xf32>
    %614 = vector.shape_cast %608 : vector<2x1xi1> to vector<2x1xi1>
    %615 = vector.broadcast %614 : vector<2x1xi1> to vector<2x64xi1>
    %616 = arith.select %615, %613, %594 : vector<2x64xi1>, vector<2x64xf32>
    %617 = tpu.concatenate %605, %616 in 1 : vector<2x64xf32>, vector<2x64xf32> -> vector<2x128xf32>
    %618 = arith.truncf %605 : vector<2x64xf32> to vector<2x64xbf16>
    %c16_152 = arith.constant 16 : index
    %c0_153 = arith.constant 0 : index
    %619 = vector.load %arg11[%c16_152, %c0_153] : memref<26x64xbf16, #tpu.memory_space<vmem>>, vector<2x64xbf16>
    tpu.vector_store %arg11[%c16_152, %c0_153], %618 {strides = array<i32>} : memref<26x64xbf16, #tpu.memory_space<vmem>>, vector<2x64xbf16>,
    %620 = arith.truncf %616 : vector<2x64xf32> to vector<2x64xbf16>
    %c8_154 = arith.constant 8 : index
    %c0_155 = arith.constant 0 : index
    %621 = vector.load %arg12[%c8_154, %c0_155] : memref<26x64xbf16, #tpu.memory_space<vmem>>, vector<2x64xbf16>
    tpu.vector_store %arg12[%c8_154, %c0_155], %620 {strides = array<i32>} : memref<26x64xbf16, #tpu.memory_space<vmem>>, vector<2x64xbf16>,
    %622 = arith.truncf %617 : vector<2x128xf32> to vector<2x128xbf16>
    %c0_156 = arith.constant 0 : index
    %c0_157 = arith.constant 0 : index
    %623 = vector.load %arg8[%c0_156, %c0_157] : memref<128x384xbf16, #tpu.memory_space<vmem>>, vector<128x384xbf16>
    %cst_158 = arith.constant dense<0.000000e+00> : vector<2x384xf32>
    %624 = tpu.matmul %622, %623, %cst_158 {dimension_numbers = #tpu.dot_dimension_numbers<[1], [0], [0], [1], [0, 0, 1, 1], [], []>} : vector<2x128xbf16>, vector<128x384xbf16>, vector<2x384xf32> -> vector<2x384xf32>
    %c18_159 = arith.constant 18 : index
    %c0_160 = arith.constant 0 : index
    %625 = vector.load %arg14[%c18_159, %c0_160] : memref<26x192xf32, #tpu.memory_space<vmem>>, vector<2x192xf32>
    %c6_161 = arith.constant 6 : index
    %c0_162 = arith.constant 0 : index
    %626 = vector.load %arg15[%c6_161, %c0_162] : memref<26x192xf32, #tpu.memory_space<vmem>>, vector<2x192xf32>
    %627 = vector.extract_strided_slice %625 {offsets = [0, 0], sizes = [2, 128], strides = [1, 1]} : vector<2x192xf32> to vector<2x128xf32>
    %628 = vector.extract_strided_slice %624 {offsets = [0, 0], sizes = [2, 128], strides = [1, 1]} : vector<2x384xf32> to vector<2x128xf32>
    %629 = arith.addf %627, %628 : vector<2x128xf32>
    %630 = arith.negf %629 : vector<2x128xf32>
    %631 = math.exp %630 : vector<2x128xf32>
    %cst_163 = arith.constant 1.000000e+00 : f32
    %632 = vector.broadcast %cst_163 : f32 to vector<2x128xf32>
    %633 = arith.addf %632, %631 : vector<2x128xf32>
    %634 = arith.divf %632, %633 : vector<2x128xf32>
    %635 = vector.extract_strided_slice %626 {offsets = [0, 0], sizes = [2, 128], strides = [1, 1]} : vector<2x192xf32> to vector<2x128xf32>
    %636 = vector.extract_strided_slice %624 {offsets = [0, 128], sizes = [2, 128], strides = [1, 1]} : vector<2x384xf32> to vector<2x128xf32>
    %637 = arith.addf %635, %636 : vector<2x128xf32>
    %638 = arith.negf %637 : vector<2x128xf32>
    %639 = math.exp %638 : vector<2x128xf32>
    %cst_164 = arith.constant 1.000000e+00 : f32
    %640 = vector.broadcast %cst_164 : f32 to vector<2x128xf32>
    %641 = arith.addf %640, %639 : vector<2x128xf32>
    %642 = arith.divf %640, %641 : vector<2x128xf32>
    %643 = vector.extract_strided_slice %625 {offsets = [0, 128], sizes = [2, 64], strides = [1, 1]} : vector<2x192xf32> to vector<2x64xf32>
    %644 = vector.extract_strided_slice %634 {offsets = [0, 0], sizes = [2, 64], strides = [1, 1]} : vector<2x128xf32> to vector<2x64xf32>
    %645 = vector.extract_strided_slice %624 {offsets = [0, 256], sizes = [2, 64], strides = [1, 1]} : vector<2x384xf32> to vector<2x64xf32>
    %646 = arith.addf %645, %20 : vector<2x64xf32>
    %647 = arith.mulf %644, %646 : vector<2x64xf32>
    %648 = arith.addf %643, %647 : vector<2x64xf32>
    %649 = math.tanh %648 : vector<2x64xf32>
    %650 = vector.extract_strided_slice %626 {offsets = [0, 128], sizes = [2, 64], strides = [1, 1]} : vector<2x192xf32> to vector<2x64xf32>
    %651 = vector.extract_strided_slice %642 {offsets = [0, 0], sizes = [2, 64], strides = [1, 1]} : vector<2x128xf32> to vector<2x64xf32>
    %652 = vector.extract_strided_slice %624 {offsets = [0, 320], sizes = [2, 64], strides = [1, 1]} : vector<2x384xf32> to vector<2x64xf32>
    %653 = arith.addf %652, %23 : vector<2x64xf32>
    %654 = arith.mulf %651, %653 : vector<2x64xf32>
    %655 = arith.addf %650, %654 : vector<2x64xf32>
    %656 = math.tanh %655 : vector<2x64xf32>
    %657 = vector.extract_strided_slice %634 {offsets = [0, 64], sizes = [2, 64], strides = [1, 1]} : vector<2x128xf32> to vector<2x64xf32>
    %658 = vector.extract_strided_slice %642 {offsets = [0, 64], sizes = [2, 64], strides = [1, 1]} : vector<2x128xf32> to vector<2x64xf32>
    %659 = vector.extract_strided_slice %617 {offsets = [0, 0], sizes = [2, 64], strides = [1, 1]} : vector<2x128xf32> to vector<2x64xf32>
    %660 = vector.extract_strided_slice %617 {offsets = [0, 64], sizes = [2, 64], strides = [1, 1]} : vector<2x128xf32> to vector<2x64xf32>
    %c9_i32_165 = arith.constant 9 : i32
    %661 = arith.addi %25, %c9_i32_165 : i32
    %662 = vector.broadcast %661 : i32 to vector<2x1xi32>
    %663 = arith.cmpi slt, %662, %17 : vector<2x1xi32>
    %cst_166 = arith.constant 1.000000e+00 : f32
    %664 = vector.broadcast %cst_166 : f32 to vector<2x64xf32>
    %665 = arith.subf %664, %657 : vector<2x64xf32>
    %666 = arith.mulf %665, %649 : vector<2x64xf32>
    %667 = arith.mulf %657, %659 : vector<2x64xf32>
    %668 = arith.addf %666, %667 : vector<2x64xf32>
    %669 = vector.shape_cast %663 : vector<2x1xi1> to vector<2x1xi1>
    %670 = vector.broadcast %669 : vector<2x1xi1> to vector<2x64xi1>
    %671 = arith.select %670, %668, %659 : vector<2x64xi1>, vector<2x64xf32>
    %c3_i32_167 = arith.constant 3 : i32
    %672 = arith.addi %27, %c3_i32_167 : i32
    %673 = vector.broadcast %672 : i32 to vector<2x1xi32>
    %674 = arith.cmpi slt, %673, %17 : vector<2x1xi32>
    %cst_168 = arith.constant 1.000000e+00 : f32
    %675 = vector.broadcast %cst_168 : f32 to vector<2x64xf32>
    %676 = arith.subf %675, %658 : vector<2x64xf32>
    %677 = arith.mulf %676, %656 : vector<2x64xf32>
    %678 = arith.mulf %658, %660 : vector<2x64xf32>
    %679 = arith.addf %677, %678 : vector<2x64xf32>
    %680 = vector.shape_cast %674 : vector<2x1xi1> to vector<2x1xi1>
    %681 = vector.broadcast %680 : vector<2x1xi1> to vector<2x64xi1>
    %682 = arith.select %681, %679, %660 : vector<2x64xi1>, vector<2x64xf32>
    %683 = tpu.concatenate %671, %682 in 1 : vector<2x64xf32>, vector<2x64xf32> -> vector<2x128xf32>
    %684 = arith.truncf %671 : vector<2x64xf32> to vector<2x64xbf16>
    %c18_169 = arith.constant 18 : index
    %c0_170 = arith.constant 0 : index
    %685 = vector.load %arg11[%c18_169, %c0_170] : memref<26x64xbf16, #tpu.memory_space<vmem>>, vector<2x64xbf16>
    tpu.vector_store %arg11[%c18_169, %c0_170], %684 {strides = array<i32>} : memref<26x64xbf16, #tpu.memory_space<vmem>>, vector<2x64xbf16>,
    %686 = arith.truncf %682 : vector<2x64xf32> to vector<2x64xbf16>
    %c6_171 = arith.constant 6 : index
    %c0_172 = arith.constant 0 : index
    %687 = vector.load %arg12[%c6_171, %c0_172] : memref<26x64xbf16, #tpu.memory_space<vmem>>, vector<2x64xbf16>
    tpu.vector_store %arg12[%c6_171, %c0_172], %686 {strides = array<i32>} : memref<26x64xbf16, #tpu.memory_space<vmem>>, vector<2x64xbf16>,
    %688 = arith.truncf %683 : vector<2x128xf32> to vector<2x128xbf16>
    %c0_173 = arith.constant 0 : index
    %c0_174 = arith.constant 0 : index
    %689 = vector.load %arg8[%c0_173, %c0_174] : memref<128x384xbf16, #tpu.memory_space<vmem>>, vector<128x384xbf16>
    %cst_175 = arith.constant dense<0.000000e+00> : vector<2x384xf32>
    %690 = tpu.matmul %688, %689, %cst_175 {dimension_numbers = #tpu.dot_dimension_numbers<[1], [0], [0], [1], [0, 0, 1, 1], [], []>} : vector<2x128xbf16>, vector<128x384xbf16>, vector<2x384xf32> -> vector<2x384xf32>
    %c20_176 = arith.constant 20 : index
    %c0_177 = arith.constant 0 : index
    %691 = vector.load %arg14[%c20_176, %c0_177] : memref<26x192xf32, #tpu.memory_space<vmem>>, vector<2x192xf32>
    %c4_178 = arith.constant 4 : index
    %c0_179 = arith.constant 0 : index
    %692 = vector.load %arg15[%c4_178, %c0_179] : memref<26x192xf32, #tpu.memory_space<vmem>>, vector<2x192xf32>
    %693 = vector.extract_strided_slice %691 {offsets = [0, 0], sizes = [2, 128], strides = [1, 1]} : vector<2x192xf32> to vector<2x128xf32>
    %694 = vector.extract_strided_slice %690 {offsets = [0, 0], sizes = [2, 128], strides = [1, 1]} : vector<2x384xf32> to vector<2x128xf32>
    %695 = arith.addf %693, %694 : vector<2x128xf32>
    %696 = arith.negf %695 : vector<2x128xf32>
    %697 = math.exp %696 : vector<2x128xf32>
    %cst_180 = arith.constant 1.000000e+00 : f32
    %698 = vector.broadcast %cst_180 : f32 to vector<2x128xf32>
    %699 = arith.addf %698, %697 : vector<2x128xf32>
    %700 = arith.divf %698, %699 : vector<2x128xf32>
    %701 = vector.extract_strided_slice %692 {offsets = [0, 0], sizes = [2, 128], strides = [1, 1]} : vector<2x192xf32> to vector<2x128xf32>
    %702 = vector.extract_strided_slice %690 {offsets = [0, 128], sizes = [2, 128], strides = [1, 1]} : vector<2x384xf32> to vector<2x128xf32>
    %703 = arith.addf %701, %702 : vector<2x128xf32>
    %704 = arith.negf %703 : vector<2x128xf32>
    %705 = math.exp %704 : vector<2x128xf32>
    %cst_181 = arith.constant 1.000000e+00 : f32
    %706 = vector.broadcast %cst_181 : f32 to vector<2x128xf32>
    %707 = arith.addf %706, %705 : vector<2x128xf32>
    %708 = arith.divf %706, %707 : vector<2x128xf32>
    %709 = vector.extract_strided_slice %691 {offsets = [0, 128], sizes = [2, 64], strides = [1, 1]} : vector<2x192xf32> to vector<2x64xf32>
    %710 = vector.extract_strided_slice %700 {offsets = [0, 0], sizes = [2, 64], strides = [1, 1]} : vector<2x128xf32> to vector<2x64xf32>
    %711 = vector.extract_strided_slice %690 {offsets = [0, 256], sizes = [2, 64], strides = [1, 1]} : vector<2x384xf32> to vector<2x64xf32>
    %712 = arith.addf %711, %20 : vector<2x64xf32>
    %713 = arith.mulf %710, %712 : vector<2x64xf32>
    %714 = arith.addf %709, %713 : vector<2x64xf32>
    %715 = math.tanh %714 : vector<2x64xf32>
    %716 = vector.extract_strided_slice %692 {offsets = [0, 128], sizes = [2, 64], strides = [1, 1]} : vector<2x192xf32> to vector<2x64xf32>
    %717 = vector.extract_strided_slice %708 {offsets = [0, 0], sizes = [2, 64], strides = [1, 1]} : vector<2x128xf32> to vector<2x64xf32>
    %718 = vector.extract_strided_slice %690 {offsets = [0, 320], sizes = [2, 64], strides = [1, 1]} : vector<2x384xf32> to vector<2x64xf32>
    %719 = arith.addf %718, %23 : vector<2x64xf32>
    %720 = arith.mulf %717, %719 : vector<2x64xf32>
    %721 = arith.addf %716, %720 : vector<2x64xf32>
    %722 = math.tanh %721 : vector<2x64xf32>
    %723 = vector.extract_strided_slice %700 {offsets = [0, 64], sizes = [2, 64], strides = [1, 1]} : vector<2x128xf32> to vector<2x64xf32>
    %724 = vector.extract_strided_slice %708 {offsets = [0, 64], sizes = [2, 64], strides = [1, 1]} : vector<2x128xf32> to vector<2x64xf32>
    %725 = vector.extract_strided_slice %683 {offsets = [0, 0], sizes = [2, 64], strides = [1, 1]} : vector<2x128xf32> to vector<2x64xf32>
    %726 = vector.extract_strided_slice %683 {offsets = [0, 64], sizes = [2, 64], strides = [1, 1]} : vector<2x128xf32> to vector<2x64xf32>
    %c10_i32_182 = arith.constant 10 : i32
    %727 = arith.addi %25, %c10_i32_182 : i32
    %728 = vector.broadcast %727 : i32 to vector<2x1xi32>
    %729 = arith.cmpi slt, %728, %17 : vector<2x1xi32>
    %cst_183 = arith.constant 1.000000e+00 : f32
    %730 = vector.broadcast %cst_183 : f32 to vector<2x64xf32>
    %731 = arith.subf %730, %723 : vector<2x64xf32>
    %732 = arith.mulf %731, %715 : vector<2x64xf32>
    %733 = arith.mulf %723, %725 : vector<2x64xf32>
    %734 = arith.addf %732, %733 : vector<2x64xf32>
    %735 = vector.shape_cast %729 : vector<2x1xi1> to vector<2x1xi1>
    %736 = vector.broadcast %735 : vector<2x1xi1> to vector<2x64xi1>
    %737 = arith.select %736, %734, %725 : vector<2x64xi1>, vector<2x64xf32>
    %c2_i32_184 = arith.constant 2 : i32
    %738 = arith.addi %27, %c2_i32_184 : i32
    %739 = vector.broadcast %738 : i32 to vector<2x1xi32>
    %740 = arith.cmpi slt, %739, %17 : vector<2x1xi32>
    %cst_185 = arith.constant 1.000000e+00 : f32
    %741 = vector.broadcast %cst_185 : f32 to vector<2x64xf32>
    %742 = arith.subf %741, %724 : vector<2x64xf32>
    %743 = arith.mulf %742, %722 : vector<2x64xf32>
    %744 = arith.mulf %724, %726 : vector<2x64xf32>
    %745 = arith.addf %743, %744 : vector<2x64xf32>
    %746 = vector.shape_cast %740 : vector<2x1xi1> to vector<2x1xi1>
    %747 = vector.broadcast %746 : vector<2x1xi1> to vector<2x64xi1>
    %748 = arith.select %747, %745, %726 : vector<2x64xi1>, vector<2x64xf32>
    %749 = tpu.concatenate %737, %748 in 1 : vector<2x64xf32>, vector<2x64xf32> -> vector<2x128xf32>
    %750 = arith.truncf %737 : vector<2x64xf32> to vector<2x64xbf16>
    %c20_186 = arith.constant 20 : index
    %c0_187 = arith.constant 0 : index
    %751 = vector.load %arg11[%c20_186, %c0_187] : memref<26x64xbf16, #tpu.memory_space<vmem>>, vector<2x64xbf16>
    tpu.vector_store %arg11[%c20_186, %c0_187], %750 {strides = array<i32>} : memref<26x64xbf16, #tpu.memory_space<vmem>>, vector<2x64xbf16>,
    %752 = arith.truncf %748 : vector<2x64xf32> to vector<2x64xbf16>
    %c4_188 = arith.constant 4 : index
    %c0_189 = arith.constant 0 : index
    %753 = vector.load %arg12[%c4_188, %c0_189] : memref<26x64xbf16, #tpu.memory_space<vmem>>, vector<2x64xbf16>
    tpu.vector_store %arg12[%c4_188, %c0_189], %752 {strides = array<i32>} : memref<26x64xbf16, #tpu.memory_space<vmem>>, vector<2x64xbf16>,
    %754 = arith.truncf %749 : vector<2x128xf32> to vector<2x128xbf16>
    %c0_190 = arith.constant 0 : index
    %c0_191 = arith.constant 0 : index
    %755 = vector.load %arg8[%c0_190, %c0_191] : memref<128x384xbf16, #tpu.memory_space<vmem>>, vector<128x384xbf16>
    %cst_192 = arith.constant dense<0.000000e+00> : vector<2x384xf32>
    %756 = tpu.matmul %754, %755, %cst_192 {dimension_numbers = #tpu.dot_dimension_numbers<[1], [0], [0], [1], [0, 0, 1, 1], [], []>} : vector<2x128xbf16>, vector<128x384xbf16>, vector<2x384xf32> -> vector<2x384xf32>
    %c22_193 = arith.constant 22 : index
    %c0_194 = arith.constant 0 : index
    %757 = vector.load %arg14[%c22_193, %c0_194] : memref<26x192xf32, #tpu.memory_space<vmem>>, vector<2x192xf32>
    %c2_195 = arith.constant 2 : index
    %c0_196 = arith.constant 0 : index
    %758 = vector.load %arg15[%c2_195, %c0_196] : memref<26x192xf32, #tpu.memory_space<vmem>>, vector<2x192xf32>
    %759 = vector.extract_strided_slice %757 {offsets = [0, 0], sizes = [2, 128], strides = [1, 1]} : vector<2x192xf32> to vector<2x128xf32>
    %760 = vector.extract_strided_slice %756 {offsets = [0, 0], sizes = [2, 128], strides = [1, 1]} : vector<2x384xf32> to vector<2x128xf32>
    %761 = arith.addf %759, %760 : vector<2x128xf32>
    %762 = arith.negf %761 : vector<2x128xf32>
    %763 = math.exp %762 : vector<2x128xf32>
    %cst_197 = arith.constant 1.000000e+00 : f32
    %764 = vector.broadcast %cst_197 : f32 to vector<2x128xf32>
    %765 = arith.addf %764, %763 : vector<2x128xf32>
    %766 = arith.divf %764, %765 : vector<2x128xf32>
    %767 = vector.extract_strided_slice %758 {offsets = [0, 0], sizes = [2, 128], strides = [1, 1]} : vector<2x192xf32> to vector<2x128xf32>
    %768 = vector.extract_strided_slice %756 {offsets = [0, 128], sizes = [2, 128], strides = [1, 1]} : vector<2x384xf32> to vector<2x128xf32>
    %769 = arith.addf %767, %768 : vector<2x128xf32>
    %770 = arith.negf %769 : vector<2x128xf32>
    %771 = math.exp %770 : vector<2x128xf32>
    %cst_198 = arith.constant 1.000000e+00 : f32
    %772 = vector.broadcast %cst_198 : f32 to vector<2x128xf32>
    %773 = arith.addf %772, %771 : vector<2x128xf32>
    %774 = arith.divf %772, %773 : vector<2x128xf32>
    %775 = vector.extract_strided_slice %757 {offsets = [0, 128], sizes = [2, 64], strides = [1, 1]} : vector<2x192xf32> to vector<2x64xf32>
    %776 = vector.extract_strided_slice %766 {offsets = [0, 0], sizes = [2, 64], strides = [1, 1]} : vector<2x128xf32> to vector<2x64xf32>
    %777 = vector.extract_strided_slice %756 {offsets = [0, 256], sizes = [2, 64], strides = [1, 1]} : vector<2x384xf32> to vector<2x64xf32>
    %778 = arith.addf %777, %20 : vector<2x64xf32>
    %779 = arith.mulf %776, %778 : vector<2x64xf32>
    %780 = arith.addf %775, %779 : vector<2x64xf32>
    %781 = math.tanh %780 : vector<2x64xf32>
    %782 = vector.extract_strided_slice %758 {offsets = [0, 128], sizes = [2, 64], strides = [1, 1]} : vector<2x192xf32> to vector<2x64xf32>
    %783 = vector.extract_strided_slice %774 {offsets = [0, 0], sizes = [2, 64], strides = [1, 1]} : vector<2x128xf32> to vector<2x64xf32>
    %784 = vector.extract_strided_slice %756 {offsets = [0, 320], sizes = [2, 64], strides = [1, 1]} : vector<2x384xf32> to vector<2x64xf32>
    %785 = arith.addf %784, %23 : vector<2x64xf32>
    %786 = arith.mulf %783, %785 : vector<2x64xf32>
    %787 = arith.addf %782, %786 : vector<2x64xf32>
    %788 = math.tanh %787 : vector<2x64xf32>
    %789 = vector.extract_strided_slice %766 {offsets = [0, 64], sizes = [2, 64], strides = [1, 1]} : vector<2x128xf32> to vector<2x64xf32>
    %790 = vector.extract_strided_slice %774 {offsets = [0, 64], sizes = [2, 64], strides = [1, 1]} : vector<2x128xf32> to vector<2x64xf32>
    %791 = vector.extract_strided_slice %749 {offsets = [0, 0], sizes = [2, 64], strides = [1, 1]} : vector<2x128xf32> to vector<2x64xf32>
    %792 = vector.extract_strided_slice %749 {offsets = [0, 64], sizes = [2, 64], strides = [1, 1]} : vector<2x128xf32> to vector<2x64xf32>
    %c11_i32_199 = arith.constant 11 : i32
    %793 = arith.addi %25, %c11_i32_199 : i32
    %794 = vector.broadcast %793 : i32 to vector<2x1xi32>
    %795 = arith.cmpi slt, %794, %17 : vector<2x1xi32>
    %cst_200 = arith.constant 1.000000e+00 : f32
    %796 = vector.broadcast %cst_200 : f32 to vector<2x64xf32>
    %797 = arith.subf %796, %789 : vector<2x64xf32>
    %798 = arith.mulf %797, %781 : vector<2x64xf32>
    %799 = arith.mulf %789, %791 : vector<2x64xf32>
    %800 = arith.addf %798, %799 : vector<2x64xf32>
    %801 = vector.shape_cast %795 : vector<2x1xi1> to vector<2x1xi1>
    %802 = vector.broadcast %801 : vector<2x1xi1> to vector<2x64xi1>
    %803 = arith.select %802, %800, %791 : vector<2x64xi1>, vector<2x64xf32>
    %c1_i32_201 = arith.constant 1 : i32
    %804 = arith.addi %27, %c1_i32_201 : i32
    %805 = vector.broadcast %804 : i32 to vector<2x1xi32>
    %806 = arith.cmpi slt, %805, %17 : vector<2x1xi32>
    %cst_202 = arith.constant 1.000000e+00 : f32
    %807 = vector.broadcast %cst_202 : f32 to vector<2x64xf32>
    %808 = arith.subf %807, %790 : vector<2x64xf32>
    %809 = arith.mulf %808, %788 : vector<2x64xf32>
    %810 = arith.mulf %790, %792 : vector<2x64xf32>
    %811 = arith.addf %809, %810 : vector<2x64xf32>
    %812 = vector.shape_cast %806 : vector<2x1xi1> to vector<2x1xi1>
    %813 = vector.broadcast %812 : vector<2x1xi1> to vector<2x64xi1>
    %814 = arith.select %813, %811, %792 : vector<2x64xi1>, vector<2x64xf32>
    %815 = tpu.concatenate %803, %814 in 1 : vector<2x64xf32>, vector<2x64xf32> -> vector<2x128xf32>
    %816 = arith.truncf %803 : vector<2x64xf32> to vector<2x64xbf16>
    %c22_203 = arith.constant 22 : index
    %c0_204 = arith.constant 0 : index
    %817 = vector.load %arg11[%c22_203, %c0_204] : memref<26x64xbf16, #tpu.memory_space<vmem>>, vector<2x64xbf16>
    tpu.vector_store %arg11[%c22_203, %c0_204], %816 {strides = array<i32>} : memref<26x64xbf16, #tpu.memory_space<vmem>>, vector<2x64xbf16>,
    %818 = arith.truncf %814 : vector<2x64xf32> to vector<2x64xbf16>
    %c2_205 = arith.constant 2 : index
    %c0_206 = arith.constant 0 : index
    %819 = vector.load %arg12[%c2_205, %c0_206] : memref<26x64xbf16, #tpu.memory_space<vmem>>, vector<2x64xbf16>
    tpu.vector_store %arg12[%c2_205, %c0_206], %818 {strides = array<i32>} : memref<26x64xbf16, #tpu.memory_space<vmem>>, vector<2x64xbf16>,
    %820 = arith.truncf %815 : vector<2x128xf32> to vector<2x128xbf16>
    %c0_207 = arith.constant 0 : index
    %c0_208 = arith.constant 0 : index
    %821 = vector.load %arg8[%c0_207, %c0_208] : memref<128x384xbf16, #tpu.memory_space<vmem>>, vector<128x384xbf16>
    %cst_209 = arith.constant dense<0.000000e+00> : vector<2x384xf32>
    %822 = tpu.matmul %820, %821, %cst_209 {dimension_numbers = #tpu.dot_dimension_numbers<[1], [0], [0], [1], [0, 0, 1, 1], [], []>} : vector<2x128xbf16>, vector<128x384xbf16>, vector<2x384xf32> -> vector<2x384xf32>
    %c24_210 = arith.constant 24 : index
    %c0_211 = arith.constant 0 : index
    %823 = vector.load %arg14[%c24_210, %c0_211] : memref<26x192xf32, #tpu.memory_space<vmem>>, vector<2x192xf32>
    %c0_212 = arith.constant 0 : index
    %c0_213 = arith.constant 0 : index
    %824 = vector.load %arg15[%c0_212, %c0_213] : memref<26x192xf32, #tpu.memory_space<vmem>>, vector<2x192xf32>
    %825 = vector.extract_strided_slice %823 {offsets = [0, 0], sizes = [2, 128], strides = [1, 1]} : vector<2x192xf32> to vector<2x128xf32>
    %826 = vector.extract_strided_slice %822 {offsets = [0, 0], sizes = [2, 128], strides = [1, 1]} : vector<2x384xf32> to vector<2x128xf32>
    %827 = arith.addf %825, %826 : vector<2x128xf32>
    %828 = arith.negf %827 : vector<2x128xf32>
    %829 = math.exp %828 : vector<2x128xf32>
    %cst_214 = arith.constant 1.000000e+00 : f32
    %830 = vector.broadcast %cst_214 : f32 to vector<2x128xf32>
    %831 = arith.addf %830, %829 : vector<2x128xf32>
    %832 = arith.divf %830, %831 : vector<2x128xf32>
    %833 = vector.extract_strided_slice %824 {offsets = [0, 0], sizes = [2, 128], strides = [1, 1]} : vector<2x192xf32> to vector<2x128xf32>
    %834 = vector.extract_strided_slice %822 {offsets = [0, 128], sizes = [2, 128], strides = [1, 1]} : vector<2x384xf32> to vector<2x128xf32>
    %835 = arith.addf %833, %834 : vector<2x128xf32>
    %836 = arith.negf %835 : vector<2x128xf32>
    %837 = math.exp %836 : vector<2x128xf32>
    %cst_215 = arith.constant 1.000000e+00 : f32
    %838 = vector.broadcast %cst_215 : f32 to vector<2x128xf32>
    %839 = arith.addf %838, %837 : vector<2x128xf32>
    %840 = arith.divf %838, %839 : vector<2x128xf32>
    %841 = vector.extract_strided_slice %823 {offsets = [0, 128], sizes = [2, 64], strides = [1, 1]} : vector<2x192xf32> to vector<2x64xf32>
    %842 = vector.extract_strided_slice %832 {offsets = [0, 0], sizes = [2, 64], strides = [1, 1]} : vector<2x128xf32> to vector<2x64xf32>
    %843 = vector.extract_strided_slice %822 {offsets = [0, 256], sizes = [2, 64], strides = [1, 1]} : vector<2x384xf32> to vector<2x64xf32>
    %844 = arith.addf %843, %20 : vector<2x64xf32>
    %845 = arith.mulf %842, %844 : vector<2x64xf32>
    %846 = arith.addf %841, %845 : vector<2x64xf32>
    %847 = math.tanh %846 : vector<2x64xf32>
    %848 = vector.extract_strided_slice %824 {offsets = [0, 128], sizes = [2, 64], strides = [1, 1]} : vector<2x192xf32> to vector<2x64xf32>
    %849 = vector.extract_strided_slice %840 {offsets = [0, 0], sizes = [2, 64], strides = [1, 1]} : vector<2x128xf32> to vector<2x64xf32>
    %850 = vector.extract_strided_slice %822 {offsets = [0, 320], sizes = [2, 64], strides = [1, 1]} : vector<2x384xf32> to vector<2x64xf32>
    %851 = arith.addf %850, %23 : vector<2x64xf32>
    %852 = arith.mulf %849, %851 : vector<2x64xf32>
    %853 = arith.addf %848, %852 : vector<2x64xf32>
    %854 = math.tanh %853 : vector<2x64xf32>
    %855 = vector.extract_strided_slice %832 {offsets = [0, 64], sizes = [2, 64], strides = [1, 1]} : vector<2x128xf32> to vector<2x64xf32>
    %856 = vector.extract_strided_slice %840 {offsets = [0, 64], sizes = [2, 64], strides = [1, 1]} : vector<2x128xf32> to vector<2x64xf32>
    %857 = vector.extract_strided_slice %815 {offsets = [0, 0], sizes = [2, 64], strides = [1, 1]} : vector<2x128xf32> to vector<2x64xf32>
    %858 = vector.extract_strided_slice %815 {offsets = [0, 64], sizes = [2, 64], strides = [1, 1]} : vector<2x128xf32> to vector<2x64xf32>
    %c12_i32_216 = arith.constant 12 : i32
    %859 = arith.addi %25, %c12_i32_216 : i32
    %860 = vector.broadcast %859 : i32 to vector<2x1xi32>
    %861 = arith.cmpi slt, %860, %17 : vector<2x1xi32>
    %cst_217 = arith.constant 1.000000e+00 : f32
    %862 = vector.broadcast %cst_217 : f32 to vector<2x64xf32>
    %863 = arith.subf %862, %855 : vector<2x64xf32>
    %864 = arith.mulf %863, %847 : vector<2x64xf32>
    %865 = arith.mulf %855, %857 : vector<2x64xf32>
    %866 = arith.addf %864, %865 : vector<2x64xf32>
    %867 = vector.shape_cast %861 : vector<2x1xi1> to vector<2x1xi1>
    %868 = vector.broadcast %867 : vector<2x1xi1> to vector<2x64xi1>
    %869 = arith.select %868, %866, %857 : vector<2x64xi1>, vector<2x64xf32>
    %c0_i32_218 = arith.constant 0 : i32
    %870 = arith.addi %27, %c0_i32_218 : i32
    %871 = vector.broadcast %870 : i32 to vector<2x1xi32>
    %872 = arith.cmpi slt, %871, %17 : vector<2x1xi32>
    %cst_219 = arith.constant 1.000000e+00 : f32
    %873 = vector.broadcast %cst_219 : f32 to vector<2x64xf32>
    %874 = arith.subf %873, %856 : vector<2x64xf32>
    %875 = arith.mulf %874, %854 : vector<2x64xf32>
    %876 = arith.mulf %856, %858 : vector<2x64xf32>
    %877 = arith.addf %875, %876 : vector<2x64xf32>
    %878 = vector.shape_cast %872 : vector<2x1xi1> to vector<2x1xi1>
    %879 = vector.broadcast %878 : vector<2x1xi1> to vector<2x64xi1>
    %880 = arith.select %879, %877, %858 : vector<2x64xi1>, vector<2x64xf32>
    %881 = tpu.concatenate %869, %880 in 1 : vector<2x64xf32>, vector<2x64xf32> -> vector<2x128xf32>
    %882 = arith.truncf %869 : vector<2x64xf32> to vector<2x64xbf16>
    %c24_220 = arith.constant 24 : index
    %c0_221 = arith.constant 0 : index
    %883 = vector.load %arg11[%c24_220, %c0_221] : memref<26x64xbf16, #tpu.memory_space<vmem>>, vector<2x64xbf16>
    tpu.vector_store %arg11[%c24_220, %c0_221], %882 {strides = array<i32>} : memref<26x64xbf16, #tpu.memory_space<vmem>>, vector<2x64xbf16>,
    %884 = arith.truncf %880 : vector<2x64xf32> to vector<2x64xbf16>
    %c0_222 = arith.constant 0 : index
    %c0_223 = arith.constant 0 : index
    %885 = vector.load %arg12[%c0_222, %c0_223] : memref<26x64xbf16, #tpu.memory_space<vmem>>, vector<2x64xbf16>
    tpu.vector_store %arg12[%c0_222, %c0_223], %884 {strides = array<i32>} : memref<26x64xbf16, #tpu.memory_space<vmem>>, vector<2x64xbf16>,
    %c0_224 = arith.constant 0 : index
    %c0_225 = arith.constant 0 : index
    %886 = vector.load %arg16[%c0_224, %c0_225] : memref<2x128xf32, #tpu.memory_space<vmem>>, vector<2x128xf32>
    tpu.vector_store %arg16[%c0_224, %c0_225], %881 {strides = array<i32>} : memref<2x128xf32, #tpu.memory_space<vmem>>, vector<2x128xf32>,
    %c0_i32_226 = arith.constant 0 : i32
    %887 = arith.cmpi eq, %arg0, %c0_i32_226 : i32
    %888 = arith.extui %887 : i1 to i32
    %c0_i32_227 = arith.constant 0 : i32
    %889 = arith.cmpi ne, %888, %c0_i32_227 : i32
    scf.if %889 {
      %c0_228 = arith.constant 0 : index
      %c0_229 = arith.constant 0 : index
      %890 = vector.load %arg13[%c0_228, %c0_229] : memref<2x128xf32, #tpu.memory_space<vmem>>, vector<2x128xf32>
      tpu.vector_store %arg13[%c0_228, %c0_229], %881 {strides = array<i32>} : memref<2x128xf32, #tpu.memory_space<vmem>>, vector<2x128xf32>,
    } else {
    }
    return
  }
  func.func @transform_0(%arg0: i32) -> (i32, i32) {
    %c0_i32 = arith.constant 0 : i32
    %c0_i32_0 = arith.constant 0 : i32
    %c0_i32_1 = arith.constant 0 : i32
    return %c0_i32, %c0_i32_0 : i32, i32
  }
  func.func @transform_1(%arg0: i32) -> (i32, i32) {
    %c0_i32 = arith.constant 0 : i32
    %c0_i32_0 = arith.constant 0 : i32
    return %arg0, %c0_i32 : i32, i32
  }
  func.func @transform_2(%arg0: i32) -> (i32, i32) {
    %c0_i32 = arith.constant 0 : i32
    %0 = arith.subi %c0_i32, %arg0 : i32
    %c0_i32_0 = arith.constant 0 : i32
    %c0_i32_1 = arith.constant 0 : i32
    return %0, %c0_i32_0 : i32, i32
  }
  func.func @transform_3(%arg0: i32) -> (i32, i32) {
    %c0_i32 = arith.constant 0 : i32
    %c0_i32_0 = arith.constant 0 : i32
    %c0_i32_1 = arith.constant 0 : i32
    return %c0_i32, %c0_i32_0 : i32, i32
  }
  func.func @transform_4(%arg0: i32) -> (i32, i32) {
    %c0_i32 = arith.constant 0 : i32
    %c0_i32_0 = arith.constant 0 : i32
    %c0_i32_1 = arith.constant 0 : i32
    return %c0_i32, %c0_i32_0 : i32, i32
  }
  func.func @transform_5(%arg0: i32) -> (i32, i32) {
    %c0_i32 = arith.constant 0 : i32
    %c0_i32_0 = arith.constant 0 : i32
    %c0_i32_1 = arith.constant 0 : i32
    return %c0_i32, %c0_i32_0 : i32, i32
  }
  func.func @transform_6(%arg0: i32) -> (i32, i32) {
    %c0_i32 = arith.constant 0 : i32
    %c0_i32_0 = arith.constant 0 : i32
    %c0_i32_1 = arith.constant 0 : i32
    return %c0_i32, %c0_i32_0 : i32, i32
  }
  func.func @transform_7(%arg0: i32) -> (i32, i32) {
    %c0_i32 = arith.constant 0 : i32
    %c0_i32_0 = arith.constant 0 : i32
    %c0_i32_1 = arith.constant 0 : i32
    return %c0_i32, %c0_i32_0 : i32, i32
  }
  func.func @transform_8(%arg0: i32) -> (i32, i32) {
    %c0_i32 = arith.constant 0 : i32
    %c0_i32_0 = arith.constant 0 : i32
    %c0_i32_1 = arith.constant 0 : i32
    return %c0_i32, %c0_i32_0 : i32, i32
  }
  func.func @transform_9(%arg0: i32) -> (i32, i32) {
    %c0_i32 = arith.constant 0 : i32
    %c0_i32_0 = arith.constant 0 : i32
    %c0_i32_1 = arith.constant 0 : i32
    return %c0_i32, %c0_i32_0 : i32, i32
  }
  func.func @transform_10(%arg0: i32) -> (i32, i32) {
    %c0_i32 = arith.constant 0 : i32
    %c0_i32_0 = arith.constant 0 : i32
    return %arg0, %c0_i32 : i32, i32
  }
  func.func @transform_11(%arg0: i32) -> (i32, i32) {
    %c0_i32 = arith.constant 0 : i32
    %0 = arith.subi %c0_i32, %arg0 : i32
    %c0_i32_0 = arith.constant 0 : i32
    %c0_i32_1 = arith.constant 0 : i32
    return %0, %c0_i32_0 : i32, i32
  }
  func.func @transform_12(%arg0: i32) -> (i32, i32) {
    %c0_i32 = arith.constant 0 : i32
    %c0_i32_0 = arith.constant 0 : i32
    %c0_i32_1 = arith.constant 0 : i32
    return %c0_i32, %c0_i32_0 : i32, i32
  }
}

</mosaic_0001>

<llo_original>
// kernel: tpu_custom_call.1
$region0: #{tpu_custom_call.1}
  #allocation0 [shape = 'u32[]', space=smem, size = 0x4, offset = 0x4, fixed_abs, tag = 'smem constant byte address 0x4 - core index']
  #allocation1 [shape = 'u32[144,128]{1,0:T(1,128)}', space=vmem, size = 0x12000, scoped, tag = 'internal scratch']
  #allocation2 [shape = 'f32[26,192]{1,0:T(8,128)}', space=vmem, size = 0x8000, scoped, tag = 'scratch operand']
  #allocation3 [shape = 'f32[26,192]{1,0:T(8,128)}', space=vmem, size = 0x8000, scoped, tag = 'scratch operand']
  #allocation4 [shape = 'f32[2,128]{1,0:T(2,128)}', space=vmem, size = 0x400, scoped, tag = 'scratch operand']
  %s0 = inlined_call_operand.vmem [shape: s32[2,1], index: 0, kind: input, shape index: {}]
  %s1 = inlined_call_operand.hbm [shape: bf16[26,32], index: 1, kind: input, shape index: {}]
  %s2 = inlined_call_operand.hbm [shape: bf16[26,32], index: 2, kind: input, shape index: {}]
  %s3 = inlined_call_operand.hbm [shape: bf16[32,192], index: 3, kind: input, shape index: {}]
  %s4 = inlined_call_operand.hbm [shape: bf16[32,192], index: 4, kind: input, shape index: {}]
  %s5 = inlined_call_operand.vmem [shape: f32[1,192], index: 5, kind: input, shape index: {}]
  %s6 = inlined_call_operand.vmem [shape: f32[1,192], index: 6, kind: input, shape index: {}]
  %s7 = inlined_call_operand.hbm [shape: bf16[128,384], index: 7, kind: input, shape index: {}]
  %s8 = inlined_call_operand.vmem [shape: f32[1,64], index: 8, kind: input, shape index: {}]
  %s9 = inlined_call_operand.vmem [shape: f32[1,64], index: 9, kind: input, shape index: {}]
  %s10 = inlined_call_operand.hbm [shape: bf16[26,64], index: 10, kind: output, shape index: {0}]
  %s11 = inlined_call_operand.hbm [shape: bf16[26,64], index: 11, kind: output, shape index: {1}]
  %s12 = inlined_call_operand.hbm [shape: f32[2,128], index: 12, kind: output, shape index: {2}]
  %13 = xla_tuple %s10, %s11, %s12
  %s14 = sld [smem:[#allocation0]]
  $region94: #{tpu_custom_call.1} parent=0
    _
  %s16 = ssub.s32 1, %s14
  %s17 = scalar_select 0, %s16, %s14
  $region1: #{tpu_custom_call.1} parent=0
    #allocation5 [shape = 'u8[8192]{0}', space=vmem, size = 0x2000, scoped, tag = 'input window, operand 1, single buffered']
    #allocation6 [shape = 's32[1]{0}', space=sflag, size = 0x4, scoped, tag = 'scoped memory for tpu_custom_call.1']
    #allocation7 [shape = 's32[1]{0}', space=sflag, size = 0x4, scoped, tag = 'scoped memory for tpu_custom_call.1']
    #allocation8 [shape = 'u8[8192]{0}', space=vmem, size = 0x2000, scoped, tag = 'input window, operand 2, single buffered']
    #allocation9 [shape = 's32[1]{0}', space=sflag, size = 0x4, scoped, tag = 'scoped memory for tpu_custom_call.1']
    #allocation10 [shape = 'u8[16384]{0}', space=vmem, size = 0x4000, scoped, tag = 'input window, operand 3, single buffered']
    #allocation11 [shape = 'u8[16384]{0}', space=vmem, size = 0x4000, scoped, tag = 'input window, operand 4, single buffered']
    #allocation12 [shape = 's32[1]{0}', space=sflag, size = 0x4, scoped, tag = 'scoped memory for tpu_custom_call.1']
    #allocation13 [shape = 'u8[98304]{0}', space=vmem, size = 0x18000, scoped, tag = 'input window, operand 7, single buffered']
    #allocation14 [shape = 'u8[8192]{0}', space=vmem, size = 0x2000, scoped, tag = 'output window, operand 0, single buffered']
    #allocation15 [shape = 'u8[8192]{0}', space=vmem, size = 0x2000, scoped, tag = 'output window, operand 1, single buffered']
    #allocation16 [shape = 's32[1]{0}', space=sflag, size = 0x4, scoped, tag = 'scoped memory for tpu_custom_call.1']
    #allocation17 [shape = 'u8[1024]{0}', space=vmem, size = 0x400, scoped, tag = 'output window, operand 2, single buffered']
    %18 = vsyncpa [#allocation6], 0
    %19 = vsyncpa [#allocation9], 0
    %20 = vsyncpa [#allocation12], 0
    %21 = vsyncpa [#allocation7], 0
    %22 = vsyncpa [#allocation16], 0
    // Predicated region
    $region2: #{tpu_custom_call.1} parent=1 // pred_check
      _
    $region3: #{tpu_custom_call.1} parent=1 // pred_check_branch
      %24 = sbr.rel (0) target = $region5
    $region4: #{tpu_custom_call.1} parent=1 // pred_region
      _
    $region5: #{tpu_custom_call.1} parent=1 // pred_fallthru
      _
    // Predicated region
    $region6: #{tpu_custom_call.1} parent=1 // pred_check
      _
    $region7: #{tpu_custom_call.1} parent=1 // pred_check_branch
      %26 = sbr.rel (0) target = $region9
    $region8: #{tpu_custom_call.1} parent=1 // pred_region
      %s28 = ssub.s32 256, 256
      %29 = vsyncadd [#allocation6], %s28
      %s30 = sshll.u32 [#allocation5], 4
      %s31 = int_to_ptr.vmem [resolvable:$true] %s30
      %36 = dma.hbm_to_vmem [thread:$0]  %s1, 256, %s31, [#allocation6], 64, 64, 4
    $region9: #{tpu_custom_call.1} parent=1 // pred_fallthru
      _
    // Predicated region
    $region10: #{tpu_custom_call.1} parent=1 // pred_check
      _
    $region11: #{tpu_custom_call.1} parent=1 // pred_check_branch
      %38 = sbr.rel (0) target = $region13
    $region12: #{tpu_custom_call.1} parent=1 // pred_region
      %s39 = ssub.s32 0, 0
      %s40 = smul.u32 4, %s39
      %s42 = ssub.s32 256, 256
      %43 = vsyncadd [#allocation9], %s42
      %s44 = smul.addr %s40, 64
      %s45 = scalar_lea.hbm %s2, %s44
      %s46 = sshll.u32 [#allocation8], 4
      %s47 = int_to_ptr.vmem [resolvable:$true] %s46
      %52 = dma.hbm_to_vmem [thread:$0]  %s45, 256, %s47, [#allocation9], 64, 64, 4
    $region13: #{tpu_custom_call.1} parent=1 // pred_fallthru
      _
    // Predicated region
    $region14: #{tpu_custom_call.1} parent=1 // pred_check
      _
    $region15: #{tpu_custom_call.1} parent=1 // pred_check_branch
      %54 = sbr.rel (0) target = $region17
    $region16: #{tpu_custom_call.1} parent=1 // pred_region
      %s56 = ssub.s32 512, 512
      %57 = vsyncadd [#allocation9], %s56
      %s58 = sshll.u32 [#allocation10], 4
      %s59 = int_to_ptr.vmem [resolvable:$true] %s58
      %64 = dma.hbm_to_vmem [thread:$0]  %s3, 512, %s59, [#allocation9], 128, 128, 8
    $region17: #{tpu_custom_call.1} parent=1 // pred_fallthru
      _
    // Predicated region
    $region18: #{tpu_custom_call.1} parent=1 // pred_check
      _
    $region19: #{tpu_custom_call.1} parent=1 // pred_check_branch
      %66 = sbr.rel (0) target = $region21
    $region20: #{tpu_custom_call.1} parent=1 // pred_region
      %s68 = ssub.s32 512, 512
      %69 = vsyncadd [#allocation12], %s68
      %s70 = sshll.u32 [#allocation11], 4
      %s71 = int_to_ptr.vmem [resolvable:$true] %s70
      %76 = dma.hbm_to_vmem [thread:$0]  %s4, 512, %s71, [#allocation12], 128, 128, 8
    $region21: #{tpu_custom_call.1} parent=1 // pred_fallthru
      _
    // Predicated region
    $region22: #{tpu_custom_call.1} parent=1 // pred_check
      _
    $region23: #{tpu_custom_call.1} parent=1 // pred_check_branch
      %78 = sbr.rel (0) target = $region25
    $region24: #{tpu_custom_call.1} parent=1 // pred_region
      _
    $region25: #{tpu_custom_call.1} parent=1 // pred_fallthru
      _
    // Predicated region
    $region26: #{tpu_custom_call.1} parent=1 // pred_check
      _
    $region27: #{tpu_custom_call.1} parent=1 // pred_check_branch
      %80 = sbr.rel (0) target = $region29
    $region28: #{tpu_custom_call.1} parent=1 // pred_region
      _
    $region29: #{tpu_custom_call.1} parent=1 // pred_fallthru
      _
    // Predicated region
    $region30: #{tpu_custom_call.1} parent=1 // pred_check
      _
    $region31: #{tpu_custom_call.1} parent=1 // pred_check_branch
      %82 = sbr.rel (0) target = $region33
    $region32: #{tpu_custom_call.1} parent=1 // pred_region
      %s84 = ssub.s32 3072, 3072
      %85 = vsyncadd [#allocation12], %s84
      %s86 = sshll.u32 [#allocation13], 4
      %s87 = int_to_ptr.vmem [resolvable:$true] %s86
      %92 = dma.hbm_to_vmem [thread:$0]  %s7, 3072, %s87, [#allocation12], 192, 192, 12
    $region33: #{tpu_custom_call.1} parent=1 // pred_fallthru
      _
    // Predicated region
    $region34: #{tpu_custom_call.1} parent=1 // pred_check
      _
    $region35: #{tpu_custom_call.1} parent=1 // pred_check_branch
      %94 = sbr.rel (0) target = $region37
    $region36: #{tpu_custom_call.1} parent=1 // pred_region
      _
    $region37: #{tpu_custom_call.1} parent=1 // pred_fallthru
      _
    // Predicated region
    $region38: #{tpu_custom_call.1} parent=1 // pred_check
      _
    $region39: #{tpu_custom_call.1} parent=1 // pred_check_branch
      %96 = sbr.rel (0) target = $region41
    $region40: #{tpu_custom_call.1} parent=1 // pred_region
      _
    $region41: #{tpu_custom_call.1} parent=1 // pred_fallthru
      _
    // Predicated region
    $region42: #{tpu_custom_call.1} parent=1 // pred_check
      _
    $region43: #{tpu_custom_call.1} parent=1 // pred_check_branch
      %98 = sbr.rel (0) target = $region45
    $region44: #{tpu_custom_call.1} parent=1 // pred_region
      %99 = dma.done [#allocation6], 256
    $region45: #{tpu_custom_call.1} parent=1 // pred_fallthru
      _
    // Predicated region
    $region46: #{tpu_custom_call.1} parent=1 // pred_check
      _
    $region47: #{tpu_custom_call.1} parent=1 // pred_check_branch
      %101 = sbr.rel (0) target = $region49
    $region48: #{tpu_custom_call.1} parent=1 // pred_region
      %102 = dma.done [#allocation9], 256
    $region49: #{tpu_custom_call.1} parent=1 // pred_fallthru
      _
    // Predicated region
    $region50: #{tpu_custom_call.1} parent=1 // pred_check
      _
    $region51: #{tpu_custom_call.1} parent=1 // pred_check_branch
      %104 = sbr.rel (0) target = $region53
    $region52: #{tpu_custom_call.1} parent=1 // pred_region
      %105 = dma.done [#allocation9], 512
    $region53: #{tpu_custom_call.1} parent=1 // pred_fallthru
      _
    // Predicated region
    $region54: #{tpu_custom_call.1} parent=1 // pred_check
      _
    $region55: #{tpu_custom_call.1} parent=1 // pred_check_branch
      %107 = sbr.rel (0) target = $region57
    $region56: #{tpu_custom_call.1} parent=1 // pred_region
      %108 = dma.done [#allocation12], 512
    $region57: #{tpu_custom_call.1} parent=1 // pred_fallthru
      _
    // Predicated region
    $region58: #{tpu_custom_call.1} parent=1 // pred_check
      _
    $region59: #{tpu_custom_call.1} parent=1 // pred_check_branch
      %110 = sbr.rel (0) target = $region61
    $region60: #{tpu_custom_call.1} parent=1 // pred_region
      %111 = dma.done [#allocation12], 3072
    $region61: #{tpu_custom_call.1} parent=1 // pred_fallthru
      _
    %s112 = ssub.s32 0, 0
    %s113 = smul.u32 4, %s112
    %s114 = ssub.s32 0, 0
    %s115 = smul.u32 4, %s114
    %p117 = scmp.eq.s32.totalorder 0, 0
    // Predicated region
    $region62: #{tpu_custom_call.1} parent=1 // pred_check
      %p118 = pneg %p117
    $region63: #{tpu_custom_call.1} parent=1 // pred_check_branch
      %120 = sbr.rel (%p118) target = $region65
    $region64: #{tpu_custom_call.1} parent=1 // pred_region
      %121 = vst [vmem:[#allocation4] sm:$0x3] 0.0
    $region65: #{tpu_custom_call.1} parent=1 // pred_fallthru
      _
    %v122 = vld [vmem:[#allocation5] sm:$0xf]
    %v123 = vld [vmem:[#allocation5 + $0x4] sm:$0xf]
    %v124 = vld [vmem:[#allocation5 + $0x8] sm:$0xf]
    %v125 = vld [vmem:[#allocation5 + $0xc] sm:$0x1]
    %v126 = vld [vmem:[#allocation10] sm:$0xff]
    %v127 = vld [vmem:[#allocation10 + $0x8] sm:$0xff]
    %v128 = vld [vmem:[#allocation10 + $0x10] sm:$0xff]
    %v129 = vld [vmem:[#allocation10 + $0x18] sm:$0xff]
    %v130 = vld [vmem:[%s5] sm:$0x3]
    %v132 = vlaneseq
    %v133 = vshrl.u32 %v132, 7
    %v134 = vsub.s32 0, %v133
    %v135 = vrot.slane %v130, %v134
    %v136 = vlaneseq
    %v137 = vshrl.u32 %v136, 7
    %v138 = vsub.s32 1, %v137
    %v139 = vrot.slane %v130, %v138
    %v146 = vunpack.c.l.b16 %v122
    %v147 = vunpack.c.l.b16 %v123
    %v148 = vunpack.c.l.b16 %v124
    %v149 = vunpack.c.l.b16 %v125
    %v150 = vpack.c.b16 %v147, %v146
    %v151 = vpack.c.b16 %v149, %v148
    %v156 = vunpack.c.l.b16 %v126
    %v157 = vunpack.c.h.b16 %v126
    %v158 = vunpack.c.l.b16 %v127
    %v159 = vunpack.c.h.b16 %v127
    %v160 = vunpack.c.l.b16 %v128
    %v161 = vunpack.c.h.b16 %v128
    %v162 = vunpack.c.l.b16 %v129
    %v163 = vunpack.c.h.b16 %v129
    %v164 = vpack.c.b16 %v158, %v156
    %v165 = vpack.c.b16 %v159, %v157
    %v166 = vpack.c.b16 %v162, %v160
    %v167 = vpack.c.b16 %v163, %v161
    %vm172 = vcmask 261120
    %v174 = vsel %vm172, %v150, 0
    %v177 = vsel %vm172, %v151, 0
    %179 = vmatprep.subr.bf16.mxu0 %v165
    %180 = vmatpush1.bf16.msra.mxu0 %v164
    %181 = vmatprep.subr.bf16.mxu0 %v167
    %182 = vmatpush1.bf16.msra.mxu0 %v166
    %183 = vmatprep.subr.bf16.mxu0 0
    %184 = vmatpush1.bf16.msra.mxu0 0
    %185 = vmatprep.subr.bf16.mxu0 0
    %186 = vmatpush1.bf16.msra.mxu0 0
    %187 = vmatprep.subr.bf16.mxu0 0
    %188 = vmatpush1.bf16.msra.mxu0 0
    %189 = vmatprep.subr.bf16.mxu0 0
    %190 = vmatpush1.bf16.msra.mxu0 0
    %191 = vmatprep.subr.bf16.mxu0 0
    %192 = vmatpush1.bf16.msra.mxu0 0
    %193 = vmatprep.subr.bf16.mxu0 0
    %194 = vmatpush1.bf16.msra.mxu0 0
    %195 = vmatprep.subr.bf16.mxu0 0
    %196 = vmatpush1.bf16.msra.mxu0 0
    %197 = vmatprep.subr.bf16.mxu0 0
    %198 = vmatpush1.bf16.msra.mxu0 0
    %199 = vmatprep.subr.bf16.mxu0 0
    %200 = vmatpush1.bf16.msra.mxu0 0
    %201 = vmatprep.subr.bf16.mxu0 0
    %202 = vmatpush1.bf16.msra.mxu0 0
    %203 = vmatprep.subr.bf16.mxu0 0
    %204 = vmatpush1.bf16.msra.mxu0 0
    %205 = vmatprep.subr.bf16.mxu0 0
    %206 = vmatpush1.bf16.msra.mxu0 0
    %207 = vmatprep.subr.bf16.mxu0 0
    %208 = vmatpush1.bf16.msra.mxu0 0
    %209 = vmatprep.subr.bf16.mxu0 0
    %210 = vmatpush1.bf16.msra.mxu0 0
    %211 = vmatprep.mubr.bf16.mxu0 0
    %212 = vmatmul.mubr.bf16.gmra.mrb[0].mxu0 %v174
    %v213 = vpop.f32.mrb[0].mxu0
    %v214 = vadd.f32 %v135, %v213
    %v215 = vpop.f32.mrb[0].mxu0
    %v216 = vadd.f32 %v139, %v215
    %v217 = vpop.f32.mrb[0].mxu0
    %v218 = vadd.f32 %v135, %v217
    %v219 = vpop.f32.mrb[0].mxu0
    %v220 = vadd.f32 %v139, %v219
    %221 = vmatprep.mubr.bf16.mxu0 0
    %222 = vmatmul.mubr.bf16.gmra.mrb[0].mxu0 %v177
    %v223 = vpop.f32.mrb[0].mxu0
    %v224 = vadd.f32 %v135, %v223
    %v225 = vpop.f32.mrb[0].mxu0
    %v226 = vadd.f32 %v139, %v225
    %v227 = vpop.f32.mrb[0].mxu0
    %v228 = vadd.f32 %v135, %v227
    %v229 = vpop.f32.mrb[0].mxu0
    %v230 = vadd.f32 %v139, %v229
    %231 = vdwg.mxu0
    %232 = vst [vmem:[#allocation2] sm:$0xff] %v214
    %vm233 = vcmask 523264
    %234 = vst.msk [vmem:[#allocation2 + $0x8] sm:$0xff] %vm233, %v216
    %235 = vst [vmem:[#allocation2 + $0x10] sm:$0xff] %v218
    %236 = vst.msk [vmem:[#allocation2 + $0x18] sm:$0xff] %vm233, %v220
    %237 = vst [vmem:[#allocation2 + $0x20] sm:$0xff] %v224
    %238 = vst.msk [vmem:[#allocation2 + $0x28] sm:$0xff] %vm233, %v226
    %239 = vst [vmem:[#allocation2 + $0x30] sm:$0x3] %v228
    %vm240 = vcmask 517120
    %241 = vst.msk [vmem:[#allocation2 + $0x38] sm:$0x3] %vm240, %v230
    %v242 = vld [vmem:[#allocation8] sm:$0xf]
    %v243 = vld [vmem:[#allocation8 + $0x4] sm:$0xf]
    %v244 = vld [vmem:[#allocation8 + $0x8] sm:$0xf]
    %v245 = vld [vmem:[#allocation8 + $0xc] sm:$0x1]
    %v246 = vld [vmem:[#allocation11] sm:$0xff]
    %v247 = vld [vmem:[#allocation11 + $0x8] sm:$0xff]
    %v248 = vld [vmem:[#allocation11 + $0x10] sm:$0xff]
    %v249 = vld [vmem:[#allocation11 + $0x18] sm:$0xff]
    %v250 = vld [vmem:[%s6] sm:$0x3]
    %v252 = vlaneseq
    %v253 = vshrl.u32 %v252, 7
    %v254 = vsub.s32 0, %v253
    %v255 = vrot.slane %v250, %v254
    %v256 = vlaneseq
    %v257 = vshrl.u32 %v256, 7
    %v258 = vsub.s32 1, %v257
    %v259 = vrot.slane %v250, %v258
    %v266 = vunpack.c.l.b16 %v242
    %v267 = vunpack.c.l.b16 %v243
    %v268 = vunpack.c.l.b16 %v244
    %v269 = vunpack.c.l.b16 %v245
    %v270 = vpack.c.b16 %v267, %v266
    %v271 = vpack.c.b16 %v269, %v268
    %v276 = vunpack.c.l.b16 %v246
    %v277 = vunpack.c.h.b16 %v246
    %v278 = vunpack.c.l.b16 %v247
    %v279 = vunpack.c.h.b16 %v247
    %v280 = vunpack.c.l.b16 %v248
    %v281 = vunpack.c.h.b16 %v248
    %v282 = vunpack.c.l.b16 %v249
    %v283 = vunpack.c.h.b16 %v249
    %v284 = vpack.c.b16 %v278, %v276
    %v285 = vpack.c.b16 %v279, %v277
    %v286 = vpack.c.b16 %v282, %v280
    %v287 = vpack.c.b16 %v283, %v281
    %v293 = vsel %vm172, %v270, 0
    %v296 = vsel %vm172, %v271, 0
    %298 = vmatprep.subr.bf16.mxu0 %v285
    %299 = vmatpush1.bf16.msra.mxu0 %v284
    %300 = vmatprep.subr.bf16.mxu0 %v287
    %301 = vmatpush1.bf16.msra.mxu0 %v286
    %302 = vmatprep.subr.bf16.mxu0 0
    %303 = vmatpush1.bf16.msra.mxu0 0
    %304 = vmatprep.subr.bf16.mxu0 0
    %305 = vmatpush1.bf16.msra.mxu0 0
    %306 = vmatprep.subr.bf16.mxu0 0
    %307 = vmatpush1.bf16.msra.mxu0 0
    %308 = vmatprep.subr.bf16.mxu0 0
    %309 = vmatpush1.bf16.msra.mxu0 0
    %310 = vmatprep.subr.bf16.mxu0 0
    %311 = vmatpush1.bf16.msra.mxu0 0
    %312 = vmatprep.subr.bf16.mxu0 0
    %313 = vmatpush1.bf16.msra.mxu0 0
    %314 = vmatprep.subr.bf16.mxu0 0
    %315 = vmatpush1.bf16.msra.mxu0 0
    %316 = vmatprep.subr.bf16.mxu0 0
    %317 = vmatpush1.bf16.msra.mxu0 0
    %318 = vmatprep.subr.bf16.mxu0 0
    %319 = vmatpush1.bf16.msra.mxu0 0
    %320 = vmatprep.subr.bf16.mxu0 0
    %321 = vmatpush1.bf16.msra.mxu0 0
    %322 = vmatprep.subr.bf16.mxu0 0
    %323 = vmatpush1.bf16.msra.mxu0 0
    %324 = vmatprep.subr.bf16.mxu0 0
    %325 = vmatpush1.bf16.msra.mxu0 0
    %326 = vmatprep.subr.bf16.mxu0 0
    %327 = vmatpush1.bf16.msra.mxu0 0
    %328 = vmatprep.subr.bf16.mxu0 0
    %329 = vmatpush1.bf16.msra.mxu0 0
    %330 = vmatprep.mubr.bf16.mxu0 0
    %331 = vmatmul.mubr.bf16.gmra.mrb[0].mxu0 %v293
    %v332 = vpop.f32.mrb[0].mxu0
    %v333 = vadd.f32 %v255, %v332
    %v334 = vpop.f32.mrb[0].mxu0
    %v335 = vadd.f32 %v259, %v334
    %v336 = vpop.f32.mrb[0].mxu0
    %v337 = vadd.f32 %v255, %v336
    %v338 = vpop.f32.mrb[0].mxu0
    %v339 = vadd.f32 %v259, %v338
    %340 = vmatprep.mubr.bf16.mxu0 0
    %341 = vmatmul.mubr.bf16.gmra.mrb[0].mxu0 %v296
    %v342 = vpop.f32.mrb[0].mxu0
    %v343 = vadd.f32 %v255, %v342
    %v344 = vpop.f32.mrb[0].mxu0
    %v345 = vadd.f32 %v259, %v344
    %v346 = vpop.f32.mrb[0].mxu0
    %v347 = vadd.f32 %v255, %v346
    %v348 = vpop.f32.mrb[0].mxu0
    %v349 = vadd.f32 %v259, %v348
    %350 = vdwg.mxu0
    %351 = vst [vmem:[#allocation3] sm:$0xff] %v333
    %352 = vst.msk [vmem:[#allocation3 + $0x8] sm:$0xff] %vm233, %v335
    %353 = vst [vmem:[#allocation3 + $0x10] sm:$0xff] %v337
    %354 = vst.msk [vmem:[#allocation3 + $0x18] sm:$0xff] %vm233, %v339
    %355 = vst [vmem:[#allocation3 + $0x20] sm:$0xff] %v343
    %356 = vst.msk [vmem:[#allocation3 + $0x28] sm:$0xff] %vm233, %v345
    %357 = vst [vmem:[#allocation3 + $0x30] sm:$0x3] %v347
    %358 = vst.msk [vmem:[#allocation3 + $0x38] sm:$0x3] %vm240, %v349
    %v359 = vld [vmem:[%s0] sm:$0x3]
    %v360 = vld [vmem:[%s8] sm:$0x1]
    %v362 = vlaneseq
    %v363 = vshrl.u32 %v362, 7
    %v364 = vsub.s32 0, %v363
    %v365 = vrot.slane %v360, %v364
    %v367 = vld [vmem:[%s9] sm:$0x1]
    %v369 = vlaneseq
    %v370 = vshrl.u32 %v369, 7
    %v371 = vsub.s32 0, %v370
    %v372 = vrot.slane %v367, %v371
    %v373 = vld [vmem:[#allocation4] sm:$0x3]
    %s374 = smul.u32 0, 13
    %s375 = ssub.s32 0, 0
    %s376 = smul.u32 %s375, 13
    %v377 = vpack.c.bf16 %v373, %v373
    %v378 = vld [vmem:[#allocation13] sm:$0xff]
    %v379 = vld [vmem:[#allocation13 + $0x8] sm:$0xf]
    %v380 = vld [vmem:[#allocation13 + $0xc] sm:$0xff]
    %v381 = vld [vmem:[#allocation13 + $0x14] sm:$0xf]
    %v382 = vld [vmem:[#allocation13 + $0x18] sm:$0xff]
    %v383 = vld [vmem:[#allocation13 + $0x20] sm:$0xf]
    %v384 = vld [vmem:[#allocation13 + $0x24] sm:$0xff]
    %v385 = vld [vmem:[#allocation13 + $0x2c] sm:$0xf]
    %v386 = vld [vmem:[#allocation13 + $0x30] sm:$0xff]
    %v387 = vld [vmem:[#allocation13 + $0x38] sm:$0xf]
    %v388 = vld [vmem:[#allocation13 + $0x3c] sm:$0xff]
    %v389 = vld [vmem:[#allocation13 + $0x44] sm:$0xf]
    %v390 = vld [vmem:[#allocation13 + $0x48] sm:$0xff]
    %v391 = vld [vmem:[#allocation13 + $0x50] sm:$0xf]
    %v392 = vld [vmem:[#allocation13 + $0x54] sm:$0xff]
    %v393 = vld [vmem:[#allocation13 + $0x5c] sm:$0xf]
    %v394 = vld [vmem:[#allocation13 + $0x60] sm:$0xff]
    %v395 = vld [vmem:[#allocation13 + $0x68] sm:$0xf]
    %v396 = vld [vmem:[#allocation13 + $0x6c] sm:$0xff]
    %v397 = vld [vmem:[#allocation13 + $0x74] sm:$0xf]
    %v398 = vld [vmem:[#allocation13 + $0x78] sm:$0xff]
    %v399 = vld [vmem:[#allocation13 + $0x80] sm:$0xf]
    %v400 = vld [vmem:[#allocation13 + $0x84] sm:$0xff]
    %v401 = vld [vmem:[#allocation13 + $0x8c] sm:$0xf]
    %v402 = vld [vmem:[#allocation13 + $0x90] sm:$0xff]
    %v403 = vld [vmem:[#allocation13 + $0x98] sm:$0xf]
    %v404 = vld [vmem:[#allocation13 + $0x9c] sm:$0xff]
    %v405 = vld [vmem:[#allocation13 + $0xa4] sm:$0xf]
    %v406 = vld [vmem:[#allocation13 + $0xa8] sm:$0xff]
    %v407 = vld [vmem:[#allocation13 + $0xb0] sm:$0xf]
    %v408 = vld [vmem:[#allocation13 + $0xb4] sm:$0xff]
    %v409 = vld [vmem:[#allocation13 + $0xbc] sm:$0xf]
    %v442 = vunpack.c.l.b16 %v378
    %v443 = vunpack.c.h.b16 %v378
    %v444 = vunpack.c.l.b16 %v379
    %v445 = vunpack.c.l.b16 %v380
    %v446 = vunpack.c.h.b16 %v380
    %v447 = vunpack.c.l.b16 %v381
    %v448 = vunpack.c.l.b16 %v382
    %v449 = vunpack.c.h.b16 %v382
    %v450 = vunpack.c.l.b16 %v383
    %v451 = vunpack.c.l.b16 %v384
    %v452 = vunpack.c.h.b16 %v384
    %v453 = vunpack.c.l.b16 %v385
    %v454 = vunpack.c.l.b16 %v386
    %v455 = vunpack.c.h.b16 %v386
    %v456 = vunpack.c.l.b16 %v387
    %v457 = vunpack.c.l.b16 %v388
    %v458 = vunpack.c.h.b16 %v388
    %v459 = vunpack.c.l.b16 %v389
    %v460 = vunpack.c.l.b16 %v390
    %v461 = vunpack.c.h.b16 %v390
    %v462 = vunpack.c.l.b16 %v391
    %v463 = vunpack.c.l.b16 %v392
    %v464 = vunpack.c.h.b16 %v392
    %v465 = vunpack.c.l.b16 %v393
    %v466 = vunpack.c.l.b16 %v394
    %v467 = vunpack.c.h.b16 %v394
    %v468 = vunpack.c.l.b16 %v395
    %v469 = vunpack.c.l.b16 %v396
    %v470 = vunpack.c.h.b16 %v396
    %v471 = vunpack.c.l.b16 %v397
    %v472 = vunpack.c.l.b16 %v398
    %v473 = vunpack.c.h.b16 %v398
    %v474 = vunpack.c.l.b16 %v399
    %v475 = vunpack.c.l.b16 %v400
    %v476 = vunpack.c.h.b16 %v400
    %v477 = vunpack.c.l.b16 %v401
    %v478 = vunpack.c.l.b16 %v402
    %v479 = vunpack.c.h.b16 %v402
    %v480 = vunpack.c.l.b16 %v403
    %v481 = vunpack.c.l.b16 %v404
    %v482 = vunpack.c.h.b16 %v404
    %v483 = vunpack.c.l.b16 %v405
    %v484 = vunpack.c.l.b16 %v406
    %v485 = vunpack.c.h.b16 %v406
    %v486 = vunpack.c.l.b16 %v407
    %v487 = vunpack.c.l.b16 %v408
    %v488 = vunpack.c.h.b16 %v408
    %v489 = vunpack.c.l.b16 %v409
    %v490 = vpack.c.b16 %v445, %v442
    %v491 = vpack.c.b16 %v446, %v443
    %v492 = vpack.c.b16 %v447, %v444
    %v493 = vpack.c.b16 %v451, %v448
    %v494 = vpack.c.b16 %v452, %v449
    %v495 = vpack.c.b16 %v453, %v450
    %v496 = vpack.c.b16 %v457, %v454
    %v497 = vpack.c.b16 %v458, %v455
    %v498 = vpack.c.b16 %v459, %v456
    %v499 = vpack.c.b16 %v463, %v460
    %v500 = vpack.c.b16 %v464, %v461
    %v501 = vpack.c.b16 %v465, %v462
    %v502 = vpack.c.b16 %v469, %v466
    %v503 = vpack.c.b16 %v470, %v467
    %v504 = vpack.c.b16 %v471, %v468
    %v505 = vpack.c.b16 %v475, %v472
    %v506 = vpack.c.b16 %v476, %v473
    %v507 = vpack.c.b16 %v477, %v474
    %v508 = vpack.c.b16 %v481, %v478
    %v509 = vpack.c.b16 %v482, %v479
    %v510 = vpack.c.b16 %v483, %v480
    %v511 = vpack.c.b16 %v487, %v484
    %v512 = vpack.c.b16 %v488, %v485
    %v513 = vpack.c.b16 %v489, %v486
    %538 = vmatprep.subr.bf16.mxu0 %v491
    %539 = vmatpush1.bf16.msra.mxu0 %v490
    %540 = vmatprep.subr.bf16.mxu0 %v494
    %541 = vmatpush1.bf16.msra.mxu0 %v493
    %542 = vmatprep.subr.bf16.mxu0 %v497
    %543 = vmatpush1.bf16.msra.mxu0 %v496
    %544 = vmatprep.subr.bf16.mxu0 %v500
    %545 = vmatpush1.bf16.msra.mxu0 %v499
    %546 = vmatprep.subr.bf16.mxu0 %v503
    %547 = vmatpush1.bf16.msra.mxu0 %v502
    %548 = vmatprep.subr.bf16.mxu0 %v506
    %549 = vmatpush1.bf16.msra.mxu0 %v505
    %550 = vmatprep.subr.bf16.mxu0 %v509
    %551 = vmatpush1.bf16.msra.mxu0 %v508
    %552 = vmatprep.subr.bf16.mxu0 %v512
    %553 = vmatpush1.bf16.msra.mxu0 %v511
    %554 = vmatprep.subr.bf16.mxu0 0
    %555 = vmatpush1.bf16.msra.mxu0 0
    %556 = vmatprep.subr.bf16.mxu0 0
    %557 = vmatpush1.bf16.msra.mxu0 0
    %558 = vmatprep.subr.bf16.mxu0 0
    %559 = vmatpush1.bf16.msra.mxu0 0
    %560 = vmatprep.subr.bf16.mxu0 0
    %561 = vmatpush1.bf16.msra.mxu0 0
    %562 = vmatprep.subr.bf16.mxu0 0
    %563 = vmatpush1.bf16.msra.mxu0 0
    %564 = vmatprep.subr.bf16.mxu0 0
    %565 = vmatpush1.bf16.msra.mxu0 0
    %566 = vmatprep.subr.bf16.mxu0 0
    %567 = vmatpush1.bf16.msra.mxu0 0
    %568 = vmatprep.subr.bf16.mxu0 0
    %569 = vmatpush1.bf16.msra.mxu0 0
    %570 = vmatprep.mubr.bf16.mxu0 0
    %571 = vmatmul.mubr.bf16.gmra.mrb[0].mxu0 %v377
    %v572 = vpop.f32.mrb[0].mxu0
    %v573 = vadd.f32 0.0, %v572
    %v574 = vpop.f32.mrb[0].mxu0
    %v575 = vadd.f32 0.0, %v574
    %v576 = vpop.f32.mrb[0].mxu0
    %v577 = vpop.f32.mrb[0].mxu0
    %578 = vdwg.mxu0
    %579 = vmatprep.subr.bf16.mxu0 0
    %580 = vmatpush1.bf16.msra.mxu0 %v492
    %581 = vmatprep.subr.bf16.mxu0 0
    %582 = vmatpush1.bf16.msra.mxu0 %v495
    %583 = vmatprep.subr.bf16.mxu0 0
    %584 = vmatpush1.bf16.msra.mxu0 %v498
    %585 = vmatprep.subr.bf16.mxu0 0
    %586 = vmatpush1.bf16.msra.mxu0 %v501
    %587 = vmatprep.subr.bf16.mxu0 0
    %588 = vmatpush1.bf16.msra.mxu0 %v504
    %589 = vmatprep.subr.bf16.mxu0 0
    %590 = vmatpush1.bf16.msra.mxu0 %v507
    %591 = vmatprep.subr.bf16.mxu0 0
    %592 = vmatpush1.bf16.msra.mxu0 %v510
    %593 = vmatprep.subr.bf16.mxu0 0
    %594 = vmatpush1.bf16.msra.mxu0 %v513
    %595 = vmatprep.subr.bf16.mxu0 0
    %596 = vmatpush1.bf16.msra.mxu0 0
    %597 = vmatprep.subr.bf16.mxu0 0
    %598 = vmatpush1.bf16.msra.mxu0 0
    %599 = vmatprep.subr.bf16.mxu0 0
    %600 = vmatpush1.bf16.msra.mxu0 0
    %601 = vmatprep.subr.bf16.mxu0 0
    %602 = vmatpush1.bf16.msra.mxu0 0
    %603 = vmatprep.subr.bf16.mxu0 0
    %604 = vmatpush1.bf16.msra.mxu0 0
    %605 = vmatprep.subr.bf16.mxu0 0
    %606 = vmatpush1.bf16.msra.mxu0 0
    %607 = vmatprep.subr.bf16.mxu0 0
    %608 = vmatpush1.bf16.msra.mxu0 0
    %609 = vmatprep.subr.bf16.mxu0 0
    %610 = vmatpush1.bf16.msra.mxu0 0
    %611 = vmatprep.mubr.bf16.mxu0 0
    %612 = vmatmul.mubr.bf16.gmra.mrb[0].mxu0 %v377
    %v613 = vpop.f32.mrb[0].mxu0
    %v614 = vadd.f32 0.0, %v613
    %v615 = vpop.f32.mrb[0].mxu0
    %v616 = vpop.f32.mrb[0].mxu0
    %v617 = vpop.f32.mrb[0].mxu0
    %618 = vdwg.mxu0
    %v619 = vld [vmem:[#allocation2] sm:$0x3]
    %v620 = vld [vmem:[#allocation2 + $0x8] sm:$0x3]
    %v621 = vld [vmem:[#allocation3 + $0x30] sm:$0x3]
    %v622 = vld [vmem:[#allocation3 + $0x38] sm:$0x3]
    %v623 = vadd.f32 %v619, %v573
    %v624 = vxor.u32 %v623, 2147483648
    %v625 = vmul.f32 %v624, 1.442695
    %v626 = vpow.pop %v625
    %v627 = vadd.f32 %v626, 1.0
    %v628 = vrcp.pop %v627
    %v629 = vmul.f32 1.0, %v628
    %v630 = vadd.f32 %v621, %v575
    %v631 = vxor.u32 %v630, 2147483648
    %v632 = vmul.f32 %v631, 1.442695
    %v633 = vpow.pop %v632
    %v634 = vadd.f32 %v633, 1.0
    %v635 = vrcp.pop %v634
    %v636 = vmul.f32 1.0, %v635
    %v637 = vadd.f32 %v614, %v365
    %v638 = vmul.f32 %v629, %v637
    %v639 = vadd.f32 %v620, %v638
    %v640 = vtanh.pop %v639
    %641 = vrot.lane.b32.xlu0 %v372, 64
    %v642 = vpop.permute.xlu0 %641
    %v644 = vadd.f32 %v614, %v642
    %646 = vrot.lane.b32.xlu0 %v644, 64
    %v647 = vpop.permute.xlu0 %646
    %v649 = vmul.f32 %v636, %v647
    %v650 = vadd.f32 %v622, %v649
    %v651 = vtanh.pop %v650
    %v652 = vstv %s374
    %vm653 = vcmp.lt.s32.totalorder %v652, %v359
    %v654 = vsub.f32 1.0, %v629
    %656 = vrot.lane.b32.xlu0 %v640, 64
    %v657 = vpop.permute.xlu0 %656
    %v659 = vmul.f32 %v654, %v657
    %661 = vrot.lane.b32.xlu0 %v373, 64
    %v662 = vpop.permute.xlu0 %661
    %v664 = vmul.f32 %v629, %v662
    %v665 = vadd.f32 %v659, %v664
    %v666 = vsel %vm653, 1, 0
    %667 = vset.pattern.permute.xlu0 0
    %668 = vperm.xlu0 %667, %v666
    %v669 = vpop.permute.xlu0 %668
    %vm670 = vcmp.eq.s32.totalorder %v669, 1
    %v671 = vsel %vm670, %v665, %v662
    %s672 = sadd.s32 %s376, 12
    %v673 = vstv %s672
    %vm674 = vcmp.lt.s32.totalorder %v673, %v359
    %v675 = vsub.f32 1.0, %v636
    %677 = vrot.lane.b32.xlu0 %v651, 64
    %v678 = vpop.permute.xlu0 %677
    %v680 = vmul.f32 %v675, %v678
    %v681 = vmul.f32 %v636, %v373
    %v682 = vadd.f32 %v680, %v681
    %v683 = vsel %vm674, 1, 0
    %684 = vset.pattern.permute.xlu0 0
    %685 = vperm.xlu0 %684, %v683
    %v686 = vpop.permute.xlu0 %685
    %vm687 = vcmp.eq.s32.totalorder %v686, 1
    %v688 = vsel %vm687, %v682, %v373
    %690 = vrot.lane.b32.xlu0 %v671, 64
    %v691 = vpop.permute.xlu0 %690
    %v693 = vsel %vm233, %v691, %v688
    %v694 = vpack.c.bf16 %v671, %v671
    %v696 = vunpack.c.l.b16 %v694
    %v697 = vpack.c.b16 %v696, %v696
    %698 = vrot.lane.b32.xlu0 %v697, 64
    %v699 = vpop.permute.xlu0 %698
    %vm701 = vcmask 516096
    %702 = vst.msk [vmem:[#allocation14] sm:$0x1] %vm701, %v699
    %v703 = vpack.c.bf16 %v688, %v688
    %v705 = vunpack.c.l.b16 %v703
    %v706 = vpack.c.b16 %v705, %v705
    %707 = vrot.lane.b32.xlu0 %v706, 64
    %v708 = vpop.permute.xlu0 %707
    %710 = vst.msk [vmem:[#allocation15 + $0xc] sm:$0x1] %vm701, %v708
    %v711 = vpack.c.bf16 %v693, %v693
    %v712 = vld [vmem:[#allocation13] sm:$0xff]
    %v713 = vld [vmem:[#allocation13 + $0x8] sm:$0xf]
    %v714 = vld [vmem:[#allocation13 + $0xc] sm:$0xff]
    %v715 = vld [vmem:[#allocation13 + $0x14] sm:$0xf]
    %v716 = vld [vmem:[#allocation13 + $0x18] sm:$0xff]
    %v717 = vld [vmem:[#allocation13 + $0x20] sm:$0xf]
    %v718 = vld [vmem:[#allocation13 + $0x24] sm:$0xff]
    %v719 = vld [vmem:[#allocation13 + $0x2c] sm:$0xf]
    %v720 = vld [vmem:[#allocation13 + $0x30] sm:$0xff]
    %v721 = vld [vmem:[#allocation13 + $0x38] sm:$0xf]
    %v722 = vld [vmem:[#allocation13 + $0x3c] sm:$0xff]
    %v723 = vld [vmem:[#allocation13 + $0x44] sm:$0xf]
    %v724 = vld [vmem:[#allocation13 + $0x48] sm:$0xff]
    %v725 = vld [vmem:[#allocation13 + $0x50] sm:$0xf]
    %v726 = vld [vmem:[#allocation13 + $0x54] sm:$0xff]
    %v727 = vld [vmem:[#allocation13 + $0x5c] sm:$0xf]
    %v728 = vld [vmem:[#allocation13 + $0x60] sm:$0xff]
    %v729 = vld [vmem:[#allocation13 + $0x68] sm:$0xf]
    %v730 = vld [vmem:[#allocation13 + $0x6c] sm:$0xff]
    %v731 = vld [vmem:[#allocation13 + $0x74] sm:$0xf]
    %v732 = vld [vmem:[#allocation13 + $0x78] sm:$0xff]
    %v733 = vld [vmem:[#allocation13 + $0x80] sm:$0xf]
    %v734 = vld [vmem:[#allocation13 + $0x84] sm:$0xff]
    %v735 = vld [vmem:[#allocation13 + $0x8c] sm:$0xf]
    %v736 = vld [vmem:[#allocation13 + $0x90] sm:$0xff]
    %v737 = vld [vmem:[#allocation13 + $0x98] sm:$0xf]
    %v738 = vld [vmem:[#allocation13 + $0x9c] sm:$0xff]
    %v739 = vld [vmem:[#allocation13 + $0xa4] sm:$0xf]
    %v740 = vld [vmem:[#allocation13 + $0xa8] sm:$0xff]
    %v741 = vld [vmem:[#allocation13 + $0xb0] sm:$0xf]
    %v742 = vld [vmem:[#allocation13 + $0xb4] sm:$0xff]
    %v743 = vld [vmem:[#allocation13 + $0xbc] sm:$0xf]
    %v776 = vunpack.c.l.b16 %v712
    %v777 = vunpack.c.h.b16 %v712
    %v778 = vunpack.c.l.b16 %v713
    %v779 = vunpack.c.l.b16 %v714
    %v780 = vunpack.c.h.b16 %v714
    %v781 = vunpack.c.l.b16 %v715
    %v782 = vunpack.c.l.b16 %v716
    %v783 = vunpack.c.h.b16 %v716
    %v784 = vunpack.c.l.b16 %v717
    %v785 = vunpack.c.l.b16 %v718
    %v786 = vunpack.c.h.b16 %v718
    %v787 = vunpack.c.l.b16 %v719
    %v788 = vunpack.c.l.b16 %v720
    %v789 = vunpack.c.h.b16 %v720
    %v790 = vunpack.c.l.b16 %v721
    %v791 = vunpack.c.l.b16 %v722
    %v792 = vunpack.c.h.b16 %v722
    %v793 = vunpack.c.l.b16 %v723
    %v794 = vunpack.c.l.b16 %v724
    %v795 = vunpack.c.h.b16 %v724
    %v796 = vunpack.c.l.b16 %v725
    %v797 = vunpack.c.l.b16 %v726
    %v798 = vunpack.c.h.b16 %v726
    %v799 = vunpack.c.l.b16 %v727
    %v800 = vunpack.c.l.b16 %v728
    %v801 = vunpack.c.h.b16 %v728
    %v802 = vunpack.c.l.b16 %v729
    %v803 = vunpack.c.l.b16 %v730
    %v804 = vunpack.c.h.b16 %v730
    %v805 = vunpack.c.l.b16 %v731
    %v806 = vunpack.c.l.b16 %v732
    %v807 = vunpack.c.h.b16 %v732
    %v808 = vunpack.c.l.b16 %v733
    %v809 = vunpack.c.l.b16 %v734
    %v810 = vunpack.c.h.b16 %v734
    %v811 = vunpack.c.l.b16 %v735
    %v812 = vunpack.c.l.b16 %v736
    %v813 = vunpack.c.h.b16 %v736
    %v814 = vunpack.c.l.b16 %v737
    %v815 = vunpack.c.l.b16 %v738
    %v816 = vunpack.c.h.b16 %v738
    %v817 = vunpack.c.l.b16 %v739
    %v818 = vunpack.c.l.b16 %v740
    %v819 = vunpack.c.h.b16 %v740
    %v820 = vunpack.c.l.b16 %v741
    %v821 = vunpack.c.l.b16 %v742
    %v822 = vunpack.c.h.b16 %v742
    %v823 = vunpack.c.l.b16 %v743
    %v824 = vpack.c.b16 %v779, %v776
    %v825 = vpack.c.b16 %v780, %v777
    %v826 = vpack.c.b16 %v781, %v778
    %v827 = vpack.c.b16 %v785, %v782
    %v828 = vpack.c.b16 %v786, %v783
    %v829 = vpack.c.b16 %v787, %v784
    %v830 = vpack.c.b16 %v791, %v788
    %v831 = vpack.c.b16 %v792, %v789
    %v832 = vpack.c.b16 %v793, %v790
    %v833 = vpack.c.b16 %v797, %v794
    %v834 = vpack.c.b16 %v798, %v795
    %v835 = vpack.c.b16 %v799, %v796
    %v836 = vpack.c.b16 %v803, %v800
    %v837 = vpack.c.b16 %v804, %v801
    %v838 = vpack.c.b16 %v805, %v802
    %v839 = vpack.c.b16 %v809, %v806
    %v840 = vpack.c.b16 %v810, %v807
    %v841 = vpack.c.b16 %v811, %v808
    %v842 = vpack.c.b16 %v815, %v812
    %v843 = vpack.c.b16 %v816, %v813
    %v844 = vpack.c.b16 %v817, %v814
    %v845 = vpack.c.b16 %v821, %v818
    %v846 = vpack.c.b16 %v822, %v819
    %v847 = vpack.c.b16 %v823, %v820
    %872 = vmatprep.subr.bf16.mxu0 %v825
    %873 = vmatpush1.bf16.msra.mxu0 %v824
    %874 = vmatprep.subr.bf16.mxu0 %v828
    %875 = vmatpush1.bf16.msra.mxu0 %v827
    %876 = vmatprep.subr.bf16.mxu0 %v831
    %877 = vmatpush1.bf16.msra.mxu0 %v830
    %878 = vmatprep.subr.bf16.mxu0 %v834
    %879 = vmatpush1.bf16.msra.mxu0 %v833
    %880 = vmatprep.subr.bf16.mxu0 %v837
    %881 = vmatpush1.bf16.msra.mxu0 %v836
    %882 = vmatprep.subr.bf16.mxu0 %v840
    %883 = vmatpush1.bf16.msra.mxu0 %v839
    %884 = vmatprep.subr.bf16.mxu0 %v843
    %885 = vmatpush1.bf16.msra.mxu0 %v842
    %886 = vmatprep.subr.bf16.mxu0 %v846
    %887 = vmatpush1.bf16.msra.mxu0 %v845
    %888 = vmatprep.subr.bf16.mxu0 0
    %889 = vmatpush1.bf16.msra.mxu0 0
    %890 = vmatprep.subr.bf16.mxu0 0
    %891 = vmatpush1.bf16.msra.mxu0 0
    %892 = vmatprep.subr.bf16.mxu0 0
    %893 = vmatpush1.bf16.msra.mxu0 0
    %894 = vmatprep.subr.bf16.mxu0 0
    %895 = vmatpush1.bf16.msra.mxu0 0
    %896 = vmatprep.subr.bf16.mxu0 0
    %897 = vmatpush1.bf16.msra.mxu0 0
    %898 = vmatprep.subr.bf16.mxu0 0
    %899 = vmatpush1.bf16.msra.mxu0 0
    %900 = vmatprep.subr.bf16.mxu0 0
    %901 = vmatpush1.bf16.msra.mxu0 0
    %902 = vmatprep.subr.bf16.mxu0 0
    %903 = vmatpush1.bf16.msra.mxu0 0
    %904 = vmatprep.mubr.bf16.mxu0 0
    %905 = vmatmul.mubr.bf16.gmra.mrb[0].mxu0 %v711
    %v906 = vpop.f32.mrb[0].mxu0
    %v907 = vadd.f32 0.0, %v906
    %v908 = vpop.f32.mrb[0].mxu0
    %v909 = vadd.f32 0.0, %v908
    %v910 = vpop.f32.mrb[0].mxu0
    %v911 = vpop.f32.mrb[0].mxu0
    %912 = vdwg.mxu0
    %913 = vmatprep.subr.bf16.mxu0 0
    %914 = vmatpush1.bf16.msra.mxu0 %v826
    %915 = vmatprep.subr.bf16.mxu0 0
    %916 = vmatpush1.bf16.msra.mxu0 %v829
    %917 = vmatprep.subr.bf16.mxu0 0
    %918 = vmatpush1.bf16.msra.mxu0 %v832
    %919 = vmatprep.subr.bf16.mxu0 0
    %920 = vmatpush1.bf16.msra.mxu0 %v835
    %921 = vmatprep.subr.bf16.mxu0 0
    %922 = vmatpush1.bf16.msra.mxu0 %v838
    %923 = vmatprep.subr.bf16.mxu0 0
    %924 = vmatpush1.bf16.msra.mxu0 %v841
    %925 = vmatprep.subr.bf16.mxu0 0
    %926 = vmatpush1.bf16.msra.mxu0 %v844
    %927 = vmatprep.subr.bf16.mxu0 0
    %928 = vmatpush1.bf16.msra.mxu0 %v847
    %929 = vmatprep.subr.bf16.mxu0 0
    %930 = vmatpush1.bf16.msra.mxu0 0
    %931 = vmatprep.subr.bf16.mxu0 0
    %932 = vmatpush1.bf16.msra.mxu0 0
    %933 = vmatprep.subr.bf16.mxu0 0
    %934 = vmatpush1.bf16.msra.mxu0 0
    %935 = vmatprep.subr.bf16.mxu0 0
    %936 = vmatpush1.bf16.msra.mxu0 0
    %937 = vmatprep.subr.bf16.mxu0 0
    %938 = vmatpush1.bf16.msra.mxu0 0
    %939 = vmatprep.subr.bf16.mxu0 0
    %940 = vmatpush1.bf16.msra.mxu0 0
    %941 = vmatprep.subr.bf16.mxu0 0
    %942 = vmatpush1.bf16.msra.mxu0 0
    %943 = vmatprep.subr.bf16.mxu0 0
    %944 = vmatpush1.bf16.msra.mxu0 0
    %945 = vmatprep.mubr.bf16.mxu0 0
    %946 = vmatmul.mubr.bf16.gmra.mrb[0].mxu0 %v711
    %v947 = vpop.f32.mrb[0].mxu0
    %v948 = vadd.f32 0.0, %v947
    %v949 = vpop.f32.mrb[0].mxu0
    %v950 = vpop.f32.mrb[0].mxu0
    %v951 = vpop.f32.mrb[0].mxu0
    %952 = vdwg.mxu0
    %v953 = vld [vmem:[#allocation2] sm:$0xc]
    %v954 = vld [vmem:[#allocation2 + $0x8] sm:$0xc]
    %v955 = vld [vmem:[#allocation3 + $0x20] sm:$0xc0]
    %v956 = vld [vmem:[#allocation3 + $0x28] sm:$0xc0]
    %v958 = vrot.slane %v907, 6
    %v960 = vadd.f32 %v953, %v958
    %v961 = vxor.u32 %v960, 2147483648
    %v962 = vmul.f32 %v961, 1.442695
    %v963 = vpow.pop %v962
    %v964 = vadd.f32 %v963, 1.0
    %v965 = vrcp.pop %v964
    %v966 = vmul.f32 1.0, %v965
    %v968 = vrot.slane %v909, 2
    %v970 = vadd.f32 %v955, %v968
    %v971 = vxor.u32 %v970, 2147483648
    %v972 = vmul.f32 %v971, 1.442695
    %v973 = vpow.pop %v972
    %v974 = vadd.f32 %v973, 1.0
    %v975 = vrcp.pop %v974
    %v976 = vmul.f32 1.0, %v975
    %v977 = vadd.f32 %v948, %v365
    %v979 = vrot.slane %v977, 6
    %v981 = vmul.f32 %v966, %v979
    %v982 = vadd.f32 %v954, %v981
    %v983 = vtanh.pop %v982
    %v984 = vadd.f32 %v948, %v642
    %v986 = vrot.slane %v984, 2
    %987 = vrot.lane.b32.xlu0 %v986, 64
    %v988 = vpop.permute.xlu0 %987
    %v990 = vmul.f32 %v976, %v988
    %v991 = vadd.f32 %v956, %v990
    %v992 = vtanh.pop %v991
    %s993 = sadd.s32 %s374, 1
    %v994 = vstv %s993
    %vm995 = vcmp.lt.s32.totalorder %v994, %v359
    %v996 = vsub.f32 1.0, %v966
    %998 = vrot.lane.b32.xlu0 %v983, 64
    %v999 = vpop.permute.xlu0 %998
    %v1001 = vmul.f32 %v996, %v999
    %v1003 = vrot.slane %v693, 6
    %1004 = vrot.lane.b32.xlu0 %v1003, 64
    %v1005 = vpop.permute.xlu0 %1004
    %v1007 = vmul.f32 %v966, %v1005
    %v1008 = vadd.f32 %v1001, %v1007
    %v1009 = vsel %vm995, 1, 0
    %1010 = vset.pattern.permute.xlu0 0
    %1011 = vperm.xlu0 %1010, %v1009
    %v1012 = vpop.permute.xlu0 %1011
    %vm1013 = vcmp.eq.s32.totalorder %v1012, 1
    %v1015 = vrot.slane %v1008, 2
    %1016 = vrot.lane.b32.xlu0 %v1015, 64
    %v1017 = vpop.permute.xlu0 %1016
    %v1019 = vsel %vm1013, %v1017, %v693
    %s1020 = sadd.s32 %s376, 11
    %v1021 = vstv %s1020
    %vm1022 = vcmp.lt.s32.totalorder %v1021, %v359
    %v1023 = vsub.f32 1.0, %v976
    %1025 = vrot.lane.b32.xlu0 %v992, 64
    %v1026 = vpop.permute.xlu0 %1025
    %v1028 = vmul.f32 %v1023, %v1026
    %v1029 = vrot.slane %v693, 2
    %v1031 = vmul.f32 %v976, %v1029
    %v1032 = vadd.f32 %v1028, %v1031
    %v1033 = vsel %vm1022, 1, 0
    %1034 = vset.pattern.permute.xlu0 0
    %1035 = vperm.xlu0 %1034, %v1033
    %v1036 = vpop.permute.xlu0 %1035
    %vm1037 = vcmp.eq.s32.totalorder %v1036, 1
    %v1039 = vrot.slane %v1032, 6
    %1040 = vrot.lane.b32.xlu0 %v1039, 64
    %v1041 = vpop.permute.xlu0 %1040
    %1043 = vrot.lane.b32.xlu0 %v693, 64
    %v1044 = vpop.permute.xlu0 %1043
    %v1046 = vsel %vm1037, %v1041, %v1044
    %1048 = vrot.lane.b32.xlu0 %v1046, 64
    %v1049 = vpop.permute.xlu0 %1048
    %v1051 = vsel %vm233, %v1019, %v1049
    %v1052 = vpack.c.bf16 %v1019, %v1019
    %v1054 = vunpack.c.l.b16 %v1052
    %v1055 = vpack.c.b16 %v1054, %v1054
    %v1056 = vrot.slane %v1055, 7
    %vm1058 = vcmask 517121
    %1059 = vst.msk [vmem:[#allocation14] sm:$0x2] %vm1058, %v1056
    %v1060 = vpack.c.bf16 %v1046, %v1046
    %v1062 = vunpack.c.l.b16 %v1060
    %v1063 = vpack.c.b16 %v1062, %v1062
    %v1064 = vrot.slane %v1063, 5
    %vm1066 = vcmask 519171
    %1067 = vst.msk [vmem:[#allocation15 + $0x8] sm:$0x8] %vm1066, %v1064
    %v1068 = vpack.c.bf16 %v1051, %v1051
    %v1069 = vld [vmem:[#allocation13] sm:$0xff]
    %v1070 = vld [vmem:[#allocation13 + $0x8] sm:$0xf]
    %v1071 = vld [vmem:[#allocation13 + $0xc] sm:$0xff]
    %v1072 = vld [vmem:[#allocation13 + $0x14] sm:$0xf]
    %v1073 = vld [vmem:[#allocation13 + $0x18] sm:$0xff]
    %v1074 = vld [vmem:[#allocation13 + $0x20] sm:$0xf]
    %v1075 = vld [vmem:[#allocation13 + $0x24] sm:$0xff]
    %v1076 = vld [vmem:[#allocation13 + $0x2c] sm:$0xf]
    %v1077 = vld [vmem:[#allocation13 + $0x30] sm:$0xff]
    %v1078 = vld [vmem:[#allocation13 + $0x38] sm:$0xf]
    %v1079 = vld [vmem:[#allocation13 + $0x3c] sm:$0xff]
    %v1080 = vld [vmem:[#allocation13 + $0x44] sm:$0xf]
    %v1081 = vld [vmem:[#allocation13 + $0x48] sm:$0xff]
    %v1082 = vld [vmem:[#allocation13 + $0x50] sm:$0xf]
    %v1083 = vld [vmem:[#allocation13 + $0x54] sm:$0xff]
    %v1084 = vld [vmem:[#allocation13 + $0x5c] sm:$0xf]
    %v1085 = vld [vmem:[#allocation13 + $0x60] sm:$0xff]
    %v1086 = vld [vmem:[#allocation13 + $0x68] sm:$0xf]
    %v1087 = vld [vmem:[#allocation13 + $0x6c] sm:$0xff]
    %v1088 = vld [vmem:[#allocation13 + $0x74] sm:$0xf]
    %v1089 = vld [vmem:[#allocation13 + $0x78] sm:$0xff]
    %v1090 = vld [vmem:[#allocation13 + $0x80] sm:$0xf]
    %v1091 = vld [vmem:[#allocation13 + $0x84] sm:$0xff]
    %v1092 = vld [vmem:[#allocation13 + $0x8c] sm:$0xf]
    %v1093 = vld [vmem:[#allocation13 + $0x90] sm:$0xff]
    %v1094 = vld [vmem:[#allocation13 + $0x98] sm:$0xf]
    %v1095 = vld [vmem:[#allocation13 + $0x9c] sm:$0xff]
    %v1096 = vld [vmem:[#allocation13 + $0xa4] sm:$0xf]
    %v1097 = vld [vmem:[#allocation13 + $0xa8] sm:$0xff]
    %v1098 = vld [vmem:[#allocation13 + $0xb0] sm:$0xf]
    %v1099 = vld [vmem:[#allocation13 + $0xb4] sm:$0xff]
    %v1100 = vld [vmem:[#allocation13 + $0xbc] sm:$0xf]
    %v1133 = vunpack.c.l.b16 %v1069
    %v1134 = vunpack.c.h.b16 %v1069
    %v1135 = vunpack.c.l.b16 %v1070
    %v1136 = vunpack.c.l.b16 %v1071
    %v1137 = vunpack.c.h.b16 %v1071
    %v1138 = vunpack.c.l.b16 %v1072
    %v1139 = vunpack.c.l.b16 %v1073
    %v1140 = vunpack.c.h.b16 %v1073
    %v1141 = vunpack.c.l.b16 %v1074
    %v1142 = vunpack.c.l.b16 %v1075
    %v1143 = vunpack.c.h.b16 %v1075
    %v1144 = vunpack.c.l.b16 %v1076
    %v1145 = vunpack.c.l.b16 %v1077
    %v1146 = vunpack.c.h.b16 %v1077
    %v1147 = vunpack.c.l.b16 %v1078
    %v1148 = vunpack.c.l.b16 %v1079
    %v1149 = vunpack.c.h.b16 %v1079
    %v1150 = vunpack.c.l.b16 %v1080
    %v1151 = vunpack.c.l.b16 %v1081
    %v1152 = vunpack.c.h.b16 %v1081
    %v1153 = vunpack.c.l.b16 %v1082
    %v1154 = vunpack.c.l.b16 %v1083
    %v1155 = vunpack.c.h.b16 %v1083
    %v1156 = vunpack.c.l.b16 %v1084
    %v1157 = vunpack.c.l.b16 %v1085
    %v1158 = vunpack.c.h.b16 %v1085
    %v1159 = vunpack.c.l.b16 %v1086
    %v1160 = vunpack.c.l.b16 %v1087
    %v1161 = vunpack.c.h.b16 %v1087
    %v1162 = vunpack.c.l.b16 %v1088
    %v1163 = vunpack.c.l.b16 %v1089
    %v1164 = vunpack.c.h.b16 %v1089
    %v1165 = vunpack.c.l.b16 %v1090
    %v1166 = vunpack.c.l.b16 %v1091
    %v1167 = vunpack.c.h.b16 %v1091
    %v1168 = vunpack.c.l.b16 %v1092
    %v1169 = vunpack.c.l.b16 %v1093
    %v1170 = vunpack.c.h.b16 %v1093
    %v1171 = vunpack.c.l.b16 %v1094
    %v1172 = vunpack.c.l.b16 %v1095
    %v1173 = vunpack.c.h.b16 %v1095
    %v1174 = vunpack.c.l.b16 %v1096
    %v1175 = vunpack.c.l.b16 %v1097
    %v1176 = vunpack.c.h.b16 %v1097
    %v1177 = vunpack.c.l.b16 %v1098
    %v1178 = vunpack.c.l.b16 %v1099
    %v1179 = vunpack.c.h.b16 %v1099
    %v1180 = vunpack.c.l.b16 %v1100
    %v1181 = vpack.c.b16 %v1136, %v1133
    %v1182 = vpack.c.b16 %v1137, %v1134
    %v1183 = vpack.c.b16 %v1138, %v1135
    %v1184 = vpack.c.b16 %v1142, %v1139
    %v1185 = vpack.c.b16 %v1143, %v1140
    %v1186 = vpack.c.b16 %v1144, %v1141
    %v1187 = vpack.c.b16 %v1148, %v1145
    %v1188 = vpack.c.b16 %v1149, %v1146
    %v1189 = vpack.c.b16 %v1150, %v1147
    %v1190 = vpack.c.b16 %v1154, %v1151
    %v1191 = vpack.c.b16 %v1155, %v1152
    %v1192 = vpack.c.b16 %v1156, %v1153
    %v1193 = vpack.c.b16 %v1160, %v1157
    %v1194 = vpack.c.b16 %v1161, %v1158
    %v1195 = vpack.c.b16 %v1162, %v1159
    %v1196 = vpack.c.b16 %v1166, %v1163
    %v1197 = vpack.c.b16 %v1167, %v1164
    %v1198 = vpack.c.b16 %v1168, %v1165
    %v1199 = vpack.c.b16 %v1172, %v1169
    %v1200 = vpack.c.b16 %v1173, %v1170
    %v1201 = vpack.c.b16 %v1174, %v1171
    %v1202 = vpack.c.b16 %v1178, %v1175
    %v1203 = vpack.c.b16 %v1179, %v1176
    %v1204 = vpack.c.b16 %v1180, %v1177
    %1229 = vmatprep.subr.bf16.mxu0 %v1182
    %1230 = vmatpush1.bf16.msra.mxu0 %v1181
    %1231 = vmatprep.subr.bf16.mxu0 %v1185
    %1232 = vmatpush1.bf16.msra.mxu0 %v1184
    %1233 = vmatprep.subr.bf16.mxu0 %v1188
    %1234 = vmatpush1.bf16.msra.mxu0 %v1187
    %1235 = vmatprep.subr.bf16.mxu0 %v1191
    %1236 = vmatpush1.bf16.msra.mxu0 %v1190
    %1237 = vmatprep.subr.bf16.mxu0 %v1194
    %1238 = vmatpush1.bf16.msra.mxu0 %v1193
    %1239 = vmatprep.subr.bf16.mxu0 %v1197
    %1240 = vmatpush1.bf16.msra.mxu0 %v1196
    %1241 = vmatprep.subr.bf16.mxu0 %v1200
    %1242 = vmatpush1.bf16.msra.mxu0 %v1199
    %1243 = vmatprep.subr.bf16.mxu0 %v1203
    %1244 = vmatpush1.bf16.msra.mxu0 %v1202
    %1245 = vmatprep.subr.bf16.mxu0 0
    %1246 = vmatpush1.bf16.msra.mxu0 0
    %1247 = vmatprep.subr.bf16.mxu0 0
    %1248 = vmatpush1.bf16.msra.mxu0 0
    %1249 = vmatprep.subr.bf16.mxu0 0
    %1250 = vmatpush1.bf16.msra.mxu0 0
    %1251 = vmatprep.subr.bf16.mxu0 0
    %1252 = vmatpush1.bf16.msra.mxu0 0
    %1253 = vmatprep.subr.bf16.mxu0 0
    %1254 = vmatpush1.bf16.msra.mxu0 0
    %1255 = vmatprep.subr.bf16.mxu0 0
    %1256 = vmatpush1.bf16.msra.mxu0 0
    %1257 = vmatprep.subr.bf16.mxu0 0
    %1258 = vmatpush1.bf16.msra.mxu0 0
    %1259 = vmatprep.subr.bf16.mxu0 0
    %1260 = vmatpush1.bf16.msra.mxu0 0
    %1261 = vmatprep.mubr.bf16.mxu0 0
    %1262 = vmatmul.mubr.bf16.gmra.mrb[0].mxu0 %v1068
    %v1263 = vpop.f32.mrb[0].mxu0
    %v1264 = vadd.f32 0.0, %v1263
    %v1265 = vpop.f32.mrb[0].mxu0
    %v1266 = vadd.f32 0.0, %v1265
    %v1267 = vpop.f32.mrb[0].mxu0
    %v1268 = vpop.f32.mrb[0].mxu0
    %1269 = vdwg.mxu0
    %1270 = vmatprep.subr.bf16.mxu0 0
    %1271 = vmatpush1.bf16.msra.mxu0 %v1183
    %1272 = vmatprep.subr.bf16.mxu0 0
    %1273 = vmatpush1.bf16.msra.mxu0 %v1186
    %1274 = vmatprep.subr.bf16.mxu0 0
    %1275 = vmatpush1.bf16.msra.mxu0 %v1189
    %1276 = vmatprep.subr.bf16.mxu0 0
    %1277 = vmatpush1.bf16.msra.mxu0 %v1192
    %1278 = vmatprep.subr.bf16.mxu0 0
    %1279 = vmatpush1.bf16.msra.mxu0 %v1195
    %1280 = vmatprep.subr.bf16.mxu0 0
    %1281 = vmatpush1.bf16.msra.mxu0 %v1198
    %1282 = vmatprep.subr.bf16.mxu0 0
    %1283 = vmatpush1.bf16.msra.mxu0 %v1201
    %1284 = vmatprep.subr.bf16.mxu0 0
    %1285 = vmatpush1.bf16.msra.mxu0 %v1204
    %1286 = vmatprep.subr.bf16.mxu0 0
    %1287 = vmatpush1.bf16.msra.mxu0 0
    %1288 = vmatprep.subr.bf16.mxu0 0
    %1289 = vmatpush1.bf16.msra.mxu0 0
    %1290 = vmatprep.subr.bf16.mxu0 0
    %1291 = vmatpush1.bf16.msra.mxu0 0
    %1292 = vmatprep.subr.bf16.mxu0 0
    %1293 = vmatpush1.bf16.msra.mxu0 0
    %1294 = vmatprep.subr.bf16.mxu0 0
    %1295 = vmatpush1.bf16.msra.mxu0 0
    %1296 = vmatprep.subr.bf16.mxu0 0
    %1297 = vmatpush1.bf16.msra.mxu0 0
    %1298 = vmatprep.subr.bf16.mxu0 0
    %1299 = vmatpush1.bf16.msra.mxu0 0
    %1300 = vmatprep.subr.bf16.mxu0 0
    %1301 = vmatpush1.bf16.msra.mxu0 0
    %1302 = vmatprep.mubr.bf16.mxu0 0
    %1303 = vmatmul.mubr.bf16.gmra.mrb[0].mxu0 %v1068
    %v1304 = vpop.f32.mrb[0].mxu0
    %v1305 = vadd.f32 0.0, %v1304
    %v1306 = vpop.f32.mrb[0].mxu0
    %v1307 = vpop.f32.mrb[0].mxu0
    %v1308 = vpop.f32.mrb[0].mxu0
    %1309 = vdwg.mxu0
    %v1310 = vld [vmem:[#allocation2] sm:$0x30]
    %v1311 = vld [vmem:[#allocation2 + $0x8] sm:$0x30]
    %v1312 = vld [vmem:[#allocation3 + $0x20] sm:$0x30]
    %v1313 = vld [vmem:[#allocation3 + $0x28] sm:$0x30]
    %v1315 = vrot.slane %v1264, 4
    %v1317 = vadd.f32 %v1310, %v1315
    %v1318 = vxor.u32 %v1317, 2147483648
    %v1319 = vmul.f32 %v1318, 1.442695
    %v1320 = vpow.pop %v1319
    %v1321 = vadd.f32 %v1320, 1.0
    %v1322 = vrcp.pop %v1321
    %v1323 = vmul.f32 1.0, %v1322
    %v1325 = vrot.slane %v1266, 4
    %v1327 = vadd.f32 %v1312, %v1325
    %v1328 = vxor.u32 %v1327, 2147483648
    %v1329 = vmul.f32 %v1328, 1.442695
    %v1330 = vpow.pop %v1329
    %v1331 = vadd.f32 %v1330, 1.0
    %v1332 = vrcp.pop %v1331
    %v1333 = vmul.f32 1.0, %v1332
    %v1334 = vadd.f32 %v1305, %v365
    %v1336 = vrot.slane %v1334, 4
    %v1338 = vmul.f32 %v1323, %v1336
    %v1339 = vadd.f32 %v1311, %v1338
    %v1340 = vtanh.pop %v1339
    %v1341 = vadd.f32 %v1305, %v642
    %v1343 = vrot.slane %v1341, 4
    %1344 = vrot.lane.b32.xlu0 %v1343, 64
    %v1345 = vpop.permute.xlu0 %1344
    %v1347 = vmul.f32 %v1333, %v1345
    %v1348 = vadd.f32 %v1313, %v1347
    %v1349 = vtanh.pop %v1348
    %s1350 = sadd.s32 %s374, 2
    %v1351 = vstv %s1350
    %vm1352 = vcmp.lt.s32.totalorder %v1351, %v359
    %v1353 = vsub.f32 1.0, %v1323
    %1355 = vrot.lane.b32.xlu0 %v1340, 64
    %v1356 = vpop.permute.xlu0 %1355
    %v1358 = vmul.f32 %v1353, %v1356
    %v1360 = vrot.slane %v1051, 4
    %1361 = vrot.lane.b32.xlu0 %v1360, 64
    %v1362 = vpop.permute.xlu0 %1361
    %v1364 = vmul.f32 %v1323, %v1362
    %v1365 = vadd.f32 %v1358, %v1364
    %v1366 = vsel %vm1352, 1, 0
    %1367 = vset.pattern.permute.xlu0 0
    %1368 = vperm.xlu0 %1367, %v1366
    %v1369 = vpop.permute.xlu0 %1368
    %vm1370 = vcmp.eq.s32.totalorder %v1369, 1
    %v1372 = vrot.slane %v1365, 4
    %1373 = vrot.lane.b32.xlu0 %v1372, 64
    %v1374 = vpop.permute.xlu0 %1373
    %v1376 = vsel %vm1370, %v1374, %v1051
    %s1377 = sadd.s32 %s376, 10
    %v1378 = vstv %s1377
    %vm1379 = vcmp.lt.s32.totalorder %v1378, %v359
    %v1380 = vsub.f32 1.0, %v1333
    %1382 = vrot.lane.b32.xlu0 %v1349, 64
    %v1383 = vpop.permute.xlu0 %1382
    %v1385 = vmul.f32 %v1380, %v1383
    %v1387 = vmul.f32 %v1333, %v1360
    %v1388 = vadd.f32 %v1385, %v1387
    %v1389 = vsel %vm1379, 1, 0
    %1390 = vset.pattern.permute.xlu0 0
    %1391 = vperm.xlu0 %1390, %v1389
    %v1392 = vpop.permute.xlu0 %1391
    %vm1393 = vcmp.eq.s32.totalorder %v1392, 1
    %v1395 = vrot.slane %v1388, 4
    %1396 = vrot.lane.b32.xlu0 %v1395, 64
    %v1397 = vpop.permute.xlu0 %1396
    %1399 = vrot.lane.b32.xlu0 %v1051, 64
    %v1400 = vpop.permute.xlu0 %1399
    %v1402 = vsel %vm1393, %v1397, %v1400
    %1404 = vrot.lane.b32.xlu0 %v1402, 64
    %v1405 = vpop.permute.xlu0 %1404
    %v1407 = vsel %vm233, %v1376, %v1405
    %v1408 = vpack.c.bf16 %v1376, %v1376
    %v1410 = vunpack.c.l.b16 %v1408
    %v1411 = vpack.c.b16 %v1410, %v1410
    %v1412 = vrot.slane %v1411, 6
    %vm1414 = vcmask 518146
    %1415 = vst.msk [vmem:[#allocation14] sm:$0x4] %vm1414, %v1412
    %v1416 = vpack.c.bf16 %v1402, %v1402
    %v1418 = vunpack.c.l.b16 %v1416
    %v1419 = vpack.c.b16 %v1418, %v1418
    %v1420 = vrot.slane %v1419, 6
    %1422 = vst.msk [vmem:[#allocation15 + $0x8] sm:$0x4] %vm1414, %v1420
    %v1423 = vpack.c.bf16 %v1407, %v1407
    %v1424 = vld [vmem:[#allocation13] sm:$0xff]
    %v1425 = vld [vmem:[#allocation13 + $0x8] sm:$0xf]
    %v1426 = vld [vmem:[#allocation13 + $0xc] sm:$0xff]
    %v1427 = vld [vmem:[#allocation13 + $0x14] sm:$0xf]
    %v1428 = vld [vmem:[#allocation13 + $0x18] sm:$0xff]
    %v1429 = vld [vmem:[#allocation13 + $0x20] sm:$0xf]
    %v1430 = vld [vmem:[#allocation13 + $0x24] sm:$0xff]
    %v1431 = vld [vmem:[#allocation13 + $0x2c] sm:$0xf]
    %v1432 = vld [vmem:[#allocation13 + $0x30] sm:$0xff]
    %v1433 = vld [vmem:[#allocation13 + $0x38] sm:$0xf]
    %v1434 = vld [vmem:[#allocation13 + $0x3c] sm:$0xff]
    %v1435 = vld [vmem:[#allocation13 + $0x44] sm:$0xf]
    %v1436 = vld [vmem:[#allocation13 + $0x48] sm:$0xff]
    %v1437 = vld [vmem:[#allocation13 + $0x50] sm:$0xf]
    %v1438 = vld [vmem:[#allocation13 + $0x54] sm:$0xff]
    %v1439 = vld [vmem:[#allocation13 + $0x5c] sm:$0xf]
    %v1440 = vld [vmem:[#allocation13 + $0x60] sm:$0xff]
    %v1441 = vld [vmem:[#allocation13 + $0x68] sm:$0xf]
    %v1442 = vld [vmem:[#allocation13 + $0x6c] sm:$0xff]
    %v1443 = vld [vmem:[#allocation13 + $0x74] sm:$0xf]
    %v1444 = vld [vmem:[#allocation13 + $0x78] sm:$0xff]
    %v1445 = vld [vmem:[#allocation13 + $0x80] sm:$0xf]
    %v1446 = vld [vmem:[#allocation13 + $0x84] sm:$0xff]
    %v1447 = vld [vmem:[#allocation13 + $0x8c] sm:$0xf]
    %v1448 = vld [vmem:[#allocation13 + $0x90] sm:$0xff]
    %v1449 = vld [vmem:[#allocation13 + $0x98] sm:$0xf]
    %v1450 = vld [vmem:[#allocation13 + $0x9c] sm:$0xff]
    %v1451 = vld [vmem:[#allocation13 + $0xa4] sm:$0xf]
    %v1452 = vld [vmem:[#allocation13 + $0xa8] sm:$0xff]
    %v1453 = vld [vmem:[#allocation13 + $0xb0] sm:$0xf]
    %v1454 = vld [vmem:[#allocation13 + $0xb4] sm:$0xff]
    %v1455 = vld [vmem:[#allocation13 + $0xbc] sm:$0xf]
    %v1488 = vunpack.c.l.b16 %v1424
    %v1489 = vunpack.c.h.b16 %v1424
    %v1490 = vunpack.c.l.b16 %v1425
    %v1491 = vunpack.c.l.b16 %v1426
    %v1492 = vunpack.c.h.b16 %v1426
    %v1493 = vunpack.c.l.b16 %v1427
    %v1494 = vunpack.c.l.b16 %v1428
    %v1495 = vunpack.c.h.b16 %v1428
    %v1496 = vunpack.c.l.b16 %v1429
    %v1497 = vunpack.c.l.b16 %v1430
    %v1498 = vunpack.c.h.b16 %v1430
    %v1499 = vunpack.c.l.b16 %v1431
    %v1500 = vunpack.c.l.b16 %v1432
    %v1501 = vunpack.c.h.b16 %v1432
    %v1502 = vunpack.c.l.b16 %v1433
    %v1503 = vunpack.c.l.b16 %v1434
    %v1504 = vunpack.c.h.b16 %v1434
    %v1505 = vunpack.c.l.b16 %v1435
    %v1506 = vunpack.c.l.b16 %v1436
    %v1507 = vunpack.c.h.b16 %v1436
    %v1508 = vunpack.c.l.b16 %v1437
    %v1509 = vunpack.c.l.b16 %v1438
    %v1510 = vunpack.c.h.b16 %v1438
    %v1511 = vunpack.c.l.b16 %v1439
    %v1512 = vunpack.c.l.b16 %v1440
    %v1513 = vunpack.c.h.b16 %v1440
    %v1514 = vunpack.c.l.b16 %v1441
    %v1515 = vunpack.c.l.b16 %v1442
    %v1516 = vunpack.c.h.b16 %v1442
    %v1517 = vunpack.c.l.b16 %v1443
    %v1518 = vunpack.c.l.b16 %v1444
    %v1519 = vunpack.c.h.b16 %v1444
    %v1520 = vunpack.c.l.b16 %v1445
    %v1521 = vunpack.c.l.b16 %v1446
    %v1522 = vunpack.c.h.b16 %v1446
    %v1523 = vunpack.c.l.b16 %v1447
    %v1524 = vunpack.c.l.b16 %v1448
    %v1525 = vunpack.c.h.b16 %v1448
    %v1526 = vunpack.c.l.b16 %v1449
    %v1527 = vunpack.c.l.b16 %v1450
    %v1528 = vunpack.c.h.b16 %v1450
    %v1529 = vunpack.c.l.b16 %v1451
    %v1530 = vunpack.c.l.b16 %v1452
    %v1531 = vunpack.c.h.b16 %v1452
    %v1532 = vunpack.c.l.b16 %v1453
    %v1533 = vunpack.c.l.b16 %v1454
    %v1534 = vunpack.c.h.b16 %v1454
    %v1535 = vunpack.c.l.b16 %v1455
    %v1536 = vpack.c.b16 %v1491, %v1488
    %v1537 = vpack.c.b16 %v1492, %v1489
    %v1538 = vpack.c.b16 %v1493, %v1490
    %v1539 = vpack.c.b16 %v1497, %v1494
    %v1540 = vpack.c.b16 %v1498, %v1495
    %v1541 = vpack.c.b16 %v1499, %v1496
    %v1542 = vpack.c.b16 %v1503, %v1500
    %v1543 = vpack.c.b16 %v1504, %v1501
    %v1544 = vpack.c.b16 %v1505, %v1502
    %v1545 = vpack.c.b16 %v1509, %v1506
    %v1546 = vpack.c.b16 %v1510, %v1507
    %v1547 = vpack.c.b16 %v1511, %v1508
    %v1548 = vpack.c.b16 %v1515, %v1512
    %v1549 = vpack.c.b16 %v1516, %v1513
    %v1550 = vpack.c.b16 %v1517, %v1514
    %v1551 = vpack.c.b16 %v1521, %v1518
    %v1552 = vpack.c.b16 %v1522, %v1519
    %v1553 = vpack.c.b16 %v1523, %v1520
    %v1554 = vpack.c.b16 %v1527, %v1524
    %v1555 = vpack.c.b16 %v1528, %v1525
    %v1556 = vpack.c.b16 %v1529, %v1526
    %v1557 = vpack.c.b16 %v1533, %v1530
    %v1558 = vpack.c.b16 %v1534, %v1531
    %v1559 = vpack.c.b16 %v1535, %v1532
    %1584 = vmatprep.subr.bf16.mxu0 %v1537
    %1585 = vmatpush1.bf16.msra.mxu0 %v1536
    %1586 = vmatprep.subr.bf16.mxu0 %v1540
    %1587 = vmatpush1.bf16.msra.mxu0 %v1539
    %1588 = vmatprep.subr.bf16.mxu0 %v1543
    %1589 = vmatpush1.bf16.msra.mxu0 %v1542
    %1590 = vmatprep.subr.bf16.mxu0 %v1546
    %1591 = vmatpush1.bf16.msra.mxu0 %v1545
    %1592 = vmatprep.subr.bf16.mxu0 %v1549
    %1593 = vmatpush1.bf16.msra.mxu0 %v1548
    %1594 = vmatprep.subr.bf16.mxu0 %v1552
    %1595 = vmatpush1.bf16.msra.mxu0 %v1551
    %1596 = vmatprep.subr.bf16.mxu0 %v1555
    %1597 = vmatpush1.bf16.msra.mxu0 %v1554
    %1598 = vmatprep.subr.bf16.mxu0 %v1558
    %1599 = vmatpush1.bf16.msra.mxu0 %v1557
    %1600 = vmatprep.subr.bf16.mxu0 0
    %1601 = vmatpush1.bf16.msra.mxu0 0
    %1602 = vmatprep.subr.bf16.mxu0 0
    %1603 = vmatpush1.bf16.msra.mxu0 0
    %1604 = vmatprep.subr.bf16.mxu0 0
    %1605 = vmatpush1.bf16.msra.mxu0 0
    %1606 = vmatprep.subr.bf16.mxu0 0
    %1607 = vmatpush1.bf16.msra.mxu0 0
    %1608 = vmatprep.subr.bf16.mxu0 0
    %1609 = vmatpush1.bf16.msra.mxu0 0
    %1610 = vmatprep.subr.bf16.mxu0 0
    %1611 = vmatpush1.bf16.msra.mxu0 0
    %1612 = vmatprep.subr.bf16.mxu0 0
    %1613 = vmatpush1.bf16.msra.mxu0 0
    %1614 = vmatprep.subr.bf16.mxu0 0
    %1615 = vmatpush1.bf16.msra.mxu0 0
    %1616 = vmatprep.mubr.bf16.mxu0 0
    %1617 = vmatmul.mubr.bf16.gmra.mrb[0].mxu0 %v1423
    %v1618 = vpop.f32.mrb[0].mxu0
    %v1619 = vadd.f32 0.0, %v1618
    %v1620 = vpop.f32.mrb[0].mxu0
    %v1621 = vadd.f32 0.0, %v1620
    %v1622 = vpop.f32.mrb[0].mxu0
    %v1623 = vpop.f32.mrb[0].mxu0
    %1624 = vdwg.mxu0
    %1625 = vmatprep.subr.bf16.mxu0 0
    %1626 = vmatpush1.bf16.msra.mxu0 %v1538
    %1627 = vmatprep.subr.bf16.mxu0 0
    %1628 = vmatpush1.bf16.msra.mxu0 %v1541
    %1629 = vmatprep.subr.bf16.mxu0 0
    %1630 = vmatpush1.bf16.msra.mxu0 %v1544
    %1631 = vmatprep.subr.bf16.mxu0 0
    %1632 = vmatpush1.bf16.msra.mxu0 %v1547
    %1633 = vmatprep.subr.bf16.mxu0 0
    %1634 = vmatpush1.bf16.msra.mxu0 %v1550
    %1635 = vmatprep.subr.bf16.mxu0 0
    %1636 = vmatpush1.bf16.msra.mxu0 %v1553
    %1637 = vmatprep.subr.bf16.mxu0 0
    %1638 = vmatpush1.bf16.msra.mxu0 %v1556
    %1639 = vmatprep.subr.bf16.mxu0 0
    %1640 = vmatpush1.bf16.msra.mxu0 %v1559
    %1641 = vmatprep.subr.bf16.mxu0 0
    %1642 = vmatpush1.bf16.msra.mxu0 0
    %1643 = vmatprep.subr.bf16.mxu0 0
    %1644 = vmatpush1.bf16.msra.mxu0 0
    %1645 = vmatprep.subr.bf16.mxu0 0
    %1646 = vmatpush1.bf16.msra.mxu0 0
    %1647 = vmatprep.subr.bf16.mxu0 0
    %1648 = vmatpush1.bf16.msra.mxu0 0
    %1649 = vmatprep.subr.bf16.mxu0 0
    %1650 = vmatpush1.bf16.msra.mxu0 0
    %1651 = vmatprep.subr.bf16.mxu0 0
    %1652 = vmatpush1.bf16.msra.mxu0 0
    %1653 = vmatprep.subr.bf16.mxu0 0
    %1654 = vmatpush1.bf16.msra.mxu0 0
    %1655 = vmatprep.subr.bf16.mxu0 0
    %1656 = vmatpush1.bf16.msra.mxu0 0
    %1657 = vmatprep.mubr.bf16.mxu0 0
    %1658 = vmatmul.mubr.bf16.gmra.mrb[0].mxu0 %v1423
    %v1659 = vpop.f32.mrb[0].mxu0
    %v1660 = vadd.f32 0.0, %v1659
    %v1661 = vpop.f32.mrb[0].mxu0
    %v1662 = vpop.f32.mrb[0].mxu0
    %v1663 = vpop.f32.mrb[0].mxu0
    %1664 = vdwg.mxu0
    %v1665 = vld [vmem:[#allocation2] sm:$0xc0]
    %v1666 = vld [vmem:[#allocation2 + $0x8] sm:$0xc0]
    %v1667 = vld [vmem:[#allocation3 + $0x20] sm:$0xc]
    %v1668 = vld [vmem:[#allocation3 + $0x28] sm:$0xc]
    %v1670 = vrot.slane %v1619, 2
    %v1672 = vadd.f32 %v1665, %v1670
    %v1673 = vxor.u32 %v1672, 2147483648
    %v1674 = vmul.f32 %v1673, 1.442695
    %v1675 = vpow.pop %v1674
    %v1676 = vadd.f32 %v1675, 1.0
    %v1677 = vrcp.pop %v1676
    %v1678 = vmul.f32 1.0, %v1677
    %v1680 = vrot.slane %v1621, 6
    %v1682 = vadd.f32 %v1667, %v1680
    %v1683 = vxor.u32 %v1682, 2147483648
    %v1684 = vmul.f32 %v1683, 1.442695
    %v1685 = vpow.pop %v1684
    %v1686 = vadd.f32 %v1685, 1.0
    %v1687 = vrcp.pop %v1686
    %v1688 = vmul.f32 1.0, %v1687
    %v1689 = vadd.f32 %v1660, %v365
    %v1691 = vrot.slane %v1689, 2
    %v1693 = vmul.f32 %v1678, %v1691
    %v1694 = vadd.f32 %v1666, %v1693
    %v1695 = vtanh.pop %v1694
    %v1696 = vadd.f32 %v1660, %v642
    %v1698 = vrot.slane %v1696, 6
    %1699 = vrot.lane.b32.xlu0 %v1698, 64
    %v1700 = vpop.permute.xlu0 %1699
    %v1702 = vmul.f32 %v1688, %v1700
    %v1703 = vadd.f32 %v1668, %v1702
    %v1704 = vtanh.pop %v1703
    %s1705 = sadd.s32 %s374, 3
    %v1706 = vstv %s1705
    %vm1707 = vcmp.lt.s32.totalorder %v1706, %v359
    %v1708 = vsub.f32 1.0, %v1678
    %1710 = vrot.lane.b32.xlu0 %v1695, 64
    %v1711 = vpop.permute.xlu0 %1710
    %v1713 = vmul.f32 %v1708, %v1711
    %v1715 = vrot.slane %v1407, 2
    %1716 = vrot.lane.b32.xlu0 %v1715, 64
    %v1717 = vpop.permute.xlu0 %1716
    %v1719 = vmul.f32 %v1678, %v1717
    %v1720 = vadd.f32 %v1713, %v1719
    %v1721 = vsel %vm1707, 1, 0
    %1722 = vset.pattern.permute.xlu0 0
    %1723 = vperm.xlu0 %1722, %v1721
    %v1724 = vpop.permute.xlu0 %1723
    %vm1725 = vcmp.eq.s32.totalorder %v1724, 1
    %v1727 = vrot.slane %v1720, 6
    %1728 = vrot.lane.b32.xlu0 %v1727, 64
    %v1729 = vpop.permute.xlu0 %1728
    %v1731 = vsel %vm1725, %v1729, %v1407
    %s1732 = sadd.s32 %s376, 9
    %v1733 = vstv %s1732
    %vm1734 = vcmp.lt.s32.totalorder %v1733, %v359
    %v1735 = vsub.f32 1.0, %v1688
    %1737 = vrot.lane.b32.xlu0 %v1704, 64
    %v1738 = vpop.permute.xlu0 %1737
    %v1740 = vmul.f32 %v1735, %v1738
    %v1741 = vrot.slane %v1407, 6
    %v1743 = vmul.f32 %v1688, %v1741
    %v1744 = vadd.f32 %v1740, %v1743
    %v1745 = vsel %vm1734, 1, 0
    %1746 = vset.pattern.permute.xlu0 0
    %1747 = vperm.xlu0 %1746, %v1745
    %v1748 = vpop.permute.xlu0 %1747
    %vm1749 = vcmp.eq.s32.totalorder %v1748, 1
    %v1751 = vrot.slane %v1744, 2
    %1752 = vrot.lane.b32.xlu0 %v1751, 64
    %v1753 = vpop.permute.xlu0 %1752
    %1755 = vrot.lane.b32.xlu0 %v1407, 64
    %v1756 = vpop.permute.xlu0 %1755
    %v1758 = vsel %vm1749, %v1753, %v1756
    %1760 = vrot.lane.b32.xlu0 %v1758, 64
    %v1761 = vpop.permute.xlu0 %1760
    %v1763 = vsel %vm233, %v1731, %v1761
    %v1764 = vpack.c.bf16 %v1731, %v1731
    %v1766 = vunpack.c.l.b16 %v1764
    %v1767 = vpack.c.b16 %v1766, %v1766
    %v1768 = vrot.slane %v1767, 5
    %1770 = vst.msk [vmem:[#allocation14] sm:$0x8] %vm1066, %v1768
    %v1771 = vpack.c.bf16 %v1758, %v1758
    %v1773 = vunpack.c.l.b16 %v1771
    %v1774 = vpack.c.b16 %v1773, %v1773
    %v1775 = vrot.slane %v1774, 7
    %1777 = vst.msk [vmem:[#allocation15 + $0x8] sm:$0x2] %vm1058, %v1775
    %v1778 = vpack.c.bf16 %v1763, %v1763
    %v1779 = vld [vmem:[#allocation13] sm:$0xff]
    %v1780 = vld [vmem:[#allocation13 + $0x8] sm:$0xf]
    %v1781 = vld [vmem:[#allocation13 + $0xc] sm:$0xff]
    %v1782 = vld [vmem:[#allocation13 + $0x14] sm:$0xf]
    %v1783 = vld [vmem:[#allocation13 + $0x18] sm:$0xff]
    %v1784 = vld [vmem:[#allocation13 + $0x20] sm:$0xf]
    %v1785 = vld [vmem:[#allocation13 + $0x24] sm:$0xff]
    %v1786 = vld [vmem:[#allocation13 + $0x2c] sm:$0xf]
    %v1787 = vld [vmem:[#allocation13 + $0x30] sm:$0xff]
    %v1788 = vld [vmem:[#allocation13 + $0x38] sm:$0xf]
    %v1789 = vld [vmem:[#allocation13 + $0x3c] sm:$0xff]
    %v1790 = vld [vmem:[#allocation13 + $0x44] sm:$0xf]
    %v1791 = vld [vmem:[#allocation13 + $0x48] sm:$0xff]
    %v1792 = vld [vmem:[#allocation13 + $0x50] sm:$0xf]
    %v1793 = vld [vmem:[#allocation13 + $0x54] sm:$0xff]
    %v1794 = vld [vmem:[#allocation13 + $0x5c] sm:$0xf]
    %v1795 = vld [vmem:[#allocation13 + $0x60] sm:$0xff]
    %v1796 = vld [vmem:[#allocation13 + $0x68] sm:$0xf]
    %v1797 = vld [vmem:[#allocation13 + $0x6c] sm:$0xff]
    %v1798 = vld [vmem:[#allocation13 + $0x74] sm:$0xf]
    %v1799 = vld [vmem:[#allocation13 + $0x78] sm:$0xff]
    %v1800 = vld [vmem:[#allocation13 + $0x80] sm:$0xf]
    %v1801 = vld [vmem:[#allocation13 + $0x84] sm:$0xff]
    %v1802 = vld [vmem:[#allocation13 + $0x8c] sm:$0xf]
    %v1803 = vld [vmem:[#allocation13 + $0x90] sm:$0xff]
    %v1804 = vld [vmem:[#allocation13 + $0x98] sm:$0xf]
    %v1805 = vld [vmem:[#allocation13 + $0x9c] sm:$0xff]
    %v1806 = vld [vmem:[#allocation13 + $0xa4] sm:$0xf]
    %v1807 = vld [vmem:[#allocation13 + $0xa8] sm:$0xff]
    %v1808 = vld [vmem:[#allocation13 + $0xb0] sm:$0xf]
    %v1809 = vld [vmem:[#allocation13 + $0xb4] sm:$0xff]
    %v1810 = vld [vmem:[#allocation13 + $0xbc] sm:$0xf]
    %v1843 = vunpack.c.l.b16 %v1779
    %v1844 = vunpack.c.h.b16 %v1779
    %v1845 = vunpack.c.l.b16 %v1780
    %v1846 = vunpack.c.l.b16 %v1781
    %v1847 = vunpack.c.h.b16 %v1781
    %v1848 = vunpack.c.l.b16 %v1782
    %v1849 = vunpack.c.l.b16 %v1783
    %v1850 = vunpack.c.h.b16 %v1783
    %v1851 = vunpack.c.l.b16 %v1784
    %v1852 = vunpack.c.l.b16 %v1785
    %v1853 = vunpack.c.h.b16 %v1785
    %v1854 = vunpack.c.l.b16 %v1786
    %v1855 = vunpack.c.l.b16 %v1787
    %v1856 = vunpack.c.h.b16 %v1787
    %v1857 = vunpack.c.l.b16 %v1788
    %v1858 = vunpack.c.l.b16 %v1789
    %v1859 = vunpack.c.h.b16 %v1789
    %v1860 = vunpack.c.l.b16 %v1790
    %v1861 = vunpack.c.l.b16 %v1791
    %v1862 = vunpack.c.h.b16 %v1791
    %v1863 = vunpack.c.l.b16 %v1792
    %v1864 = vunpack.c.l.b16 %v1793
    %v1865 = vunpack.c.h.b16 %v1793
    %v1866 = vunpack.c.l.b16 %v1794
    %v1867 = vunpack.c.l.b16 %v1795
    %v1868 = vunpack.c.h.b16 %v1795
    %v1869 = vunpack.c.l.b16 %v1796
    %v1870 = vunpack.c.l.b16 %v1797
    %v1871 = vunpack.c.h.b16 %v1797
    %v1872 = vunpack.c.l.b16 %v1798
    %v1873 = vunpack.c.l.b16 %v1799
    %v1874 = vunpack.c.h.b16 %v1799
    %v1875 = vunpack.c.l.b16 %v1800
    %v1876 = vunpack.c.l.b16 %v1801
    %v1877 = vunpack.c.h.b16 %v1801
    %v1878 = vunpack.c.l.b16 %v1802
    %v1879 = vunpack.c.l.b16 %v1803
    %v1880 = vunpack.c.h.b16 %v1803
    %v1881 = vunpack.c.l.b16 %v1804
    %v1882 = vunpack.c.l.b16 %v1805
    %v1883 = vunpack.c.h.b16 %v1805
    %v1884 = vunpack.c.l.b16 %v1806
    %v1885 = vunpack.c.l.b16 %v1807
    %v1886 = vunpack.c.h.b16 %v1807
    %v1887 = vunpack.c.l.b16 %v1808
    %v1888 = vunpack.c.l.b16 %v1809
    %v1889 = vunpack.c.h.b16 %v1809
    %v1890 = vunpack.c.l.b16 %v1810
    %v1891 = vpack.c.b16 %v1846, %v1843
    %v1892 = vpack.c.b16 %v1847, %v1844
    %v1893 = vpack.c.b16 %v1848, %v1845
    %v1894 = vpack.c.b16 %v1852, %v1849
    %v1895 = vpack.c.b16 %v1853, %v1850
    %v1896 = vpack.c.b16 %v1854, %v1851
    %v1897 = vpack.c.b16 %v1858, %v1855
    %v1898 = vpack.c.b16 %v1859, %v1856
    %v1899 = vpack.c.b16 %v1860, %v1857
    %v1900 = vpack.c.b16 %v1864, %v1861
    %v1901 = vpack.c.b16 %v1865, %v1862
    %v1902 = vpack.c.b16 %v1866, %v1863
    %v1903 = vpack.c.b16 %v1870, %v1867
    %v1904 = vpack.c.b16 %v1871, %v1868
    %v1905 = vpack.c.b16 %v1872, %v1869
    %v1906 = vpack.c.b16 %v1876, %v1873
    %v1907 = vpack.c.b16 %v1877, %v1874
    %v1908 = vpack.c.b16 %v1878, %v1875
    %v1909 = vpack.c.b16 %v1882, %v1879
    %v1910 = vpack.c.b16 %v1883, %v1880
    %v1911 = vpack.c.b16 %v1884, %v1881
    %v1912 = vpack.c.b16 %v1888, %v1885
    %v1913 = vpack.c.b16 %v1889, %v1886
    %v1914 = vpack.c.b16 %v1890, %v1887
    %1939 = vmatprep.subr.bf16.mxu0 %v1892
    %1940 = vmatpush1.bf16.msra.mxu0 %v1891
    %1941 = vmatprep.subr.bf16.mxu0 %v1895
    %1942 = vmatpush1.bf16.msra.mxu0 %v1894
    %1943 = vmatprep.subr.bf16.mxu0 %v1898
    %1944 = vmatpush1.bf16.msra.mxu0 %v1897
    %1945 = vmatprep.subr.bf16.mxu0 %v1901
    %1946 = vmatpush1.bf16.msra.mxu0 %v1900
    %1947 = vmatprep.subr.bf16.mxu0 %v1904
    %1948 = vmatpush1.bf16.msra.mxu0 %v1903
    %1949 = vmatprep.subr.bf16.mxu0 %v1907
    %1950 = vmatpush1.bf16.msra.mxu0 %v1906
    %1951 = vmatprep.subr.bf16.mxu0 %v1910
    %1952 = vmatpush1.bf16.msra.mxu0 %v1909
    %1953 = vmatprep.subr.bf16.mxu0 %v1913
    %1954 = vmatpush1.bf16.msra.mxu0 %v1912
    %1955 = vmatprep.subr.bf16.mxu0 0
    %1956 = vmatpush1.bf16.msra.mxu0 0
    %1957 = vmatprep.subr.bf16.mxu0 0
    %1958 = vmatpush1.bf16.msra.mxu0 0
    %1959 = vmatprep.subr.bf16.mxu0 0
    %1960 = vmatpush1.bf16.msra.mxu0 0
    %1961 = vmatprep.subr.bf16.mxu0 0
    %1962 = vmatpush1.bf16.msra.mxu0 0
    %1963 = vmatprep.subr.bf16.mxu0 0
    %1964 = vmatpush1.bf16.msra.mxu0 0
    %1965 = vmatprep.subr.bf16.mxu0 0
    %1966 = vmatpush1.bf16.msra.mxu0 0
    %1967 = vmatprep.subr.bf16.mxu0 0
    %1968 = vmatpush1.bf16.msra.mxu0 0
    %1969 = vmatprep.subr.bf16.mxu0 0
    %1970 = vmatpush1.bf16.msra.mxu0 0
    %1971 = vmatprep.mubr.bf16.mxu0 0
    %1972 = vmatmul.mubr.bf16.gmra.mrb[0].mxu0 %v1778
    %v1973 = vpop.f32.mrb[0].mxu0
    %v1974 = vadd.f32 0.0, %v1973
    %v1975 = vpop.f32.mrb[0].mxu0
    %v1976 = vadd.f32 0.0, %v1975
    %v1977 = vpop.f32.mrb[0].mxu0
    %v1978 = vpop.f32.mrb[0].mxu0
    %1979 = vdwg.mxu0
    %1980 = vmatprep.subr.bf16.mxu0 0
    %1981 = vmatpush1.bf16.msra.mxu0 %v1893
    %1982 = vmatprep.subr.bf16.mxu0 0
    %1983 = vmatpush1.bf16.msra.mxu0 %v1896
    %1984 = vmatprep.subr.bf16.mxu0 0
    %1985 = vmatpush1.bf16.msra.mxu0 %v1899
    %1986 = vmatprep.subr.bf16.mxu0 0
    %1987 = vmatpush1.bf16.msra.mxu0 %v1902
    %1988 = vmatprep.subr.bf16.mxu0 0
    %1989 = vmatpush1.bf16.msra.mxu0 %v1905
    %1990 = vmatprep.subr.bf16.mxu0 0
    %1991 = vmatpush1.bf16.msra.mxu0 %v1908
    %1992 = vmatprep.subr.bf16.mxu0 0
    %1993 = vmatpush1.bf16.msra.mxu0 %v1911
    %1994 = vmatprep.subr.bf16.mxu0 0
    %1995 = vmatpush1.bf16.msra.mxu0 %v1914
    %1996 = vmatprep.subr.bf16.mxu0 0
    %1997 = vmatpush1.bf16.msra.mxu0 0
    %1998 = vmatprep.subr.bf16.mxu0 0
    %1999 = vmatpush1.bf16.msra.mxu0 0
    %2000 = vmatprep.subr.bf16.mxu0 0
    %2001 = vmatpush1.bf16.msra.mxu0 0
    %2002 = vmatprep.subr.bf16.mxu0 0
    %2003 = vmatpush1.bf16.msra.mxu0 0
    %2004 = vmatprep.subr.bf16.mxu0 0
    %2005 = vmatpush1.bf16.msra.mxu0 0
    %2006 = vmatprep.subr.bf16.mxu0 0
    %2007 = vmatpush1.bf16.msra.mxu0 0
    %2008 = vmatprep.subr.bf16.mxu0 0
    %2009 = vmatpush1.bf16.msra.mxu0 0
    %2010 = vmatprep.subr.bf16.mxu0 0
    %2011 = vmatpush1.bf16.msra.mxu0 0
    %2012 = vmatprep.mubr.bf16.mxu0 0
    %2013 = vmatmul.mubr.bf16.gmra.mrb[0].mxu0 %v1778
    %v2014 = vpop.f32.mrb[0].mxu0
    %v2015 = vadd.f32 0.0, %v2014
    %v2016 = vpop.f32.mrb[0].mxu0
    %v2017 = vpop.f32.mrb[0].mxu0
    %v2018 = vpop.f32.mrb[0].mxu0
    %2019 = vdwg.mxu0
    %v2020 = vld [vmem:[#allocation2 + $0x10] sm:$0x3]
    %v2021 = vld [vmem:[#allocation2 + $0x18] sm:$0x3]
    %v2022 = vld [vmem:[#allocation3 + $0x20] sm:$0x3]
    %v2023 = vld [vmem:[#allocation3 + $0x28] sm:$0x3]
    %v2024 = vadd.f32 %v2020, %v1974
    %v2025 = vxor.u32 %v2024, 2147483648
    %v2026 = vmul.f32 %v2025, 1.442695
    %v2027 = vpow.pop %v2026
    %v2028 = vadd.f32 %v2027, 1.0
    %v2029 = vrcp.pop %v2028
    %v2030 = vmul.f32 1.0, %v2029
    %v2031 = vadd.f32 %v2022, %v1976
    %v2032 = vxor.u32 %v2031, 2147483648
    %v2033 = vmul.f32 %v2032, 1.442695
    %v2034 = vpow.pop %v2033
    %v2035 = vadd.f32 %v2034, 1.0
    %v2036 = vrcp.pop %v2035
    %v2037 = vmul.f32 1.0, %v2036
    %v2038 = vadd.f32 %v2015, %v365
    %v2039 = vmul.f32 %v2030, %v2038
    %v2040 = vadd.f32 %v2021, %v2039
    %v2041 = vtanh.pop %v2040
    %v2042 = vadd.f32 %v2015, %v642
    %2044 = vrot.lane.b32.xlu0 %v2042, 64
    %v2045 = vpop.permute.xlu0 %2044
    %v2047 = vmul.f32 %v2037, %v2045
    %v2048 = vadd.f32 %v2023, %v2047
    %v2049 = vtanh.pop %v2048
    %s2050 = sadd.s32 %s374, 4
    %v2051 = vstv %s2050
    %vm2052 = vcmp.lt.s32.totalorder %v2051, %v359
    %v2053 = vsub.f32 1.0, %v2030
    %2055 = vrot.lane.b32.xlu0 %v2041, 64
    %v2056 = vpop.permute.xlu0 %2055
    %v2058 = vmul.f32 %v2053, %v2056
    %2060 = vrot.lane.b32.xlu0 %v1763, 64
    %v2061 = vpop.permute.xlu0 %2060
    %v2063 = vmul.f32 %v2030, %v2061
    %v2064 = vadd.f32 %v2058, %v2063
    %v2065 = vsel %vm2052, 1, 0
    %2066 = vset.pattern.permute.xlu0 0
    %2067 = vperm.xlu0 %2066, %v2065
    %v2068 = vpop.permute.xlu0 %2067
    %vm2069 = vcmp.eq.s32.totalorder %v2068, 1
    %v2070 = vsel %vm2069, %v2064, %v2061
    %s2071 = sadd.s32 %s376, 8
    %v2072 = vstv %s2071
    %vm2073 = vcmp.lt.s32.totalorder %v2072, %v359
    %v2074 = vsub.f32 1.0, %v2037
    %2076 = vrot.lane.b32.xlu0 %v2049, 64
    %v2077 = vpop.permute.xlu0 %2076
    %v2079 = vmul.f32 %v2074, %v2077
    %v2080 = vmul.f32 %v2037, %v1763
    %v2081 = vadd.f32 %v2079, %v2080
    %v2082 = vsel %vm2073, 1, 0
    %2083 = vset.pattern.permute.xlu0 0
    %2084 = vperm.xlu0 %2083, %v2082
    %v2085 = vpop.permute.xlu0 %2084
    %vm2086 = vcmp.eq.s32.totalorder %v2085, 1
    %v2087 = vsel %vm2086, %v2081, %v1763
    %2089 = vrot.lane.b32.xlu0 %v2070, 64
    %v2090 = vpop.permute.xlu0 %2089
    %v2092 = vsel %vm233, %v2090, %v2087
    %v2093 = vpack.c.bf16 %v2070, %v2070
    %v2095 = vunpack.c.l.b16 %v2093
    %v2096 = vpack.c.b16 %v2095, %v2095
    %2097 = vrot.lane.b32.xlu0 %v2096, 64
    %v2098 = vpop.permute.xlu0 %2097
    %2100 = vst.msk [vmem:[#allocation14 + $0x4] sm:$0x1] %vm701, %v2098
    %v2101 = vpack.c.bf16 %v2087, %v2087
    %v2103 = vunpack.c.l.b16 %v2101
    %v2104 = vpack.c.b16 %v2103, %v2103
    %2105 = vrot.lane.b32.xlu0 %v2104, 64
    %v2106 = vpop.permute.xlu0 %2105
    %2108 = vst.msk [vmem:[#allocation15 + $0x8] sm:$0x1] %vm701, %v2106
    %v2109 = vpack.c.bf16 %v2092, %v2092
    %v2110 = vld [vmem:[#allocation13] sm:$0xff]
    %v2111 = vld [vmem:[#allocation13 + $0x8] sm:$0xf]
    %v2112 = vld [vmem:[#allocation13 + $0xc] sm:$0xff]
    %v2113 = vld [vmem:[#allocation13 + $0x14] sm:$0xf]
    %v2114 = vld [vmem:[#allocation13 + $0x18] sm:$0xff]
    %v2115 = vld [vmem:[#allocation13 + $0x20] sm:$0xf]
    %v2116 = vld [vmem:[#allocation13 + $0x24] sm:$0xff]
    %v2117 = vld [vmem:[#allocation13 + $0x2c] sm:$0xf]
    %v2118 = vld [vmem:[#allocation13 + $0x30] sm:$0xff]
    %v2119 = vld [vmem:[#allocation13 + $0x38] sm:$0xf]
    %v2120 = vld [vmem:[#allocation13 + $0x3c] sm:$0xff]
    %v2121 = vld [vmem:[#allocation13 + $0x44] sm:$0xf]
    %v2122 = vld [vmem:[#allocation13 + $0x48] sm:$0xff]
    %v2123 = vld [vmem:[#allocation13 + $0x50] sm:$0xf]
    %v2124 = vld [vmem:[#allocation13 + $0x54] sm:$0xff]
    %v2125 = vld [vmem:[#allocation13 + $0x5c] sm:$0xf]
    %v2126 = vld [vmem:[#allocation13 + $0x60] sm:$0xff]
    %v2127 = vld [vmem:[#allocation13 + $0x68] sm:$0xf]
    %v2128 = vld [vmem:[#allocation13 + $0x6c] sm:$0xff]
    %v2129 = vld [vmem:[#allocation13 + $0x74] sm:$0xf]
    %v2130 = vld [vmem:[#allocation13 + $0x78] sm:$0xff]
    %v2131 = vld [vmem:[#allocation13 + $0x80] sm:$0xf]
    %v2132 = vld [vmem:[#allocation13 + $0x84] sm:$0xff]
    %v2133 = vld [vmem:[#allocation13 + $0x8c] sm:$0xf]
    %v2134 = vld [vmem:[#allocation13 + $0x90] sm:$0xff]
    %v2135 = vld [vmem:[#allocation13 + $0x98] sm:$0xf]
    %v2136 = vld [vmem:[#allocation13 + $0x9c] sm:$0xff]
    %v2137 = vld [vmem:[#allocation13 + $0xa4] sm:$0xf]
    %v2138 = vld [vmem:[#allocation13 + $0xa8] sm:$0xff]
    %v2139 = vld [vmem:[#allocation13 + $0xb0] sm:$0xf]
    %v2140 = vld [vmem:[#allocation13 + $0xb4] sm:$0xff]
    %v2141 = vld [vmem:[#allocation13 + $0xbc] sm:$0xf]
    %v2174 = vunpack.c.l.b16 %v2110
    %v2175 = vunpack.c.h.b16 %v2110
    %v2176 = vunpack.c.l.b16 %v2111
    %v2177 = vunpack.c.l.b16 %v2112
    %v2178 = vunpack.c.h.b16 %v2112
    %v2179 = vunpack.c.l.b16 %v2113
    %v2180 = vunpack.c.l.b16 %v2114
    %v2181 = vunpack.c.h.b16 %v2114
    %v2182 = vunpack.c.l.b16 %v2115
    %v2183 = vunpack.c.l.b16 %v2116
    %v2184 = vunpack.c.h.b16 %v2116
    %v2185 = vunpack.c.l.b16 %v2117
    %v2186 = vunpack.c.l.b16 %v2118
    %v2187 = vunpack.c.h.b16 %v2118
    %v2188 = vunpack.c.l.b16 %v2119
    %v2189 = vunpack.c.l.b16 %v2120
    %v2190 = vunpack.c.h.b16 %v2120
    %v2191 = vunpack.c.l.b16 %v2121
    %v2192 = vunpack.c.l.b16 %v2122
    %v2193 = vunpack.c.h.b16 %v2122
    %v2194 = vunpack.c.l.b16 %v2123
    %v2195 = vunpack.c.l.b16 %v2124
    %v2196 = vunpack.c.h.b16 %v2124
    %v2197 = vunpack.c.l.b16 %v2125
    %v2198 = vunpack.c.l.b16 %v2126
    %v2199 = vunpack.c.h.b16 %v2126
    %v2200 = vunpack.c.l.b16 %v2127
    %v2201 = vunpack.c.l.b16 %v2128
    %v2202 = vunpack.c.h.b16 %v2128
    %v2203 = vunpack.c.l.b16 %v2129
    %v2204 = vunpack.c.l.b16 %v2130
    %v2205 = vunpack.c.h.b16 %v2130
    %v2206 = vunpack.c.l.b16 %v2131
    %v2207 = vunpack.c.l.b16 %v2132
    %v2208 = vunpack.c.h.b16 %v2132
    %v2209 = vunpack.c.l.b16 %v2133
    %v2210 = vunpack.c.l.b16 %v2134
    %v2211 = vunpack.c.h.b16 %v2134
    %v2212 = vunpack.c.l.b16 %v2135
    %v2213 = vunpack.c.l.b16 %v2136
    %v2214 = vunpack.c.h.b16 %v2136
    %v2215 = vunpack.c.l.b16 %v2137
    %v2216 = vunpack.c.l.b16 %v2138
    %v2217 = vunpack.c.h.b16 %v2138
    %v2218 = vunpack.c.l.b16 %v2139
    %v2219 = vunpack.c.l.b16 %v2140
    %v2220 = vunpack.c.h.b16 %v2140
    %v2221 = vunpack.c.l.b16 %v2141
    %v2222 = vpack.c.b16 %v2177, %v2174
    %v2223 = vpack.c.b16 %v2178, %v2175
    %v2224 = vpack.c.b16 %v2179, %v2176
    %v2225 = vpack.c.b16 %v2183, %v2180
    %v2226 = vpack.c.b16 %v2184, %v2181
    %v2227 = vpack.c.b16 %v2185, %v2182
    %v2228 = vpack.c.b16 %v2189, %v2186
    %v2229 = vpack.c.b16 %v2190, %v2187
    %v2230 = vpack.c.b16 %v2191, %v2188
    %v2231 = vpack.c.b16 %v2195, %v2192
    %v2232 = vpack.c.b16 %v2196, %v2193
    %v2233 = vpack.c.b16 %v2197, %v2194
    %v2234 = vpack.c.b16 %v2201, %v2198
    %v2235 = vpack.c.b16 %v2202, %v2199
    %v2236 = vpack.c.b16 %v2203, %v2200
    %v2237 = vpack.c.b16 %v2207, %v2204
    %v2238 = vpack.c.b16 %v2208, %v2205
    %v2239 = vpack.c.b16 %v2209, %v2206
    %v2240 = vpack.c.b16 %v2213, %v2210
    %v2241 = vpack.c.b16 %v2214, %v2211
    %v2242 = vpack.c.b16 %v2215, %v2212
    %v2243 = vpack.c.b16 %v2219, %v2216
    %v2244 = vpack.c.b16 %v2220, %v2217
    %v2245 = vpack.c.b16 %v2221, %v2218
    %2270 = vmatprep.subr.bf16.mxu0 %v2223
    %2271 = vmatpush1.bf16.msra.mxu0 %v2222
    %2272 = vmatprep.subr.bf16.mxu0 %v2226
    %2273 = vmatpush1.bf16.msra.mxu0 %v2225
    %2274 = vmatprep.subr.bf16.mxu0 %v2229
    %2275 = vmatpush1.bf16.msra.mxu0 %v2228
    %2276 = vmatprep.subr.bf16.mxu0 %v2232
    %2277 = vmatpush1.bf16.msra.mxu0 %v2231
    %2278 = vmatprep.subr.bf16.mxu0 %v2235
    %2279 = vmatpush1.bf16.msra.mxu0 %v2234
    %2280 = vmatprep.subr.bf16.mxu0 %v2238
    %2281 = vmatpush1.bf16.msra.mxu0 %v2237
    %2282 = vmatprep.subr.bf16.mxu0 %v2241
    %2283 = vmatpush1.bf16.msra.mxu0 %v2240
    %2284 = vmatprep.subr.bf16.mxu0 %v2244
    %2285 = vmatpush1.bf16.msra.mxu0 %v2243
    %2286 = vmatprep.subr.bf16.mxu0 0
    %2287 = vmatpush1.bf16.msra.mxu0 0
    %2288 = vmatprep.subr.bf16.mxu0 0
    %2289 = vmatpush1.bf16.msra.mxu0 0
    %2290 = vmatprep.subr.bf16.mxu0 0
    %2291 = vmatpush1.bf16.msra.mxu0 0
    %2292 = vmatprep.subr.bf16.mxu0 0
    %2293 = vmatpush1.bf16.msra.mxu0 0
    %2294 = vmatprep.subr.bf16.mxu0 0
    %2295 = vmatpush1.bf16.msra.mxu0 0
    %2296 = vmatprep.subr.bf16.mxu0 0
    %2297 = vmatpush1.bf16.msra.mxu0 0
    %2298 = vmatprep.subr.bf16.mxu0 0
    %2299 = vmatpush1.bf16.msra.mxu0 0
    %2300 = vmatprep.subr.bf16.mxu0 0
    %2301 = vmatpush1.bf16.msra.mxu0 0
    %2302 = vmatprep.mubr.bf16.mxu0 0
    %2303 = vmatmul.mubr.bf16.gmra.mrb[0].mxu0 %v2109
    %v2304 = vpop.f32.mrb[0].mxu0
    %v2305 = vadd.f32 0.0, %v2304
    %v2306 = vpop.f32.mrb[0].mxu0
    %v2307 = vadd.f32 0.0, %v2306
    %v2308 = vpop.f32.mrb[0].mxu0
    %v2309 = vpop.f32.mrb[0].mxu0
    %2310 = vdwg.mxu0
    %2311 = vmatprep.subr.bf16.mxu0 0
    %2312 = vmatpush1.bf16.msra.mxu0 %v2224
    %2313 = vmatprep.subr.bf16.mxu0 0
    %2314 = vmatpush1.bf16.msra.mxu0 %v2227
    %2315 = vmatprep.subr.bf16.mxu0 0
    %2316 = vmatpush1.bf16.msra.mxu0 %v2230
    %2317 = vmatprep.subr.bf16.mxu0 0
    %2318 = vmatpush1.bf16.msra.mxu0 %v2233
    %2319 = vmatprep.subr.bf16.mxu0 0
    %2320 = vmatpush1.bf16.msra.mxu0 %v2236
    %2321 = vmatprep.subr.bf16.mxu0 0
    %2322 = vmatpush1.bf16.msra.mxu0 %v2239
    %2323 = vmatprep.subr.bf16.mxu0 0
    %2324 = vmatpush1.bf16.msra.mxu0 %v2242
    %2325 = vmatprep.subr.bf16.mxu0 0
    %2326 = vmatpush1.bf16.msra.mxu0 %v2245
    %2327 = vmatprep.subr.bf16.mxu0 0
    %2328 = vmatpush1.bf16.msra.mxu0 0
    %2329 = vmatprep.subr.bf16.mxu0 0
    %2330 = vmatpush1.bf16.msra.mxu0 0
    %2331 = vmatprep.subr.bf16.mxu0 0
    %2332 = vmatpush1.bf16.msra.mxu0 0
    %2333 = vmatprep.subr.bf16.mxu0 0
    %2334 = vmatpush1.bf16.msra.mxu0 0
    %2335 = vmatprep.subr.bf16.mxu0 0
    %2336 = vmatpush1.bf16.msra.mxu0 0
    %2337 = vmatprep.subr.bf16.mxu0 0
    %2338 = vmatpush1.bf16.msra.mxu0 0
    %2339 = vmatprep.subr.bf16.mxu0 0
    %2340 = vmatpush1.bf16.msra.mxu0 0
    %2341 = vmatprep.subr.bf16.mxu0 0
    %2342 = vmatpush1.bf16.msra.mxu0 0
    %2343 = vmatprep.mubr.bf16.mxu0 0
    %2344 = vmatmul.mubr.bf16.gmra.mrb[0].mxu0 %v2109
    %v2345 = vpop.f32.mrb[0].mxu0
    %v2346 = vadd.f32 0.0, %v2345
    %v2347 = vpop.f32.mrb[0].mxu0
    %v2348 = vpop.f32.mrb[0].mxu0
    %v2349 = vpop.f32.mrb[0].mxu0
    %2350 = vdwg.mxu0
    %v2351 = vld [vmem:[#allocation2 + $0x10] sm:$0xc]
    %v2352 = vld [vmem:[#allocation2 + $0x18] sm:$0xc]
    %v2353 = vld [vmem:[#allocation3 + $0x10] sm:$0xc0]
    %v2354 = vld [vmem:[#allocation3 + $0x18] sm:$0xc0]
    %v2356 = vrot.slane %v2305, 6
    %v2358 = vadd.f32 %v2351, %v2356
    %v2359 = vxor.u32 %v2358, 2147483648
    %v2360 = vmul.f32 %v2359, 1.442695
    %v2361 = vpow.pop %v2360
    %v2362 = vadd.f32 %v2361, 1.0
    %v2363 = vrcp.pop %v2362
    %v2364 = vmul.f32 1.0, %v2363
    %v2366 = vrot.slane %v2307, 2
    %v2368 = vadd.f32 %v2353, %v2366
    %v2369 = vxor.u32 %v2368, 2147483648
    %v2370 = vmul.f32 %v2369, 1.442695
    %v2371 = vpow.pop %v2370
    %v2372 = vadd.f32 %v2371, 1.0
    %v2373 = vrcp.pop %v2372
    %v2374 = vmul.f32 1.0, %v2373
    %v2375 = vadd.f32 %v2346, %v365
    %v2377 = vrot.slane %v2375, 6
    %v2379 = vmul.f32 %v2364, %v2377
    %v2380 = vadd.f32 %v2352, %v2379
    %v2381 = vtanh.pop %v2380
    %v2382 = vadd.f32 %v2346, %v642
    %v2384 = vrot.slane %v2382, 2
    %2385 = vrot.lane.b32.xlu0 %v2384, 64
    %v2386 = vpop.permute.xlu0 %2385
    %v2388 = vmul.f32 %v2374, %v2386
    %v2389 = vadd.f32 %v2354, %v2388
    %v2390 = vtanh.pop %v2389
    %s2391 = sadd.s32 %s374, 5
    %v2392 = vstv %s2391
    %vm2393 = vcmp.lt.s32.totalorder %v2392, %v359
    %v2394 = vsub.f32 1.0, %v2364
    %2396 = vrot.lane.b32.xlu0 %v2381, 64
    %v2397 = vpop.permute.xlu0 %2396
    %v2399 = vmul.f32 %v2394, %v2397
    %v2401 = vrot.slane %v2092, 6
    %2402 = vrot.lane.b32.xlu0 %v2401, 64
    %v2403 = vpop.permute.xlu0 %2402
    %v2405 = vmul.f32 %v2364, %v2403
    %v2406 = vadd.f32 %v2399, %v2405
    %v2407 = vsel %vm2393, 1, 0
    %2408 = vset.pattern.permute.xlu0 0
    %2409 = vperm.xlu0 %2408, %v2407
    %v2410 = vpop.permute.xlu0 %2409
    %vm2411 = vcmp.eq.s32.totalorder %v2410, 1
    %v2413 = vrot.slane %v2406, 2
    %2414 = vrot.lane.b32.xlu0 %v2413, 64
    %v2415 = vpop.permute.xlu0 %2414
    %v2417 = vsel %vm2411, %v2415, %v2092
    %s2418 = sadd.s32 %s376, 7
    %v2419 = vstv %s2418
    %vm2420 = vcmp.lt.s32.totalorder %v2419, %v359
    %v2421 = vsub.f32 1.0, %v2374
    %2423 = vrot.lane.b32.xlu0 %v2390, 64
    %v2424 = vpop.permute.xlu0 %2423
    %v2426 = vmul.f32 %v2421, %v2424
    %v2427 = vrot.slane %v2092, 2
    %v2429 = vmul.f32 %v2374, %v2427
    %v2430 = vadd.f32 %v2426, %v2429
    %v2431 = vsel %vm2420, 1, 0
    %2432 = vset.pattern.permute.xlu0 0
    %2433 = vperm.xlu0 %2432, %v2431
    %v2434 = vpop.permute.xlu0 %2433
    %vm2435 = vcmp.eq.s32.totalorder %v2434, 1
    %v2437 = vrot.slane %v2430, 6
    %2438 = vrot.lane.b32.xlu0 %v2437, 64
    %v2439 = vpop.permute.xlu0 %2438
    %2441 = vrot.lane.b32.xlu0 %v2092, 64
    %v2442 = vpop.permute.xlu0 %2441
    %v2444 = vsel %vm2435, %v2439, %v2442
    %2446 = vrot.lane.b32.xlu0 %v2444, 64
    %v2447 = vpop.permute.xlu0 %2446
    %v2449 = vsel %vm233, %v2417, %v2447
    %v2450 = vpack.c.bf16 %v2417, %v2417
    %v2452 = vunpack.c.l.b16 %v2450
    %v2453 = vpack.c.b16 %v2452, %v2452
    %v2454 = vrot.slane %v2453, 7
    %2456 = vst.msk [vmem:[#allocation14 + $0x4] sm:$0x2] %vm1058, %v2454
    %v2457 = vpack.c.bf16 %v2444, %v2444
    %v2459 = vunpack.c.l.b16 %v2457
    %v2460 = vpack.c.b16 %v2459, %v2459
    %v2461 = vrot.slane %v2460, 5
    %2463 = vst.msk [vmem:[#allocation15 + $0x4] sm:$0x8] %vm1066, %v2461
    %v2464 = vpack.c.bf16 %v2449, %v2449
    %v2465 = vld [vmem:[#allocation13] sm:$0xff]
    %v2466 = vld [vmem:[#allocation13 + $0x8] sm:$0xf]
    %v2467 = vld [vmem:[#allocation13 + $0xc] sm:$0xff]
    %v2468 = vld [vmem:[#allocation13 + $0x14] sm:$0xf]
    %v2469 = vld [vmem:[#allocation13 + $0x18] sm:$0xff]
    %v2470 = vld [vmem:[#allocation13 + $0x20] sm:$0xf]
    %v2471 = vld [vmem:[#allocation13 + $0x24] sm:$0xff]
    %v2472 = vld [vmem:[#allocation13 + $0x2c] sm:$0xf]
    %v2473 = vld [vmem:[#allocation13 + $0x30] sm:$0xff]
    %v2474 = vld [vmem:[#allocation13 + $0x38] sm:$0xf]
    %v2475 = vld [vmem:[#allocation13 + $0x3c] sm:$0xff]
    %v2476 = vld [vmem:[#allocation13 + $0x44] sm:$0xf]
    %v2477 = vld [vmem:[#allocation13 + $0x48] sm:$0xff]
    %v2478 = vld [vmem:[#allocation13 + $0x50] sm:$0xf]
    %v2479 = vld [vmem:[#allocation13 + $0x54] sm:$0xff]
    %v2480 = vld [vmem:[#allocation13 + $0x5c] sm:$0xf]
    %v2481 = vld [vmem:[#allocation13 + $0x60] sm:$0xff]
    %v2482 = vld [vmem:[#allocation13 + $0x68] sm:$0xf]
    %v2483 = vld [vmem:[#allocation13 + $0x6c] sm:$0xff]
    %v2484 = vld [vmem:[#allocation13 + $0x74] sm:$0xf]
    %v2485 = vld [vmem:[#allocation13 + $0x78] sm:$0xff]
    %v2486 = vld [vmem:[#allocation13 + $0x80] sm:$0xf]
    %v2487 = vld [vmem:[#allocation13 + $0x84] sm:$0xff]
    %v2488 = vld [vmem:[#allocation13 + $0x8c] sm:$0xf]
    %v2489 = vld [vmem:[#allocation13 + $0x90] sm:$0xff]
    %v2490 = vld [vmem:[#allocation13 + $0x98] sm:$0xf]
    %v2491 = vld [vmem:[#allocation13 + $0x9c] sm:$0xff]
    %v2492 = vld [vmem:[#allocation13 + $0xa4] sm:$0xf]
    %v2493 = vld [vmem:[#allocation13 + $0xa8] sm:$0xff]
    %v2494 = vld [vmem:[#allocation13 + $0xb0] sm:$0xf]
    %v2495 = vld [vmem:[#allocation13 + $0xb4] sm:$0xff]
    %v2496 = vld [vmem:[#allocation13 + $0xbc] sm:$0xf]
    %v2529 = vunpack.c.l.b16 %v2465
    %v2530 = vunpack.c.h.b16 %v2465
    %v2531 = vunpack.c.l.b16 %v2466
    %v2532 = vunpack.c.l.b16 %v2467
    %v2533 = vunpack.c.h.b16 %v2467
    %v2534 = vunpack.c.l.b16 %v2468
    %v2535 = vunpack.c.l.b16 %v2469
    %v2536 = vunpack.c.h.b16 %v2469
    %v2537 = vunpack.c.l.b16 %v2470
    %v2538 = vunpack.c.l.b16 %v2471
    %v2539 = vunpack.c.h.b16 %v2471
    %v2540 = vunpack.c.l.b16 %v2472
    %v2541 = vunpack.c.l.b16 %v2473
    %v2542 = vunpack.c.h.b16 %v2473
    %v2543 = vunpack.c.l.b16 %v2474
    %v2544 = vunpack.c.l.b16 %v2475
    %v2545 = vunpack.c.h.b16 %v2475
    %v2546 = vunpack.c.l.b16 %v2476
    %v2547 = vunpack.c.l.b16 %v2477
    %v2548 = vunpack.c.h.b16 %v2477
    %v2549 = vunpack.c.l.b16 %v2478
    %v2550 = vunpack.c.l.b16 %v2479
    %v2551 = vunpack.c.h.b16 %v2479
    %v2552 = vunpack.c.l.b16 %v2480
    %v2553 = vunpack.c.l.b16 %v2481
    %v2554 = vunpack.c.h.b16 %v2481
    %v2555 = vunpack.c.l.b16 %v2482
    %v2556 = vunpack.c.l.b16 %v2483
    %v2557 = vunpack.c.h.b16 %v2483
    %v2558 = vunpack.c.l.b16 %v2484
    %v2559 = vunpack.c.l.b16 %v2485
    %v2560 = vunpack.c.h.b16 %v2485
    %v2561 = vunpack.c.l.b16 %v2486
    %v2562 = vunpack.c.l.b16 %v2487
    %v2563 = vunpack.c.h.b16 %v2487
    %v2564 = vunpack.c.l.b16 %v2488
    %v2565 = vunpack.c.l.b16 %v2489
    %v2566 = vunpack.c.h.b16 %v2489
    %v2567 = vunpack.c.l.b16 %v2490
    %v2568 = vunpack.c.l.b16 %v2491
    %v2569 = vunpack.c.h.b16 %v2491
    %v2570 = vunpack.c.l.b16 %v2492
    %v2571 = vunpack.c.l.b16 %v2493
    %v2572 = vunpack.c.h.b16 %v2493
    %v2573 = vunpack.c.l.b16 %v2494
    %v2574 = vunpack.c.l.b16 %v2495
    %v2575 = vunpack.c.h.b16 %v2495
    %v2576 = vunpack.c.l.b16 %v2496
    %v2577 = vpack.c.b16 %v2532, %v2529
    %v2578 = vpack.c.b16 %v2533, %v2530
    %v2579 = vpack.c.b16 %v2534, %v2531
    %v2580 = vpack.c.b16 %v2538, %v2535
    %v2581 = vpack.c.b16 %v2539, %v2536
    %v2582 = vpack.c.b16 %v2540, %v2537
    %v2583 = vpack.c.b16 %v2544, %v2541
    %v2584 = vpack.c.b16 %v2545, %v2542
    %v2585 = vpack.c.b16 %v2546, %v2543
    %v2586 = vpack.c.b16 %v2550, %v2547
    %v2587 = vpack.c.b16 %v2551, %v2548
    %v2588 = vpack.c.b16 %v2552, %v2549
    %v2589 = vpack.c.b16 %v2556, %v2553
    %v2590 = vpack.c.b16 %v2557, %v2554
    %v2591 = vpack.c.b16 %v2558, %v2555
    %v2592 = vpack.c.b16 %v2562, %v2559
    %v2593 = vpack.c.b16 %v2563, %v2560
    %v2594 = vpack.c.b16 %v2564, %v2561
    %v2595 = vpack.c.b16 %v2568, %v2565
    %v2596 = vpack.c.b16 %v2569, %v2566
    %v2597 = vpack.c.b16 %v2570, %v2567
    %v2598 = vpack.c.b16 %v2574, %v2571
    %v2599 = vpack.c.b16 %v2575, %v2572
    %v2600 = vpack.c.b16 %v2576, %v2573
    %2625 = vmatprep.subr.bf16.mxu0 %v2578
    %2626 = vmatpush1.bf16.msra.mxu0 %v2577
    %2627 = vmatprep.subr.bf16.mxu0 %v2581
    %2628 = vmatpush1.bf16.msra.mxu0 %v2580
    %2629 = vmatprep.subr.bf16.mxu0 %v2584
    %2630 = vmatpush1.bf16.msra.mxu0 %v2583
    %2631 = vmatprep.subr.bf16.mxu0 %v2587
    %2632 = vmatpush1.bf16.msra.mxu0 %v2586
    %2633 = vmatprep.subr.bf16.mxu0 %v2590
    %2634 = vmatpush1.bf16.msra.mxu0 %v2589
    %2635 = vmatprep.subr.bf16.mxu0 %v2593
    %2636 = vmatpush1.bf16.msra.mxu0 %v2592
    %2637 = vmatprep.subr.bf16.mxu0 %v2596
    %2638 = vmatpush1.bf16.msra.mxu0 %v2595
    %2639 = vmatprep.subr.bf16.mxu0 %v2599
    %2640 = vmatpush1.bf16.msra.mxu0 %v2598
    %2641 = vmatprep.subr.bf16.mxu0 0
    %2642 = vmatpush1.bf16.msra.mxu0 0
    %2643 = vmatprep.subr.bf16.mxu0 0
    %2644 = vmatpush1.bf16.msra.mxu0 0
    %2645 = vmatprep.subr.bf16.mxu0 0
    %2646 = vmatpush1.bf16.msra.mxu0 0
    %2647 = vmatprep.subr.bf16.mxu0 0
    %2648 = vmatpush1.bf16.msra.mxu0 0
    %2649 = vmatprep.subr.bf16.mxu0 0
    %2650 = vmatpush1.bf16.msra.mxu0 0
    %2651 = vmatprep.subr.bf16.mxu0 0
    %2652 = vmatpush1.bf16.msra.mxu0 0
    %2653 = vmatprep.subr.bf16.mxu0 0
    %2654 = vmatpush1.bf16.msra.mxu0 0
    %2655 = vmatprep.subr.bf16.mxu0 0
    %2656 = vmatpush1.bf16.msra.mxu0 0
    %2657 = vmatprep.mubr.bf16.mxu0 0
    %2658 = vmatmul.mubr.bf16.gmra.mrb[0].mxu0 %v2464
    %v2659 = vpop.f32.mrb[0].mxu0
    %v2660 = vadd.f32 0.0, %v2659
    %v2661 = vpop.f32.mrb[0].mxu0
    %v2662 = vadd.f32 0.0, %v2661
    %v2663 = vpop.f32.mrb[0].mxu0
    %v2664 = vpop.f32.mrb[0].mxu0
    %2665 = vdwg.mxu0
    %2666 = vmatprep.subr.bf16.mxu0 0
    %2667 = vmatpush1.bf16.msra.mxu0 %v2579
    %2668 = vmatprep.subr.bf16.mxu0 0
    %2669 = vmatpush1.bf16.msra.mxu0 %v2582
    %2670 = vmatprep.subr.bf16.mxu0 0
    %2671 = vmatpush1.bf16.msra.mxu0 %v2585
    %2672 = vmatprep.subr.bf16.mxu0 0
    %2673 = vmatpush1.bf16.msra.mxu0 %v2588
    %2674 = vmatprep.subr.bf16.mxu0 0
    %2675 = vmatpush1.bf16.msra.mxu0 %v2591
    %2676 = vmatprep.subr.bf16.mxu0 0
    %2677 = vmatpush1.bf16.msra.mxu0 %v2594
    %2678 = vmatprep.subr.bf16.mxu0 0
    %2679 = vmatpush1.bf16.msra.mxu0 %v2597
    %2680 = vmatprep.subr.bf16.mxu0 0
    %2681 = vmatpush1.bf16.msra.mxu0 %v2600
    %2682 = vmatprep.subr.bf16.mxu0 0
    %2683 = vmatpush1.bf16.msra.mxu0 0
    %2684 = vmatprep.subr.bf16.mxu0 0
    %2685 = vmatpush1.bf16.msra.mxu0 0
    %2686 = vmatprep.subr.bf16.mxu0 0
    %2687 = vmatpush1.bf16.msra.mxu0 0
    %2688 = vmatprep.subr.bf16.mxu0 0
    %2689 = vmatpush1.bf16.msra.mxu0 0
    %2690 = vmatprep.subr.bf16.mxu0 0
    %2691 = vmatpush1.bf16.msra.mxu0 0
    %2692 = vmatprep.subr.bf16.mxu0 0
    %2693 = vmatpush1.bf16.msra.mxu0 0
    %2694 = vmatprep.subr.bf16.mxu0 0
    %2695 = vmatpush1.bf16.msra.mxu0 0
    %2696 = vmatprep.subr.bf16.mxu0 0
    %2697 = vmatpush1.bf16.msra.mxu0 0
    %2698 = vmatprep.mubr.bf16.mxu0 0
    %2699 = vmatmul.mubr.bf16.gmra.mrb[0].mxu0 %v2464
    %v2700 = vpop.f32.mrb[0].mxu0
    %v2701 = vadd.f32 0.0, %v2700
    %v2702 = vpop.f32.mrb[0].mxu0
    %v2703 = vpop.f32.mrb[0].mxu0
    %v2704 = vpop.f32.mrb[0].mxu0
    %2705 = vdwg.mxu0
    %v2706 = vld [vmem:[#allocation2 + $0x10] sm:$0x30]
    %v2707 = vld [vmem:[#allocation2 + $0x18] sm:$0x30]
    %v2708 = vld [vmem:[#allocation3 + $0x10] sm:$0x30]
    %v2709 = vld [vmem:[#allocation3 + $0x18] sm:$0x30]
    %v2711 = vrot.slane %v2660, 4
    %v2713 = vadd.f32 %v2706, %v2711
    %v2714 = vxor.u32 %v2713, 2147483648
    %v2715 = vmul.f32 %v2714, 1.442695
    %v2716 = vpow.pop %v2715
    %v2717 = vadd.f32 %v2716, 1.0
    %v2718 = vrcp.pop %v2717
    %v2719 = vmul.f32 1.0, %v2718
    %v2721 = vrot.slane %v2662, 4
    %v2723 = vadd.f32 %v2708, %v2721
    %v2724 = vxor.u32 %v2723, 2147483648
    %v2725 = vmul.f32 %v2724, 1.442695
    %v2726 = vpow.pop %v2725
    %v2727 = vadd.f32 %v2726, 1.0
    %v2728 = vrcp.pop %v2727
    %v2729 = vmul.f32 1.0, %v2728
    %v2730 = vadd.f32 %v2701, %v365
    %v2732 = vrot.slane %v2730, 4
    %v2734 = vmul.f32 %v2719, %v2732
    %v2735 = vadd.f32 %v2707, %v2734
    %v2736 = vtanh.pop %v2735
    %v2737 = vadd.f32 %v2701, %v642
    %v2739 = vrot.slane %v2737, 4
    %2740 = vrot.lane.b32.xlu0 %v2739, 64
    %v2741 = vpop.permute.xlu0 %2740
    %v2743 = vmul.f32 %v2729, %v2741
    %v2744 = vadd.f32 %v2709, %v2743
    %v2745 = vtanh.pop %v2744
    %s2746 = sadd.s32 %s374, 6
    %v2747 = vstv %s2746
    %vm2748 = vcmp.lt.s32.totalorder %v2747, %v359
    %v2749 = vsub.f32 1.0, %v2719
    %2751 = vrot.lane.b32.xlu0 %v2736, 64
    %v2752 = vpop.permute.xlu0 %2751
    %v2754 = vmul.f32 %v2749, %v2752
    %v2756 = vrot.slane %v2449, 4
    %2757 = vrot.lane.b32.xlu0 %v2756, 64
    %v2758 = vpop.permute.xlu0 %2757
    %v2760 = vmul.f32 %v2719, %v2758
    %v2761 = vadd.f32 %v2754, %v2760
    %v2762 = vsel %vm2748, 1, 0
    %2763 = vset.pattern.permute.xlu0 0
    %2764 = vperm.xlu0 %2763, %v2762
    %v2765 = vpop.permute.xlu0 %2764
    %vm2766 = vcmp.eq.s32.totalorder %v2765, 1
    %v2768 = vrot.slane %v2761, 4
    %2769 = vrot.lane.b32.xlu0 %v2768, 64
    %v2770 = vpop.permute.xlu0 %2769
    %v2772 = vsel %vm2766, %v2770, %v2449
    %s2773 = sadd.s32 %s376, 6
    %v2774 = vstv %s2773
    %vm2775 = vcmp.lt.s32.totalorder %v2774, %v359
    %v2776 = vsub.f32 1.0, %v2729
    %2778 = vrot.lane.b32.xlu0 %v2745, 64
    %v2779 = vpop.permute.xlu0 %2778
    %v2781 = vmul.f32 %v2776, %v2779
    %v2783 = vmul.f32 %v2729, %v2756
    %v2784 = vadd.f32 %v2781, %v2783
    %v2785 = vsel %vm2775, 1, 0
    %2786 = vset.pattern.permute.xlu0 0
    %2787 = vperm.xlu0 %2786, %v2785
    %v2788 = vpop.permute.xlu0 %2787
    %vm2789 = vcmp.eq.s32.totalorder %v2788, 1
    %v2791 = vrot.slane %v2784, 4
    %2792 = vrot.lane.b32.xlu0 %v2791, 64
    %v2793 = vpop.permute.xlu0 %2792
    %2795 = vrot.lane.b32.xlu0 %v2449, 64
    %v2796 = vpop.permute.xlu0 %2795
    %v2798 = vsel %vm2789, %v2793, %v2796
    %2800 = vrot.lane.b32.xlu0 %v2798, 64
    %v2801 = vpop.permute.xlu0 %2800
    %v2803 = vsel %vm233, %v2772, %v2801
    %v2804 = vpack.c.bf16 %v2772, %v2772
    %v2806 = vunpack.c.l.b16 %v2804
    %v2807 = vpack.c.b16 %v2806, %v2806
    %v2808 = vrot.slane %v2807, 6
    %2810 = vst.msk [vmem:[#allocation14 + $0x4] sm:$0x4] %vm1414, %v2808
    %v2811 = vpack.c.bf16 %v2798, %v2798
    %v2813 = vunpack.c.l.b16 %v2811
    %v2814 = vpack.c.b16 %v2813, %v2813
    %v2815 = vrot.slane %v2814, 6
    %2817 = vst.msk [vmem:[#allocation15 + $0x4] sm:$0x4] %vm1414, %v2815
    %v2818 = vpack.c.bf16 %v2803, %v2803
    %v2819 = vld [vmem:[#allocation13] sm:$0xff]
    %v2820 = vld [vmem:[#allocation13 + $0x8] sm:$0xf]
    %v2821 = vld [vmem:[#allocation13 + $0xc] sm:$0xff]
    %v2822 = vld [vmem:[#allocation13 + $0x14] sm:$0xf]
    %v2823 = vld [vmem:[#allocation13 + $0x18] sm:$0xff]
    %v2824 = vld [vmem:[#allocation13 + $0x20] sm:$0xf]
    %v2825 = vld [vmem:[#allocation13 + $0x24] sm:$0xff]
    %v2826 = vld [vmem:[#allocation13 + $0x2c] sm:$0xf]
    %v2827 = vld [vmem:[#allocation13 + $0x30] sm:$0xff]
    %v2828 = vld [vmem:[#allocation13 + $0x38] sm:$0xf]
    %v2829 = vld [vmem:[#allocation13 + $0x3c] sm:$0xff]
    %v2830 = vld [vmem:[#allocation13 + $0x44] sm:$0xf]
    %v2831 = vld [vmem:[#allocation13 + $0x48] sm:$0xff]
    %v2832 = vld [vmem:[#allocation13 + $0x50] sm:$0xf]
    %v2833 = vld [vmem:[#allocation13 + $0x54] sm:$0xff]
    %v2834 = vld [vmem:[#allocation13 + $0x5c] sm:$0xf]
    %v2835 = vld [vmem:[#allocation13 + $0x60] sm:$0xff]
    %v2836 = vld [vmem:[#allocation13 + $0x68] sm:$0xf]
    %v2837 = vld [vmem:[#allocation13 + $0x6c] sm:$0xff]
    %v2838 = vld [vmem:[#allocation13 + $0x74] sm:$0xf]
    %v2839 = vld [vmem:[#allocation13 + $0x78] sm:$0xff]
    %v2840 = vld [vmem:[#allocation13 + $0x80] sm:$0xf]
    %v2841 = vld [vmem:[#allocation13 + $0x84] sm:$0xff]
    %v2842 = vld [vmem:[#allocation13 + $0x8c] sm:$0xf]
    %v2843 = vld [vmem:[#allocation13 + $0x90] sm:$0xff]
    %v2844 = vld [vmem:[#allocation13 + $0x98] sm:$0xf]
    %v2845 = vld [vmem:[#allocation13 + $0x9c] sm:$0xff]
    %v2846 = vld [vmem:[#allocation13 + $0xa4] sm:$0xf]
    %v2847 = vld [vmem:[#allocation13 + $0xa8] sm:$0xff]
    %v2848 = vld [vmem:[#allocation13 + $0xb0] sm:$0xf]
    %v2849 = vld [vmem:[#allocation13 + $0xb4] sm:$0xff]
    %v2850 = vld [vmem:[#allocation13 + $0xbc] sm:$0xf]
    %v2883 = vunpack.c.l.b16 %v2819
    %v2884 = vunpack.c.h.b16 %v2819
    %v2885 = vunpack.c.l.b16 %v2820
    %v2886 = vunpack.c.l.b16 %v2821
    %v2887 = vunpack.c.h.b16 %v2821
    %v2888 = vunpack.c.l.b16 %v2822
    %v2889 = vunpack.c.l.b16 %v2823
    %v2890 = vunpack.c.h.b16 %v2823
    %v2891 = vunpack.c.l.b16 %v2824
    %v2892 = vunpack.c.l.b16 %v2825
    %v2893 = vunpack.c.h.b16 %v2825
    %v2894 = vunpack.c.l.b16 %v2826
    %v2895 = vunpack.c.l.b16 %v2827
    %v2896 = vunpack.c.h.b16 %v2827
    %v2897 = vunpack.c.l.b16 %v2828
    %v2898 = vunpack.c.l.b16 %v2829
    %v2899 = vunpack.c.h.b16 %v2829
    %v2900 = vunpack.c.l.b16 %v2830
    %v2901 = vunpack.c.l.b16 %v2831
    %v2902 = vunpack.c.h.b16 %v2831
    %v2903 = vunpack.c.l.b16 %v2832
    %v2904 = vunpack.c.l.b16 %v2833
    %v2905 = vunpack.c.h.b16 %v2833
    %v2906 = vunpack.c.l.b16 %v2834
    %v2907 = vunpack.c.l.b16 %v2835
    %v2908 = vunpack.c.h.b16 %v2835
    %v2909 = vunpack.c.l.b16 %v2836
    %v2910 = vunpack.c.l.b16 %v2837
    %v2911 = vunpack.c.h.b16 %v2837
    %v2912 = vunpack.c.l.b16 %v2838
    %v2913 = vunpack.c.l.b16 %v2839
    %v2914 = vunpack.c.h.b16 %v2839
    %v2915 = vunpack.c.l.b16 %v2840
    %v2916 = vunpack.c.l.b16 %v2841
    %v2917 = vunpack.c.h.b16 %v2841
    %v2918 = vunpack.c.l.b16 %v2842
    %v2919 = vunpack.c.l.b16 %v2843
    %v2920 = vunpack.c.h.b16 %v2843
    %v2921 = vunpack.c.l.b16 %v2844
    %v2922 = vunpack.c.l.b16 %v2845
    %v2923 = vunpack.c.h.b16 %v2845
    %v2924 = vunpack.c.l.b16 %v2846
    %v2925 = vunpack.c.l.b16 %v2847
    %v2926 = vunpack.c.h.b16 %v2847
    %v2927 = vunpack.c.l.b16 %v2848
    %v2928 = vunpack.c.l.b16 %v2849
    %v2929 = vunpack.c.h.b16 %v2849
    %v2930 = vunpack.c.l.b16 %v2850
    %v2931 = vpack.c.b16 %v2886, %v2883
    %v2932 = vpack.c.b16 %v2887, %v2884
    %v2933 = vpack.c.b16 %v2888, %v2885
    %v2934 = vpack.c.b16 %v2892, %v2889
    %v2935 = vpack.c.b16 %v2893, %v2890
    %v2936 = vpack.c.b16 %v2894, %v2891
    %v2937 = vpack.c.b16 %v2898, %v2895
    %v2938 = vpack.c.b16 %v2899, %v2896
    %v2939 = vpack.c.b16 %v2900, %v2897
    %v2940 = vpack.c.b16 %v2904, %v2901
    %v2941 = vpack.c.b16 %v2905, %v2902
    %v2942 = vpack.c.b16 %v2906, %v2903
    %v2943 = vpack.c.b16 %v2910, %v2907
    %v2944 = vpack.c.b16 %v2911, %v2908
    %v2945 = vpack.c.b16 %v2912, %v2909
    %v2946 = vpack.c.b16 %v2916, %v2913
    %v2947 = vpack.c.b16 %v2917, %v2914
    %v2948 = vpack.c.b16 %v2918, %v2915
    %v2949 = vpack.c.b16 %v2922, %v2919
    %v2950 = vpack.c.b16 %v2923, %v2920
    %v2951 = vpack.c.b16 %v2924, %v2921
    %v2952 = vpack.c.b16 %v2928, %v2925
    %v2953 = vpack.c.b16 %v2929, %v2926
    %v2954 = vpack.c.b16 %v2930, %v2927
    %2979 = vmatprep.subr.bf16.mxu0 %v2932
    %2980 = vmatpush1.bf16.msra.mxu0 %v2931
    %2981 = vmatprep.subr.bf16.mxu0 %v2935
    %2982 = vmatpush1.bf16.msra.mxu0 %v2934
    %2983 = vmatprep.subr.bf16.mxu0 %v2938
    %2984 = vmatpush1.bf16.msra.mxu0 %v2937
    %2985 = vmatprep.subr.bf16.mxu0 %v2941
    %2986 = vmatpush1.bf16.msra.mxu0 %v2940
    %2987 = vmatprep.subr.bf16.mxu0 %v2944
    %2988 = vmatpush1.bf16.msra.mxu0 %v2943
    %2989 = vmatprep.subr.bf16.mxu0 %v2947
    %2990 = vmatpush1.bf16.msra.mxu0 %v2946
    %2991 = vmatprep.subr.bf16.mxu0 %v2950
    %2992 = vmatpush1.bf16.msra.mxu0 %v2949
    %2993 = vmatprep.subr.bf16.mxu0 %v2953
    %2994 = vmatpush1.bf16.msra.mxu0 %v2952
    %2995 = vmatprep.subr.bf16.mxu0 0
    %2996 = vmatpush1.bf16.msra.mxu0 0
    %2997 = vmatprep.subr.bf16.mxu0 0
    %2998 = vmatpush1.bf16.msra.mxu0 0
    %2999 = vmatprep.subr.bf16.mxu0 0
    %3000 = vmatpush1.bf16.msra.mxu0 0
    %3001 = vmatprep.subr.bf16.mxu0 0
    %3002 = vmatpush1.bf16.msra.mxu0 0
    %3003 = vmatprep.subr.bf16.mxu0 0
    %3004 = vmatpush1.bf16.msra.mxu0 0
    %3005 = vmatprep.subr.bf16.mxu0 0
    %3006 = vmatpush1.bf16.msra.mxu0 0
    %3007 = vmatprep.subr.bf16.mxu0 0
    %3008 = vmatpush1.bf16.msra.mxu0 0
    %3009 = vmatprep.subr.bf16.mxu0 0
    %3010 = vmatpush1.bf16.msra.mxu0 0
    %3011 = vmatprep.mubr.bf16.mxu0 0
    %3012 = vmatmul.mubr.bf16.gmra.mrb[0].mxu0 %v2818
    %v3013 = vpop.f32.mrb[0].mxu0
    %v3014 = vadd.f32 0.0, %v3013
    %v3015 = vpop.f32.mrb[0].mxu0
    %v3016 = vadd.f32 0.0, %v3015
    %v3017 = vpop.f32.mrb[0].mxu0
    %v3018 = vpop.f32.mrb[0].mxu0
    %3019 = vdwg.mxu0
    %3020 = vmatprep.subr.bf16.mxu0 0
    %3021 = vmatpush1.bf16.msra.mxu0 %v2933
    %3022 = vmatprep.subr.bf16.mxu0 0
    %3023 = vmatpush1.bf16.msra.mxu0 %v2936
    %3024 = vmatprep.subr.bf16.mxu0 0
    %3025 = vmatpush1.bf16.msra.mxu0 %v2939
    %3026 = vmatprep.subr.bf16.mxu0 0
    %3027 = vmatpush1.bf16.msra.mxu0 %v2942
    %3028 = vmatprep.subr.bf16.mxu0 0
    %3029 = vmatpush1.bf16.msra.mxu0 %v2945
    %3030 = vmatprep.subr.bf16.mxu0 0
    %3031 = vmatpush1.bf16.msra.mxu0 %v2948
    %3032 = vmatprep.subr.bf16.mxu0 0
    %3033 = vmatpush1.bf16.msra.mxu0 %v2951
    %3034 = vmatprep.subr.bf16.mxu0 0
    %3035 = vmatpush1.bf16.msra.mxu0 %v2954
    %3036 = vmatprep.subr.bf16.mxu0 0
    %3037 = vmatpush1.bf16.msra.mxu0 0
    %3038 = vmatprep.subr.bf16.mxu0 0
    %3039 = vmatpush1.bf16.msra.mxu0 0
    %3040 = vmatprep.subr.bf16.mxu0 0
    %3041 = vmatpush1.bf16.msra.mxu0 0
    %3042 = vmatprep.subr.bf16.mxu0 0
    %3043 = vmatpush1.bf16.msra.mxu0 0
    %3044 = vmatprep.subr.bf16.mxu0 0
    %3045 = vmatpush1.bf16.msra.mxu0 0
    %3046 = vmatprep.subr.bf16.mxu0 0
    %3047 = vmatpush1.bf16.msra.mxu0 0
    %3048 = vmatprep.subr.bf16.mxu0 0
    %3049 = vmatpush1.bf16.msra.mxu0 0
    %3050 = vmatprep.subr.bf16.mxu0 0
    %3051 = vmatpush1.bf16.msra.mxu0 0
    %3052 = vmatprep.mubr.bf16.mxu0 0
    %3053 = vmatmul.mubr.bf16.gmra.mrb[0].mxu0 %v2818
    %v3054 = vpop.f32.mrb[0].mxu0
    %v3055 = vadd.f32 0.0, %v3054
    %v3056 = vpop.f32.mrb[0].mxu0
    %v3057 = vpop.f32.mrb[0].mxu0
    %v3058 = vpop.f32.mrb[0].mxu0
    %3059 = vdwg.mxu0
    %v3060 = vld [vmem:[#allocation2 + $0x10] sm:$0xc0]
    %v3061 = vld [vmem:[#allocation2 + $0x18] sm:$0xc0]
    %v3062 = vld [vmem:[#allocation3 + $0x10] sm:$0xc]
    %v3063 = vld [vmem:[#allocation3 + $0x18] sm:$0xc]
    %v3065 = vrot.slane %v3014, 2
    %v3067 = vadd.f32 %v3060, %v3065
    %v3068 = vxor.u32 %v3067, 2147483648
    %v3069 = vmul.f32 %v3068, 1.442695
    %v3070 = vpow.pop %v3069
    %v3071 = vadd.f32 %v3070, 1.0
    %v3072 = vrcp.pop %v3071
    %v3073 = vmul.f32 1.0, %v3072
    %v3075 = vrot.slane %v3016, 6
    %v3077 = vadd.f32 %v3062, %v3075
    %v3078 = vxor.u32 %v3077, 2147483648
    %v3079 = vmul.f32 %v3078, 1.442695
    %v3080 = vpow.pop %v3079
    %v3081 = vadd.f32 %v3080, 1.0
    %v3082 = vrcp.pop %v3081
    %v3083 = vmul.f32 1.0, %v3082
    %v3084 = vadd.f32 %v3055, %v365
    %v3086 = vrot.slane %v3084, 2
    %v3088 = vmul.f32 %v3073, %v3086
    %v3089 = vadd.f32 %v3061, %v3088
    %v3090 = vtanh.pop %v3089
    %v3091 = vadd.f32 %v3055, %v642
    %v3093 = vrot.slane %v3091, 6
    %3094 = vrot.lane.b32.xlu0 %v3093, 64
    %v3095 = vpop.permute.xlu0 %3094
    %v3097 = vmul.f32 %v3083, %v3095
    %v3098 = vadd.f32 %v3063, %v3097
    %v3099 = vtanh.pop %v3098
    %s3100 = sadd.s32 %s374, 7
    %v3101 = vstv %s3100
    %vm3102 = vcmp.lt.s32.totalorder %v3101, %v359
    %v3103 = vsub.f32 1.0, %v3073
    %3105 = vrot.lane.b32.xlu0 %v3090, 64
    %v3106 = vpop.permute.xlu0 %3105
    %v3108 = vmul.f32 %v3103, %v3106
    %v3110 = vrot.slane %v2803, 2
    %3111 = vrot.lane.b32.xlu0 %v3110, 64
    %v3112 = vpop.permute.xlu0 %3111
    %v3114 = vmul.f32 %v3073, %v3112
    %v3115 = vadd.f32 %v3108, %v3114
    %v3116 = vsel %vm3102, 1, 0
    %3117 = vset.pattern.permute.xlu0 0
    %3118 = vperm.xlu0 %3117, %v3116
    %v3119 = vpop.permute.xlu0 %3118
    %vm3120 = vcmp.eq.s32.totalorder %v3119, 1
    %v3122 = vrot.slane %v3115, 6
    %3123 = vrot.lane.b32.xlu0 %v3122, 64
    %v3124 = vpop.permute.xlu0 %3123
    %v3126 = vsel %vm3120, %v3124, %v2803
    %s3127 = sadd.s32 %s376, 5
    %v3128 = vstv %s3127
    %vm3129 = vcmp.lt.s32.totalorder %v3128, %v359
    %v3130 = vsub.f32 1.0, %v3083
    %3132 = vrot.lane.b32.xlu0 %v3099, 64
    %v3133 = vpop.permute.xlu0 %3132
    %v3135 = vmul.f32 %v3130, %v3133
    %v3136 = vrot.slane %v2803, 6
    %v3138 = vmul.f32 %v3083, %v3136
    %v3139 = vadd.f32 %v3135, %v3138
    %v3140 = vsel %vm3129, 1, 0
    %3141 = vset.pattern.permute.xlu0 0
    %3142 = vperm.xlu0 %3141, %v3140
    %v3143 = vpop.permute.xlu0 %3142
    %vm3144 = vcmp.eq.s32.totalorder %v3143, 1
    %v3146 = vrot.slane %v3139, 2
    %3147 = vrot.lane.b32.xlu0 %v3146, 64
    %v3148 = vpop.permute.xlu0 %3147
    %3150 = vrot.lane.b32.xlu0 %v2803, 64
    %v3151 = vpop.permute.xlu0 %3150
    %v3153 = vsel %vm3144, %v3148, %v3151
    %3155 = vrot.lane.b32.xlu0 %v3153, 64
    %v3156 = vpop.permute.xlu0 %3155
    %v3158 = vsel %vm233, %v3126, %v3156
    %v3159 = vpack.c.bf16 %v3126, %v3126
    %v3161 = vunpack.c.l.b16 %v3159
    %v3162 = vpack.c.b16 %v3161, %v3161
    %v3163 = vrot.slane %v3162, 5
    %3165 = vst.msk [vmem:[#allocation14 + $0x4] sm:$0x8] %vm1066, %v3163
    %v3166 = vpack.c.bf16 %v3153, %v3153
    %v3168 = vunpack.c.l.b16 %v3166
    %v3169 = vpack.c.b16 %v3168, %v3168
    %v3170 = vrot.slane %v3169, 7
    %3172 = vst.msk [vmem:[#allocation15 + $0x4] sm:$0x2] %vm1058, %v3170
    %v3173 = vpack.c.bf16 %v3158, %v3158
    %v3174 = vld [vmem:[#allocation13] sm:$0xff]
    %v3175 = vld [vmem:[#allocation13 + $0x8] sm:$0xf]
    %v3176 = vld [vmem:[#allocation13 + $0xc] sm:$0xff]
    %v3177 = vld [vmem:[#allocation13 + $0x14] sm:$0xf]
    %v3178 = vld [vmem:[#allocation13 + $0x18] sm:$0xff]
    %v3179 = vld [vmem:[#allocation13 + $0x20] sm:$0xf]
    %v3180 = vld [vmem:[#allocation13 + $0x24] sm:$0xff]
    %v3181 = vld [vmem:[#allocation13 + $0x2c] sm:$0xf]
    %v3182 = vld [vmem:[#allocation13 + $0x30] sm:$0xff]
    %v3183 = vld [vmem:[#allocation13 + $0x38] sm:$0xf]
    %v3184 = vld [vmem:[#allocation13 + $0x3c] sm:$0xff]
    %v3185 = vld [vmem:[#allocation13 + $0x44] sm:$0xf]
    %v3186 = vld [vmem:[#allocation13 + $0x48] sm:$0xff]
    %v3187 = vld [vmem:[#allocation13 + $0x50] sm:$0xf]
    %v3188 = vld [vmem:[#allocation13 + $0x54] sm:$0xff]
    %v3189 = vld [vmem:[#allocation13 + $0x5c] sm:$0xf]
    %v3190 = vld [vmem:[#allocation13 + $0x60] sm:$0xff]
    %v3191 = vld [vmem:[#allocation13 + $0x68] sm:$0xf]
    %v3192 = vld [vmem:[#allocation13 + $0x6c] sm:$0xff]
    %v3193 = vld [vmem:[#allocation13 + $0x74] sm:$0xf]
    %v3194 = vld [vmem:[#allocation13 + $0x78] sm:$0xff]
    %v3195 = vld [vmem:[#allocation13 + $0x80] sm:$0xf]
    %v3196 = vld [vmem:[#allocation13 + $0x84] sm:$0xff]
    %v3197 = vld [vmem:[#allocation13 + $0x8c] sm:$0xf]
    %v3198 = vld [vmem:[#allocation13 + $0x90] sm:$0xff]
    %v3199 = vld [vmem:[#allocation13 + $0x98] sm:$0xf]
    %v3200 = vld [vmem:[#allocation13 + $0x9c] sm:$0xff]
    %v3201 = vld [vmem:[#allocation13 + $0xa4] sm:$0xf]
    %v3202 = vld [vmem:[#allocation13 + $0xa8] sm:$0xff]
    %v3203 = vld [vmem:[#allocation13 + $0xb0] sm:$0xf]
    %v3204 = vld [vmem:[#allocation13 + $0xb4] sm:$0xff]
    %v3205 = vld [vmem:[#allocation13 + $0xbc] sm:$0xf]
    %v3238 = vunpack.c.l.b16 %v3174
    %v3239 = vunpack.c.h.b16 %v3174
    %v3240 = vunpack.c.l.b16 %v3175
    %v3241 = vunpack.c.l.b16 %v3176
    %v3242 = vunpack.c.h.b16 %v3176
    %v3243 = vunpack.c.l.b16 %v3177
    %v3244 = vunpack.c.l.b16 %v3178
    %v3245 = vunpack.c.h.b16 %v3178
    %v3246 = vunpack.c.l.b16 %v3179
    %v3247 = vunpack.c.l.b16 %v3180
    %v3248 = vunpack.c.h.b16 %v3180
    %v3249 = vunpack.c.l.b16 %v3181
    %v3250 = vunpack.c.l.b16 %v3182
    %v3251 = vunpack.c.h.b16 %v3182
    %v3252 = vunpack.c.l.b16 %v3183
    %v3253 = vunpack.c.l.b16 %v3184
    %v3254 = vunpack.c.h.b16 %v3184
    %v3255 = vunpack.c.l.b16 %v3185
    %v3256 = vunpack.c.l.b16 %v3186
    %v3257 = vunpack.c.h.b16 %v3186
    %v3258 = vunpack.c.l.b16 %v3187
    %v3259 = vunpack.c.l.b16 %v3188
    %v3260 = vunpack.c.h.b16 %v3188
    %v3261 = vunpack.c.l.b16 %v3189
    %v3262 = vunpack.c.l.b16 %v3190
    %v3263 = vunpack.c.h.b16 %v3190
    %v3264 = vunpack.c.l.b16 %v3191
    %v3265 = vunpack.c.l.b16 %v3192
    %v3266 = vunpack.c.h.b16 %v3192
    %v3267 = vunpack.c.l.b16 %v3193
    %v3268 = vunpack.c.l.b16 %v3194
    %v3269 = vunpack.c.h.b16 %v3194
    %v3270 = vunpack.c.l.b16 %v3195
    %v3271 = vunpack.c.l.b16 %v3196
    %v3272 = vunpack.c.h.b16 %v3196
    %v3273 = vunpack.c.l.b16 %v3197
    %v3274 = vunpack.c.l.b16 %v3198
    %v3275 = vunpack.c.h.b16 %v3198
    %v3276 = vunpack.c.l.b16 %v3199
    %v3277 = vunpack.c.l.b16 %v3200
    %v3278 = vunpack.c.h.b16 %v3200
    %v3279 = vunpack.c.l.b16 %v3201
    %v3280 = vunpack.c.l.b16 %v3202
    %v3281 = vunpack.c.h.b16 %v3202
    %v3282 = vunpack.c.l.b16 %v3203
    %v3283 = vunpack.c.l.b16 %v3204
    %v3284 = vunpack.c.h.b16 %v3204
    %v3285 = vunpack.c.l.b16 %v3205
    %v3286 = vpack.c.b16 %v3241, %v3238
    %v3287 = vpack.c.b16 %v3242, %v3239
    %v3288 = vpack.c.b16 %v3243, %v3240
    %v3289 = vpack.c.b16 %v3247, %v3244
    %v3290 = vpack.c.b16 %v3248, %v3245
    %v3291 = vpack.c.b16 %v3249, %v3246
    %v3292 = vpack.c.b16 %v3253, %v3250
    %v3293 = vpack.c.b16 %v3254, %v3251
    %v3294 = vpack.c.b16 %v3255, %v3252
    %v3295 = vpack.c.b16 %v3259, %v3256
    %v3296 = vpack.c.b16 %v3260, %v3257
    %v3297 = vpack.c.b16 %v3261, %v3258
    %v3298 = vpack.c.b16 %v3265, %v3262
    %v3299 = vpack.c.b16 %v3266, %v3263
    %v3300 = vpack.c.b16 %v3267, %v3264
    %v3301 = vpack.c.b16 %v3271, %v3268
    %v3302 = vpack.c.b16 %v3272, %v3269
    %v3303 = vpack.c.b16 %v3273, %v3270
    %v3304 = vpack.c.b16 %v3277, %v3274
    %v3305 = vpack.c.b16 %v3278, %v3275
    %v3306 = vpack.c.b16 %v3279, %v3276
    %v3307 = vpack.c.b16 %v3283, %v3280
    %v3308 = vpack.c.b16 %v3284, %v3281
    %v3309 = vpack.c.b16 %v3285, %v3282
    %3334 = vmatprep.subr.bf16.mxu0 %v3287
    %3335 = vmatpush1.bf16.msra.mxu0 %v3286
    %3336 = vmatprep.subr.bf16.mxu0 %v3290
    %3337 = vmatpush1.bf16.msra.mxu0 %v3289
    %3338 = vmatprep.subr.bf16.mxu0 %v3293
    %3339 = vmatpush1.bf16.msra.mxu0 %v3292
    %3340 = vmatprep.subr.bf16.mxu0 %v3296
    %3341 = vmatpush1.bf16.msra.mxu0 %v3295
    %3342 = vmatprep.subr.bf16.mxu0 %v3299
    %3343 = vmatpush1.bf16.msra.mxu0 %v3298
    %3344 = vmatprep.subr.bf16.mxu0 %v3302
    %3345 = vmatpush1.bf16.msra.mxu0 %v3301
    %3346 = vmatprep.subr.bf16.mxu0 %v3305
    %3347 = vmatpush1.bf16.msra.mxu0 %v3304
    %3348 = vmatprep.subr.bf16.mxu0 %v3308
    %3349 = vmatpush1.bf16.msra.mxu0 %v3307
    %3350 = vmatprep.subr.bf16.mxu0 0
    %3351 = vmatpush1.bf16.msra.mxu0 0
    %3352 = vmatprep.subr.bf16.mxu0 0
    %3353 = vmatpush1.bf16.msra.mxu0 0
    %3354 = vmatprep.subr.bf16.mxu0 0
    %3355 = vmatpush1.bf16.msra.mxu0 0
    %3356 = vmatprep.subr.bf16.mxu0 0
    %3357 = vmatpush1.bf16.msra.mxu0 0
    %3358 = vmatprep.subr.bf16.mxu0 0
    %3359 = vmatpush1.bf16.msra.mxu0 0
    %3360 = vmatprep.subr.bf16.mxu0 0
    %3361 = vmatpush1.bf16.msra.mxu0 0
    %3362 = vmatprep.subr.bf16.mxu0 0
    %3363 = vmatpush1.bf16.msra.mxu0 0
    %3364 = vmatprep.subr.bf16.mxu0 0
    %3365 = vmatpush1.bf16.msra.mxu0 0
    %3366 = vmatprep.mubr.bf16.mxu0 0
    %3367 = vmatmul.mubr.bf16.gmra.mrb[0].mxu0 %v3173
    %v3368 = vpop.f32.mrb[0].mxu0
    %v3369 = vadd.f32 0.0, %v3368
    %v3370 = vpop.f32.mrb[0].mxu0
    %v3371 = vadd.f32 0.0, %v3370
    %v3372 = vpop.f32.mrb[0].mxu0
    %v3373 = vpop.f32.mrb[0].mxu0
    %3374 = vdwg.mxu0
    %3375 = vmatprep.subr.bf16.mxu0 0
    %3376 = vmatpush1.bf16.msra.mxu0 %v3288
    %3377 = vmatprep.subr.bf16.mxu0 0
    %3378 = vmatpush1.bf16.msra.mxu0 %v3291
    %3379 = vmatprep.subr.bf16.mxu0 0
    %3380 = vmatpush1.bf16.msra.mxu0 %v3294
    %3381 = vmatprep.subr.bf16.mxu0 0
    %3382 = vmatpush1.bf16.msra.mxu0 %v3297
    %3383 = vmatprep.subr.bf16.mxu0 0
    %3384 = vmatpush1.bf16.msra.mxu0 %v3300
    %3385 = vmatprep.subr.bf16.mxu0 0
    %3386 = vmatpush1.bf16.msra.mxu0 %v3303
    %3387 = vmatprep.subr.bf16.mxu0 0
    %3388 = vmatpush1.bf16.msra.mxu0 %v3306
    %3389 = vmatprep.subr.bf16.mxu0 0
    %3390 = vmatpush1.bf16.msra.mxu0 %v3309
    %3391 = vmatprep.subr.bf16.mxu0 0
    %3392 = vmatpush1.bf16.msra.mxu0 0
    %3393 = vmatprep.subr.bf16.mxu0 0
    %3394 = vmatpush1.bf16.msra.mxu0 0
    %3395 = vmatprep.subr.bf16.mxu0 0
    %3396 = vmatpush1.bf16.msra.mxu0 0
    %3397 = vmatprep.subr.bf16.mxu0 0
    %3398 = vmatpush1.bf16.msra.mxu0 0
    %3399 = vmatprep.subr.bf16.mxu0 0
    %3400 = vmatpush1.bf16.msra.mxu0 0
    %3401 = vmatprep.subr.bf16.mxu0 0
    %3402 = vmatpush1.bf16.msra.mxu0 0
    %3403 = vmatprep.subr.bf16.mxu0 0
    %3404 = vmatpush1.bf16.msra.mxu0 0
    %3405 = vmatprep.subr.bf16.mxu0 0
    %3406 = vmatpush1.bf16.msra.mxu0 0
    %3407 = vmatprep.mubr.bf16.mxu0 0
    %3408 = vmatmul.mubr.bf16.gmra.mrb[0].mxu0 %v3173
    %v3409 = vpop.f32.mrb[0].mxu0
    %v3410 = vadd.f32 0.0, %v3409
    %v3411 = vpop.f32.mrb[0].mxu0
    %v3412 = vpop.f32.mrb[0].mxu0
    %v3413 = vpop.f32.mrb[0].mxu0
    %3414 = vdwg.mxu0
    %v3415 = vld [vmem:[#allocation2 + $0x20] sm:$0x3]
    %v3416 = vld [vmem:[#allocation2 + $0x28] sm:$0x3]
    %v3417 = vld [vmem:[#allocation3 + $0x10] sm:$0x3]
    %v3418 = vld [vmem:[#allocation3 + $0x18] sm:$0x3]
    %v3419 = vadd.f32 %v3415, %v3369
    %v3420 = vxor.u32 %v3419, 2147483648
    %v3421 = vmul.f32 %v3420, 1.442695
    %v3422 = vpow.pop %v3421
    %v3423 = vadd.f32 %v3422, 1.0
    %v3424 = vrcp.pop %v3423
    %v3425 = vmul.f32 1.0, %v3424
    %v3426 = vadd.f32 %v3417, %v3371
    %v3427 = vxor.u32 %v3426, 2147483648
    %v3428 = vmul.f32 %v3427, 1.442695
    %v3429 = vpow.pop %v3428
    %v3430 = vadd.f32 %v3429, 1.0
    %v3431 = vrcp.pop %v3430
    %v3432 = vmul.f32 1.0, %v3431
    %v3433 = vadd.f32 %v3410, %v365
    %v3434 = vmul.f32 %v3425, %v3433
    %v3435 = vadd.f32 %v3416, %v3434
    %v3436 = vtanh.pop %v3435
    %v3437 = vadd.f32 %v3410, %v642
    %3439 = vrot.lane.b32.xlu0 %v3437, 64
    %v3440 = vpop.permute.xlu0 %3439
    %v3442 = vmul.f32 %v3432, %v3440
    %v3443 = vadd.f32 %v3418, %v3442
    %v3444 = vtanh.pop %v3443
    %s3445 = sadd.s32 %s374, 8
    %v3446 = vstv %s3445
    %vm3447 = vcmp.lt.s32.totalorder %v3446, %v359
    %v3448 = vsub.f32 1.0, %v3425
    %3450 = vrot.lane.b32.xlu0 %v3436, 64
    %v3451 = vpop.permute.xlu0 %3450
    %v3453 = vmul.f32 %v3448, %v3451
    %3455 = vrot.lane.b32.xlu0 %v3158, 64
    %v3456 = vpop.permute.xlu0 %3455
    %v3458 = vmul.f32 %v3425, %v3456
    %v3459 = vadd.f32 %v3453, %v3458
    %v3460 = vsel %vm3447, 1, 0
    %3461 = vset.pattern.permute.xlu0 0
    %3462 = vperm.xlu0 %3461, %v3460
    %v3463 = vpop.permute.xlu0 %3462
    %vm3464 = vcmp.eq.s32.totalorder %v3463, 1
    %v3465 = vsel %vm3464, %v3459, %v3456
    %s3466 = sadd.s32 %s376, 4
    %v3467 = vstv %s3466
    %vm3468 = vcmp.lt.s32.totalorder %v3467, %v359
    %v3469 = vsub.f32 1.0, %v3432
    %3471 = vrot.lane.b32.xlu0 %v3444, 64
    %v3472 = vpop.permute.xlu0 %3471
    %v3474 = vmul.f32 %v3469, %v3472
    %v3475 = vmul.f32 %v3432, %v3158
    %v3476 = vadd.f32 %v3474, %v3475
    %v3477 = vsel %vm3468, 1, 0
    %3478 = vset.pattern.permute.xlu0 0
    %3479 = vperm.xlu0 %3478, %v3477
    %v3480 = vpop.permute.xlu0 %3479
    %vm3481 = vcmp.eq.s32.totalorder %v3480, 1
    %v3482 = vsel %vm3481, %v3476, %v3158
    %3484 = vrot.lane.b32.xlu0 %v3465, 64
    %v3485 = vpop.permute.xlu0 %3484
    %v3487 = vsel %vm233, %v3485, %v3482
    %v3488 = vpack.c.bf16 %v3465, %v3465
    %v3490 = vunpack.c.l.b16 %v3488
    %v3491 = vpack.c.b16 %v3490, %v3490
    %3492 = vrot.lane.b32.xlu0 %v3491, 64
    %v3493 = vpop.permute.xlu0 %3492
    %3495 = vst.msk [vmem:[#allocation14 + $0x8] sm:$0x1] %vm701, %v3493
    %v3496 = vpack.c.bf16 %v3482, %v3482
    %v3498 = vunpack.c.l.b16 %v3496
    %v3499 = vpack.c.b16 %v3498, %v3498
    %3500 = vrot.lane.b32.xlu0 %v3499, 64
    %v3501 = vpop.permute.xlu0 %3500
    %3503 = vst.msk [vmem:[#allocation15 + $0x4] sm:$0x1] %vm701, %v3501
    %v3504 = vpack.c.bf16 %v3487, %v3487
    %v3505 = vld [vmem:[#allocation13] sm:$0xff]
    %v3506 = vld [vmem:[#allocation13 + $0x8] sm:$0xf]
    %v3507 = vld [vmem:[#allocation13 + $0xc] sm:$0xff]
    %v3508 = vld [vmem:[#allocation13 + $0x14] sm:$0xf]
    %v3509 = vld [vmem:[#allocation13 + $0x18] sm:$0xff]
    %v3510 = vld [vmem:[#allocation13 + $0x20] sm:$0xf]
    %v3511 = vld [vmem:[#allocation13 + $0x24] sm:$0xff]
    %v3512 = vld [vmem:[#allocation13 + $0x2c] sm:$0xf]
    %v3513 = vld [vmem:[#allocation13 + $0x30] sm:$0xff]
    %v3514 = vld [vmem:[#allocation13 + $0x38] sm:$0xf]
    %v3515 = vld [vmem:[#allocation13 + $0x3c] sm:$0xff]
    %v3516 = vld [vmem:[#allocation13 + $0x44] sm:$0xf]
    %v3517 = vld [vmem:[#allocation13 + $0x48] sm:$0xff]
    %v3518 = vld [vmem:[#allocation13 + $0x50] sm:$0xf]
    %v3519 = vld [vmem:[#allocation13 + $0x54] sm:$0xff]
    %v3520 = vld [vmem:[#allocation13 + $0x5c] sm:$0xf]
    %v3521 = vld [vmem:[#allocation13 + $0x60] sm:$0xff]
    %v3522 = vld [vmem:[#allocation13 + $0x68] sm:$0xf]
    %v3523 = vld [vmem:[#allocation13 + $0x6c] sm:$0xff]
    %v3524 = vld [vmem:[#allocation13 + $0x74] sm:$0xf]
    %v3525 = vld [vmem:[#allocation13 + $0x78] sm:$0xff]
    %v3526 = vld [vmem:[#allocation13 + $0x80] sm:$0xf]
    %v3527 = vld [vmem:[#allocation13 + $0x84] sm:$0xff]
    %v3528 = vld [vmem:[#allocation13 + $0x8c] sm:$0xf]
    %v3529 = vld [vmem:[#allocation13 + $0x90] sm:$0xff]
    %v3530 = vld [vmem:[#allocation13 + $0x98] sm:$0xf]
    %v3531 = vld [vmem:[#allocation13 + $0x9c] sm:$0xff]
    %v3532 = vld [vmem:[#allocation13 + $0xa4] sm:$0xf]
    %v3533 = vld [vmem:[#allocation13 + $0xa8] sm:$0xff]
    %v3534 = vld [vmem:[#allocation13 + $0xb0] sm:$0xf]
    %v3535 = vld [vmem:[#allocation13 + $0xb4] sm:$0xff]
    %v3536 = vld [vmem:[#allocation13 + $0xbc] sm:$0xf]
    %v3569 = vunpack.c.l.b16 %v3505
    %v3570 = vunpack.c.h.b16 %v3505
    %v3571 = vunpack.c.l.b16 %v3506
    %v3572 = vunpack.c.l.b16 %v3507
    %v3573 = vunpack.c.h.b16 %v3507
    %v3574 = vunpack.c.l.b16 %v3508
    %v3575 = vunpack.c.l.b16 %v3509
    %v3576 = vunpack.c.h.b16 %v3509
    %v3577 = vunpack.c.l.b16 %v3510
    %v3578 = vunpack.c.l.b16 %v3511
    %v3579 = vunpack.c.h.b16 %v3511
    %v3580 = vunpack.c.l.b16 %v3512
    %v3581 = vunpack.c.l.b16 %v3513
    %v3582 = vunpack.c.h.b16 %v3513
    %v3583 = vunpack.c.l.b16 %v3514
    %v3584 = vunpack.c.l.b16 %v3515
    %v3585 = vunpack.c.h.b16 %v3515
    %v3586 = vunpack.c.l.b16 %v3516
    %v3587 = vunpack.c.l.b16 %v3517
    %v3588 = vunpack.c.h.b16 %v3517
    %v3589 = vunpack.c.l.b16 %v3518
    %v3590 = vunpack.c.l.b16 %v3519
    %v3591 = vunpack.c.h.b16 %v3519
    %v3592 = vunpack.c.l.b16 %v3520
    %v3593 = vunpack.c.l.b16 %v3521
    %v3594 = vunpack.c.h.b16 %v3521
    %v3595 = vunpack.c.l.b16 %v3522
    %v3596 = vunpack.c.l.b16 %v3523
    %v3597 = vunpack.c.h.b16 %v3523
    %v3598 = vunpack.c.l.b16 %v3524
    %v3599 = vunpack.c.l.b16 %v3525
    %v3600 = vunpack.c.h.b16 %v3525
    %v3601 = vunpack.c.l.b16 %v3526
    %v3602 = vunpack.c.l.b16 %v3527
    %v3603 = vunpack.c.h.b16 %v3527
    %v3604 = vunpack.c.l.b16 %v3528
    %v3605 = vunpack.c.l.b16 %v3529
    %v3606 = vunpack.c.h.b16 %v3529
    %v3607 = vunpack.c.l.b16 %v3530
    %v3608 = vunpack.c.l.b16 %v3531
    %v3609 = vunpack.c.h.b16 %v3531
    %v3610 = vunpack.c.l.b16 %v3532
    %v3611 = vunpack.c.l.b16 %v3533
    %v3612 = vunpack.c.h.b16 %v3533
    %v3613 = vunpack.c.l.b16 %v3534
    %v3614 = vunpack.c.l.b16 %v3535
    %v3615 = vunpack.c.h.b16 %v3535
    %v3616 = vunpack.c.l.b16 %v3536
    %v3617 = vpack.c.b16 %v3572, %v3569
    %v3618 = vpack.c.b16 %v3573, %v3570
    %v3619 = vpack.c.b16 %v3574, %v3571
    %v3620 = vpack.c.b16 %v3578, %v3575
    %v3621 = vpack.c.b16 %v3579, %v3576
    %v3622 = vpack.c.b16 %v3580, %v3577
    %v3623 = vpack.c.b16 %v3584, %v3581
    %v3624 = vpack.c.b16 %v3585, %v3582
    %v3625 = vpack.c.b16 %v3586, %v3583
    %v3626 = vpack.c.b16 %v3590, %v3587
    %v3627 = vpack.c.b16 %v3591, %v3588
    %v3628 = vpack.c.b16 %v3592, %v3589
    %v3629 = vpack.c.b16 %v3596, %v3593
    %v3630 = vpack.c.b16 %v3597, %v3594
    %v3631 = vpack.c.b16 %v3598, %v3595
    %v3632 = vpack.c.b16 %v3602, %v3599
    %v3633 = vpack.c.b16 %v3603, %v3600
    %v3634 = vpack.c.b16 %v3604, %v3601
    %v3635 = vpack.c.b16 %v3608, %v3605
    %v3636 = vpack.c.b16 %v3609, %v3606
    %v3637 = vpack.c.b16 %v3610, %v3607
    %v3638 = vpack.c.b16 %v3614, %v3611
    %v3639 = vpack.c.b16 %v3615, %v3612
    %v3640 = vpack.c.b16 %v3616, %v3613
    %3665 = vmatprep.subr.bf16.mxu0 %v3618
    %3666 = vmatpush1.bf16.msra.mxu0 %v3617
    %3667 = vmatprep.subr.bf16.mxu0 %v3621
    %3668 = vmatpush1.bf16.msra.mxu0 %v3620
    %3669 = vmatprep.subr.bf16.mxu0 %v3624
    %3670 = vmatpush1.bf16.msra.mxu0 %v3623
    %3671 = vmatprep.subr.bf16.mxu0 %v3627
    %3672 = vmatpush1.bf16.msra.mxu0 %v3626
    %3673 = vmatprep.subr.bf16.mxu0 %v3630
    %3674 = vmatpush1.bf16.msra.mxu0 %v3629
    %3675 = vmatprep.subr.bf16.mxu0 %v3633
    %3676 = vmatpush1.bf16.msra.mxu0 %v3632
    %3677 = vmatprep.subr.bf16.mxu0 %v3636
    %3678 = vmatpush1.bf16.msra.mxu0 %v3635
    %3679 = vmatprep.subr.bf16.mxu0 %v3639
    %3680 = vmatpush1.bf16.msra.mxu0 %v3638
    %3681 = vmatprep.subr.bf16.mxu0 0
    %3682 = vmatpush1.bf16.msra.mxu0 0
    %3683 = vmatprep.subr.bf16.mxu0 0
    %3684 = vmatpush1.bf16.msra.mxu0 0
    %3685 = vmatprep.subr.bf16.mxu0 0
    %3686 = vmatpush1.bf16.msra.mxu0 0
    %3687 = vmatprep.subr.bf16.mxu0 0
    %3688 = vmatpush1.bf16.msra.mxu0 0
    %3689 = vmatprep.subr.bf16.mxu0 0
    %3690 = vmatpush1.bf16.msra.mxu0 0
    %3691 = vmatprep.subr.bf16.mxu0 0
    %3692 = vmatpush1.bf16.msra.mxu0 0
    %3693 = vmatprep.subr.bf16.mxu0 0
    %3694 = vmatpush1.bf16.msra.mxu0 0
    %3695 = vmatprep.subr.bf16.mxu0 0
    %3696 = vmatpush1.bf16.msra.mxu0 0
    %3697 = vmatprep.mubr.bf16.mxu0 0
    %3698 = vmatmul.mubr.bf16.gmra.mrb[0].mxu0 %v3504
    %v3699 = vpop.f32.mrb[0].mxu0
    %v3700 = vadd.f32 0.0, %v3699
    %v3701 = vpop.f32.mrb[0].mxu0
    %v3702 = vadd.f32 0.0, %v3701
    %v3703 = vpop.f32.mrb[0].mxu0
    %v3704 = vpop.f32.mrb[0].mxu0
    %3705 = vdwg.mxu0
    %3706 = vmatprep.subr.bf16.mxu0 0
    %3707 = vmatpush1.bf16.msra.mxu0 %v3619
    %3708 = vmatprep.subr.bf16.mxu0 0
    %3709 = vmatpush1.bf16.msra.mxu0 %v3622
    %3710 = vmatprep.subr.bf16.mxu0 0
    %3711 = vmatpush1.bf16.msra.mxu0 %v3625
    %3712 = vmatprep.subr.bf16.mxu0 0
    %3713 = vmatpush1.bf16.msra.mxu0 %v3628
    %3714 = vmatprep.subr.bf16.mxu0 0
    %3715 = vmatpush1.bf16.msra.mxu0 %v3631
    %3716 = vmatprep.subr.bf16.mxu0 0
    %3717 = vmatpush1.bf16.msra.mxu0 %v3634
    %3718 = vmatprep.subr.bf16.mxu0 0
    %3719 = vmatpush1.bf16.msra.mxu0 %v3637
    %3720 = vmatprep.subr.bf16.mxu0 0
    %3721 = vmatpush1.bf16.msra.mxu0 %v3640
    %3722 = vmatprep.subr.bf16.mxu0 0
    %3723 = vmatpush1.bf16.msra.mxu0 0
    %3724 = vmatprep.subr.bf16.mxu0 0
    %3725 = vmatpush1.bf16.msra.mxu0 0
    %3726 = vmatprep.subr.bf16.mxu0 0
    %3727 = vmatpush1.bf16.msra.mxu0 0
    %3728 = vmatprep.subr.bf16.mxu0 0
    %3729 = vmatpush1.bf16.msra.mxu0 0
    %3730 = vmatprep.subr.bf16.mxu0 0
    %3731 = vmatpush1.bf16.msra.mxu0 0
    %3732 = vmatprep.subr.bf16.mxu0 0
    %3733 = vmatpush1.bf16.msra.mxu0 0
    %3734 = vmatprep.subr.bf16.mxu0 0
    %3735 = vmatpush1.bf16.msra.mxu0 0
    %3736 = vmatprep.subr.bf16.mxu0 0
    %3737 = vmatpush1.bf16.msra.mxu0 0
    %3738 = vmatprep.mubr.bf16.mxu0 0
    %3739 = vmatmul.mubr.bf16.gmra.mrb[0].mxu0 %v3504
    %v3740 = vpop.f32.mrb[0].mxu0
    %v3741 = vadd.f32 0.0, %v3740
    %v3742 = vpop.f32.mrb[0].mxu0
    %v3743 = vpop.f32.mrb[0].mxu0
    %v3744 = vpop.f32.mrb[0].mxu0
    %3745 = vdwg.mxu0
    %v3746 = vld [vmem:[#allocation2 + $0x20] sm:$0xc]
    %v3747 = vld [vmem:[#allocation2 + $0x28] sm:$0xc]
    %v3748 = vld [vmem:[#allocation3] sm:$0xc0]
    %v3749 = vld [vmem:[#allocation3 + $0x8] sm:$0xc0]
    %v3751 = vrot.slane %v3700, 6
    %v3753 = vadd.f32 %v3746, %v3751
    %v3754 = vxor.u32 %v3753, 2147483648
    %v3755 = vmul.f32 %v3754, 1.442695
    %v3756 = vpow.pop %v3755
    %v3757 = vadd.f32 %v3756, 1.0
    %v3758 = vrcp.pop %v3757
    %v3759 = vmul.f32 1.0, %v3758
    %v3761 = vrot.slane %v3702, 2
    %v3763 = vadd.f32 %v3748, %v3761
    %v3764 = vxor.u32 %v3763, 2147483648
    %v3765 = vmul.f32 %v3764, 1.442695
    %v3766 = vpow.pop %v3765
    %v3767 = vadd.f32 %v3766, 1.0
    %v3768 = vrcp.pop %v3767
    %v3769 = vmul.f32 1.0, %v3768
    %v3770 = vadd.f32 %v3741, %v365
    %v3772 = vrot.slane %v3770, 6
    %v3774 = vmul.f32 %v3759, %v3772
    %v3775 = vadd.f32 %v3747, %v3774
    %v3776 = vtanh.pop %v3775
    %v3777 = vadd.f32 %v3741, %v642
    %v3779 = vrot.slane %v3777, 2
    %3780 = vrot.lane.b32.xlu0 %v3779, 64
    %v3781 = vpop.permute.xlu0 %3780
    %v3783 = vmul.f32 %v3769, %v3781
    %v3784 = vadd.f32 %v3749, %v3783
    %v3785 = vtanh.pop %v3784
    %s3786 = sadd.s32 %s374, 9
    %v3787 = vstv %s3786
    %vm3788 = vcmp.lt.s32.totalorder %v3787, %v359
    %v3789 = vsub.f32 1.0, %v3759
    %3791 = vrot.lane.b32.xlu0 %v3776, 64
    %v3792 = vpop.permute.xlu0 %3791
    %v3794 = vmul.f32 %v3789, %v3792
    %v3796 = vrot.slane %v3487, 6
    %3797 = vrot.lane.b32.xlu0 %v3796, 64
    %v3798 = vpop.permute.xlu0 %3797
    %v3800 = vmul.f32 %v3759, %v3798
    %v3801 = vadd.f32 %v3794, %v3800
    %v3802 = vsel %vm3788, 1, 0
    %3803 = vset.pattern.permute.xlu0 0
    %3804 = vperm.xlu0 %3803, %v3802
    %v3805 = vpop.permute.xlu0 %3804
    %vm3806 = vcmp.eq.s32.totalorder %v3805, 1
    %v3808 = vrot.slane %v3801, 2
    %3809 = vrot.lane.b32.xlu0 %v3808, 64
    %v3810 = vpop.permute.xlu0 %3809
    %v3812 = vsel %vm3806, %v3810, %v3487
    %s3813 = sadd.s32 %s376, 3
    %v3814 = vstv %s3813
    %vm3815 = vcmp.lt.s32.totalorder %v3814, %v359
    %v3816 = vsub.f32 1.0, %v3769
    %3818 = vrot.lane.b32.xlu0 %v3785, 64
    %v3819 = vpop.permute.xlu0 %3818
    %v3821 = vmul.f32 %v3816, %v3819
    %v3822 = vrot.slane %v3487, 2
    %v3824 = vmul.f32 %v3769, %v3822
    %v3825 = vadd.f32 %v3821, %v3824
    %v3826 = vsel %vm3815, 1, 0
    %3827 = vset.pattern.permute.xlu0 0
    %3828 = vperm.xlu0 %3827, %v3826
    %v3829 = vpop.permute.xlu0 %3828
    %vm3830 = vcmp.eq.s32.totalorder %v3829, 1
    %v3832 = vrot.slane %v3825, 6
    %3833 = vrot.lane.b32.xlu0 %v3832, 64
    %v3834 = vpop.permute.xlu0 %3833
    %3836 = vrot.lane.b32.xlu0 %v3487, 64
    %v3837 = vpop.permute.xlu0 %3836
    %v3839 = vsel %vm3830, %v3834, %v3837
    %3841 = vrot.lane.b32.xlu0 %v3839, 64
    %v3842 = vpop.permute.xlu0 %3841
    %v3844 = vsel %vm233, %v3812, %v3842
    %v3845 = vpack.c.bf16 %v3812, %v3812
    %v3847 = vunpack.c.l.b16 %v3845
    %v3848 = vpack.c.b16 %v3847, %v3847
    %v3849 = vrot.slane %v3848, 7
    %3851 = vst.msk [vmem:[#allocation14 + $0x8] sm:$0x2] %vm1058, %v3849
    %v3852 = vpack.c.bf16 %v3839, %v3839
    %v3854 = vunpack.c.l.b16 %v3852
    %v3855 = vpack.c.b16 %v3854, %v3854
    %v3856 = vrot.slane %v3855, 5
    %3858 = vst.msk [vmem:[#allocation15] sm:$0x8] %vm1066, %v3856
    %v3859 = vpack.c.bf16 %v3844, %v3844
    %v3860 = vld [vmem:[#allocation13] sm:$0xff]
    %v3861 = vld [vmem:[#allocation13 + $0x8] sm:$0xf]
    %v3862 = vld [vmem:[#allocation13 + $0xc] sm:$0xff]
    %v3863 = vld [vmem:[#allocation13 + $0x14] sm:$0xf]
    %v3864 = vld [vmem:[#allocation13 + $0x18] sm:$0xff]
    %v3865 = vld [vmem:[#allocation13 + $0x20] sm:$0xf]
    %v3866 = vld [vmem:[#allocation13 + $0x24] sm:$0xff]
    %v3867 = vld [vmem:[#allocation13 + $0x2c] sm:$0xf]
    %v3868 = vld [vmem:[#allocation13 + $0x30] sm:$0xff]
    %v3869 = vld [vmem:[#allocation13 + $0x38] sm:$0xf]
    %v3870 = vld [vmem:[#allocation13 + $0x3c] sm:$0xff]
    %v3871 = vld [vmem:[#allocation13 + $0x44] sm:$0xf]
    %v3872 = vld [vmem:[#allocation13 + $0x48] sm:$0xff]
    %v3873 = vld [vmem:[#allocation13 + $0x50] sm:$0xf]
    %v3874 = vld [vmem:[#allocation13 + $0x54] sm:$0xff]
    %v3875 = vld [vmem:[#allocation13 + $0x5c] sm:$0xf]
    %v3876 = vld [vmem:[#allocation13 + $0x60] sm:$0xff]
    %v3877 = vld [vmem:[#allocation13 + $0x68] sm:$0xf]
    %v3878 = vld [vmem:[#allocation13 + $0x6c] sm:$0xff]
    %v3879 = vld [vmem:[#allocation13 + $0x74] sm:$0xf]
    %v3880 = vld [vmem:[#allocation13 + $0x78] sm:$0xff]
    %v3881 = vld [vmem:[#allocation13 + $0x80] sm:$0xf]
    %v3882 = vld [vmem:[#allocation13 + $0x84] sm:$0xff]
    %v3883 = vld [vmem:[#allocation13 + $0x8c] sm:$0xf]
    %v3884 = vld [vmem:[#allocation13 + $0x90] sm:$0xff]
    %v3885 = vld [vmem:[#allocation13 + $0x98] sm:$0xf]
    %v3886 = vld [vmem:[#allocation13 + $0x9c] sm:$0xff]
    %v3887 = vld [vmem:[#allocation13 + $0xa4] sm:$0xf]
    %v3888 = vld [vmem:[#allocation13 + $0xa8] sm:$0xff]
    %v3889 = vld [vmem:[#allocation13 + $0xb0] sm:$0xf]
    %v3890 = vld [vmem:[#allocation13 + $0xb4] sm:$0xff]
    %v3891 = vld [vmem:[#allocation13 + $0xbc] sm:$0xf]
    %v3924 = vunpack.c.l.b16 %v3860
    %v3925 = vunpack.c.h.b16 %v3860
    %v3926 = vunpack.c.l.b16 %v3861
    %v3927 = vunpack.c.l.b16 %v3862
    %v3928 = vunpack.c.h.b16 %v3862
    %v3929 = vunpack.c.l.b16 %v3863
    %v3930 = vunpack.c.l.b16 %v3864
    %v3931 = vunpack.c.h.b16 %v3864
    %v3932 = vunpack.c.l.b16 %v3865
    %v3933 = vunpack.c.l.b16 %v3866
    %v3934 = vunpack.c.h.b16 %v3866
    %v3935 = vunpack.c.l.b16 %v3867
    %v3936 = vunpack.c.l.b16 %v3868
    %v3937 = vunpack.c.h.b16 %v3868
    %v3938 = vunpack.c.l.b16 %v3869
    %v3939 = vunpack.c.l.b16 %v3870
    %v3940 = vunpack.c.h.b16 %v3870
    %v3941 = vunpack.c.l.b16 %v3871
    %v3942 = vunpack.c.l.b16 %v3872
    %v3943 = vunpack.c.h.b16 %v3872
    %v3944 = vunpack.c.l.b16 %v3873
    %v3945 = vunpack.c.l.b16 %v3874
    %v3946 = vunpack.c.h.b16 %v3874
    %v3947 = vunpack.c.l.b16 %v3875
    %v3948 = vunpack.c.l.b16 %v3876
    %v3949 = vunpack.c.h.b16 %v3876
    %v3950 = vunpack.c.l.b16 %v3877
    %v3951 = vunpack.c.l.b16 %v3878
    %v3952 = vunpack.c.h.b16 %v3878
    %v3953 = vunpack.c.l.b16 %v3879
    %v3954 = vunpack.c.l.b16 %v3880
    %v3955 = vunpack.c.h.b16 %v3880
    %v3956 = vunpack.c.l.b16 %v3881
    %v3957 = vunpack.c.l.b16 %v3882
    %v3958 = vunpack.c.h.b16 %v3882
    %v3959 = vunpack.c.l.b16 %v3883
    %v3960 = vunpack.c.l.b16 %v3884
    %v3961 = vunpack.c.h.b16 %v3884
    %v3962 = vunpack.c.l.b16 %v3885
    %v3963 = vunpack.c.l.b16 %v3886
    %v3964 = vunpack.c.h.b16 %v3886
    %v3965 = vunpack.c.l.b16 %v3887
    %v3966 = vunpack.c.l.b16 %v3888
    %v3967 = vunpack.c.h.b16 %v3888
    %v3968 = vunpack.c.l.b16 %v3889
    %v3969 = vunpack.c.l.b16 %v3890
    %v3970 = vunpack.c.h.b16 %v3890
    %v3971 = vunpack.c.l.b16 %v3891
    %v3972 = vpack.c.b16 %v3927, %v3924
    %v3973 = vpack.c.b16 %v3928, %v3925
    %v3974 = vpack.c.b16 %v3929, %v3926
    %v3975 = vpack.c.b16 %v3933, %v3930
    %v3976 = vpack.c.b16 %v3934, %v3931
    %v3977 = vpack.c.b16 %v3935, %v3932
    %v3978 = vpack.c.b16 %v3939, %v3936
    %v3979 = vpack.c.b16 %v3940, %v3937
    %v3980 = vpack.c.b16 %v3941, %v3938
    %v3981 = vpack.c.b16 %v3945, %v3942
    %v3982 = vpack.c.b16 %v3946, %v3943
    %v3983 = vpack.c.b16 %v3947, %v3944
    %v3984 = vpack.c.b16 %v3951, %v3948
    %v3985 = vpack.c.b16 %v3952, %v3949
    %v3986 = vpack.c.b16 %v3953, %v3950
    %v3987 = vpack.c.b16 %v3957, %v3954
    %v3988 = vpack.c.b16 %v3958, %v3955
    %v3989 = vpack.c.b16 %v3959, %v3956
    %v3990 = vpack.c.b16 %v3963, %v3960
    %v3991 = vpack.c.b16 %v3964, %v3961
    %v3992 = vpack.c.b16 %v3965, %v3962
    %v3993 = vpack.c.b16 %v3969, %v3966
    %v3994 = vpack.c.b16 %v3970, %v3967
    %v3995 = vpack.c.b16 %v3971, %v3968
    %4020 = vmatprep.subr.bf16.mxu0 %v3973
    %4021 = vmatpush1.bf16.msra.mxu0 %v3972
    %4022 = vmatprep.subr.bf16.mxu0 %v3976
    %4023 = vmatpush1.bf16.msra.mxu0 %v3975
    %4024 = vmatprep.subr.bf16.mxu0 %v3979
    %4025 = vmatpush1.bf16.msra.mxu0 %v3978
    %4026 = vmatprep.subr.bf16.mxu0 %v3982
    %4027 = vmatpush1.bf16.msra.mxu0 %v3981
    %4028 = vmatprep.subr.bf16.mxu0 %v3985
    %4029 = vmatpush1.bf16.msra.mxu0 %v3984
    %4030 = vmatprep.subr.bf16.mxu0 %v3988
    %4031 = vmatpush1.bf16.msra.mxu0 %v3987
    %4032 = vmatprep.subr.bf16.mxu0 %v3991
    %4033 = vmatpush1.bf16.msra.mxu0 %v3990
    %4034 = vmatprep.subr.bf16.mxu0 %v3994
    %4035 = vmatpush1.bf16.msra.mxu0 %v3993
    %4036 = vmatprep.subr.bf16.mxu0 0
    %4037 = vmatpush1.bf16.msra.mxu0 0
    %4038 = vmatprep.subr.bf16.mxu0 0
    %4039 = vmatpush1.bf16.msra.mxu0 0
    %4040 = vmatprep.subr.bf16.mxu0 0
    %4041 = vmatpush1.bf16.msra.mxu0 0
    %4042 = vmatprep.subr.bf16.mxu0 0
    %4043 = vmatpush1.bf16.msra.mxu0 0
    %4044 = vmatprep.subr.bf16.mxu0 0
    %4045 = vmatpush1.bf16.msra.mxu0 0
    %4046 = vmatprep.subr.bf16.mxu0 0
    %4047 = vmatpush1.bf16.msra.mxu0 0
    %4048 = vmatprep.subr.bf16.mxu0 0
    %4049 = vmatpush1.bf16.msra.mxu0 0
    %4050 = vmatprep.subr.bf16.mxu0 0
    %4051 = vmatpush1.bf16.msra.mxu0 0
    %4052 = vmatprep.mubr.bf16.mxu0 0
    %4053 = vmatmul.mubr.bf16.gmra.mrb[0].mxu0 %v3859
    %v4054 = vpop.f32.mrb[0].mxu0
    %v4055 = vadd.f32 0.0, %v4054
    %v4056 = vpop.f32.mrb[0].mxu0
    %v4057 = vadd.f32 0.0, %v4056
    %v4058 = vpop.f32.mrb[0].mxu0
    %v4059 = vpop.f32.mrb[0].mxu0
    %4060 = vdwg.mxu0
    %4061 = vmatprep.subr.bf16.mxu0 0
    %4062 = vmatpush1.bf16.msra.mxu0 %v3974
    %4063 = vmatprep.subr.bf16.mxu0 0
    %4064 = vmatpush1.bf16.msra.mxu0 %v3977
    %4065 = vmatprep.subr.bf16.mxu0 0
    %4066 = vmatpush1.bf16.msra.mxu0 %v3980
    %4067 = vmatprep.subr.bf16.mxu0 0
    %4068 = vmatpush1.bf16.msra.mxu0 %v3983
    %4069 = vmatprep.subr.bf16.mxu0 0
    %4070 = vmatpush1.bf16.msra.mxu0 %v3986
    %4071 = vmatprep.subr.bf16.mxu0 0
    %4072 = vmatpush1.bf16.msra.mxu0 %v3989
    %4073 = vmatprep.subr.bf16.mxu0 0
    %4074 = vmatpush1.bf16.msra.mxu0 %v3992
    %4075 = vmatprep.subr.bf16.mxu0 0
    %4076 = vmatpush1.bf16.msra.mxu0 %v3995
    %4077 = vmatprep.subr.bf16.mxu0 0
    %4078 = vmatpush1.bf16.msra.mxu0 0
    %4079 = vmatprep.subr.bf16.mxu0 0
    %4080 = vmatpush1.bf16.msra.mxu0 0
    %4081 = vmatprep.subr.bf16.mxu0 0
    %4082 = vmatpush1.bf16.msra.mxu0 0
    %4083 = vmatprep.subr.bf16.mxu0 0
    %4084 = vmatpush1.bf16.msra.mxu0 0
    %4085 = vmatprep.subr.bf16.mxu0 0
    %4086 = vmatpush1.bf16.msra.mxu0 0
    %4087 = vmatprep.subr.bf16.mxu0 0
    %4088 = vmatpush1.bf16.msra.mxu0 0
    %4089 = vmatprep.subr.bf16.mxu0 0
    %4090 = vmatpush1.bf16.msra.mxu0 0
    %4091 = vmatprep.subr.bf16.mxu0 0
    %4092 = vmatpush1.bf16.msra.mxu0 0
    %4093 = vmatprep.mubr.bf16.mxu0 0
    %4094 = vmatmul.mubr.bf16.gmra.mrb[0].mxu0 %v3859
    %v4095 = vpop.f32.mrb[0].mxu0
    %v4096 = vadd.f32 0.0, %v4095
    %v4097 = vpop.f32.mrb[0].mxu0
    %v4098 = vpop.f32.mrb[0].mxu0
    %v4099 = vpop.f32.mrb[0].mxu0
    %4100 = vdwg.mxu0
    %v4101 = vld [vmem:[#allocation2 + $0x20] sm:$0x30]
    %v4102 = vld [vmem:[#allocation2 + $0x28] sm:$0x30]
    %v4103 = vld [vmem:[#allocation3] sm:$0x30]
    %v4104 = vld [vmem:[#allocation3 + $0x8] sm:$0x30]
    %v4106 = vrot.slane %v4055, 4
    %v4108 = vadd.f32 %v4101, %v4106
    %v4109 = vxor.u32 %v4108, 2147483648
    %v4110 = vmul.f32 %v4109, 1.442695
    %v4111 = vpow.pop %v4110
    %v4112 = vadd.f32 %v4111, 1.0
    %v4113 = vrcp.pop %v4112
    %v4114 = vmul.f32 1.0, %v4113
    %v4116 = vrot.slane %v4057, 4
    %v4118 = vadd.f32 %v4103, %v4116
    %v4119 = vxor.u32 %v4118, 2147483648
    %v4120 = vmul.f32 %v4119, 1.442695
    %v4121 = vpow.pop %v4120
    %v4122 = vadd.f32 %v4121, 1.0
    %v4123 = vrcp.pop %v4122
    %v4124 = vmul.f32 1.0, %v4123
    %v4125 = vadd.f32 %v4096, %v365
    %v4127 = vrot.slane %v4125, 4
    %v4129 = vmul.f32 %v4114, %v4127
    %v4130 = vadd.f32 %v4102, %v4129
    %v4131 = vtanh.pop %v4130
    %v4132 = vadd.f32 %v4096, %v642
    %v4134 = vrot.slane %v4132, 4
    %4135 = vrot.lane.b32.xlu0 %v4134, 64
    %v4136 = vpop.permute.xlu0 %4135
    %v4138 = vmul.f32 %v4124, %v4136
    %v4139 = vadd.f32 %v4104, %v4138
    %v4140 = vtanh.pop %v4139
    %s4141 = sadd.s32 %s374, 10
    %v4142 = vstv %s4141
    %vm4143 = vcmp.lt.s32.totalorder %v4142, %v359
    %v4144 = vsub.f32 1.0, %v4114
    %4146 = vrot.lane.b32.xlu0 %v4131, 64
    %v4147 = vpop.permute.xlu0 %4146
    %v4149 = vmul.f32 %v4144, %v4147
    %v4151 = vrot.slane %v3844, 4
    %4152 = vrot.lane.b32.xlu0 %v4151, 64
    %v4153 = vpop.permute.xlu0 %4152
    %v4155 = vmul.f32 %v4114, %v4153
    %v4156 = vadd.f32 %v4149, %v4155
    %v4157 = vsel %vm4143, 1, 0
    %4158 = vset.pattern.permute.xlu0 0
    %4159 = vperm.xlu0 %4158, %v4157
    %v4160 = vpop.permute.xlu0 %4159
    %vm4161 = vcmp.eq.s32.totalorder %v4160, 1
    %v4163 = vrot.slane %v4156, 4
    %4164 = vrot.lane.b32.xlu0 %v4163, 64
    %v4165 = vpop.permute.xlu0 %4164
    %v4167 = vsel %vm4161, %v4165, %v3844
    %s4168 = sadd.s32 %s376, 2
    %v4169 = vstv %s4168
    %vm4170 = vcmp.lt.s32.totalorder %v4169, %v359
    %v4171 = vsub.f32 1.0, %v4124
    %4173 = vrot.lane.b32.xlu0 %v4140, 64
    %v4174 = vpop.permute.xlu0 %4173
    %v4176 = vmul.f32 %v4171, %v4174
    %v4178 = vmul.f32 %v4124, %v4151
    %v4179 = vadd.f32 %v4176, %v4178
    %v4180 = vsel %vm4170, 1, 0
    %4181 = vset.pattern.permute.xlu0 0
    %4182 = vperm.xlu0 %4181, %v4180
    %v4183 = vpop.permute.xlu0 %4182
    %vm4184 = vcmp.eq.s32.totalorder %v4183, 1
    %v4186 = vrot.slane %v4179, 4
    %4187 = vrot.lane.b32.xlu0 %v4186, 64
    %v4188 = vpop.permute.xlu0 %4187
    %4190 = vrot.lane.b32.xlu0 %v3844, 64
    %v4191 = vpop.permute.xlu0 %4190
    %v4193 = vsel %vm4184, %v4188, %v4191
    %4195 = vrot.lane.b32.xlu0 %v4193, 64
    %v4196 = vpop.permute.xlu0 %4195
    %v4198 = vsel %vm233, %v4167, %v4196
    %v4199 = vpack.c.bf16 %v4167, %v4167
    %v4201 = vunpack.c.l.b16 %v4199
    %v4202 = vpack.c.b16 %v4201, %v4201
    %v4203 = vrot.slane %v4202, 6
    %4205 = vst.msk [vmem:[#allocation14 + $0x8] sm:$0x4] %vm1414, %v4203
    %v4206 = vpack.c.bf16 %v4193, %v4193
    %v4208 = vunpack.c.l.b16 %v4206
    %v4209 = vpack.c.b16 %v4208, %v4208
    %v4210 = vrot.slane %v4209, 6
    %4212 = vst.msk [vmem:[#allocation15] sm:$0x4] %vm1414, %v4210
    %v4213 = vpack.c.bf16 %v4198, %v4198
    %v4214 = vld [vmem:[#allocation13] sm:$0xff]
    %v4215 = vld [vmem:[#allocation13 + $0x8] sm:$0xf]
    %v4216 = vld [vmem:[#allocation13 + $0xc] sm:$0xff]
    %v4217 = vld [vmem:[#allocation13 + $0x14] sm:$0xf]
    %v4218 = vld [vmem:[#allocation13 + $0x18] sm:$0xff]
    %v4219 = vld [vmem:[#allocation13 + $0x20] sm:$0xf]
    %v4220 = vld [vmem:[#allocation13 + $0x24] sm:$0xff]
    %v4221 = vld [vmem:[#allocation13 + $0x2c] sm:$0xf]
    %v4222 = vld [vmem:[#allocation13 + $0x30] sm:$0xff]
    %v4223 = vld [vmem:[#allocation13 + $0x38] sm:$0xf]
    %v4224 = vld [vmem:[#allocation13 + $0x3c] sm:$0xff]
    %v4225 = vld [vmem:[#allocation13 + $0x44] sm:$0xf]
    %v4226 = vld [vmem:[#allocation13 + $0x48] sm:$0xff]
    %v4227 = vld [vmem:[#allocation13 + $0x50] sm:$0xf]
    %v4228 = vld [vmem:[#allocation13 + $0x54] sm:$0xff]
    %v4229 = vld [vmem:[#allocation13 + $0x5c] sm:$0xf]
    %v4230 = vld [vmem:[#allocation13 + $0x60] sm:$0xff]
    %v4231 = vld [vmem:[#allocation13 + $0x68] sm:$0xf]
    %v4232 = vld [vmem:[#allocation13 + $0x6c] sm:$0xff]
    %v4233 = vld [vmem:[#allocation13 + $0x74] sm:$0xf]
    %v4234 = vld [vmem:[#allocation13 + $0x78] sm:$0xff]
    %v4235 = vld [vmem:[#allocation13 + $0x80] sm:$0xf]
    %v4236 = vld [vmem:[#allocation13 + $0x84] sm:$0xff]
    %v4237 = vld [vmem:[#allocation13 + $0x8c] sm:$0xf]
    %v4238 = vld [vmem:[#allocation13 + $0x90] sm:$0xff]
    %v4239 = vld [vmem:[#allocation13 + $0x98] sm:$0xf]
    %v4240 = vld [vmem:[#allocation13 + $0x9c] sm:$0xff]
    %v4241 = vld [vmem:[#allocation13 + $0xa4] sm:$0xf]
    %v4242 = vld [vmem:[#allocation13 + $0xa8] sm:$0xff]
    %v4243 = vld [vmem:[#allocation13 + $0xb0] sm:$0xf]
    %v4244 = vld [vmem:[#allocation13 + $0xb4] sm:$0xff]
    %v4245 = vld [vmem:[#allocation13 + $0xbc] sm:$0xf]
    %v4278 = vunpack.c.l.b16 %v4214
    %v4279 = vunpack.c.h.b16 %v4214
    %v4280 = vunpack.c.l.b16 %v4215
    %v4281 = vunpack.c.l.b16 %v4216
    %v4282 = vunpack.c.h.b16 %v4216
    %v4283 = vunpack.c.l.b16 %v4217
    %v4284 = vunpack.c.l.b16 %v4218
    %v4285 = vunpack.c.h.b16 %v4218
    %v4286 = vunpack.c.l.b16 %v4219
    %v4287 = vunpack.c.l.b16 %v4220
    %v4288 = vunpack.c.h.b16 %v4220
    %v4289 = vunpack.c.l.b16 %v4221
    %v4290 = vunpack.c.l.b16 %v4222
    %v4291 = vunpack.c.h.b16 %v4222
    %v4292 = vunpack.c.l.b16 %v4223
    %v4293 = vunpack.c.l.b16 %v4224
    %v4294 = vunpack.c.h.b16 %v4224
    %v4295 = vunpack.c.l.b16 %v4225
    %v4296 = vunpack.c.l.b16 %v4226
    %v4297 = vunpack.c.h.b16 %v4226
    %v4298 = vunpack.c.l.b16 %v4227
    %v4299 = vunpack.c.l.b16 %v4228
    %v4300 = vunpack.c.h.b16 %v4228
    %v4301 = vunpack.c.l.b16 %v4229
    %v4302 = vunpack.c.l.b16 %v4230
    %v4303 = vunpack.c.h.b16 %v4230
    %v4304 = vunpack.c.l.b16 %v4231
    %v4305 = vunpack.c.l.b16 %v4232
    %v4306 = vunpack.c.h.b16 %v4232
    %v4307 = vunpack.c.l.b16 %v4233
    %v4308 = vunpack.c.l.b16 %v4234
    %v4309 = vunpack.c.h.b16 %v4234
    %v4310 = vunpack.c.l.b16 %v4235
    %v4311 = vunpack.c.l.b16 %v4236
    %v4312 = vunpack.c.h.b16 %v4236
    %v4313 = vunpack.c.l.b16 %v4237
    %v4314 = vunpack.c.l.b16 %v4238
    %v4315 = vunpack.c.h.b16 %v4238
    %v4316 = vunpack.c.l.b16 %v4239
    %v4317 = vunpack.c.l.b16 %v4240
    %v4318 = vunpack.c.h.b16 %v4240
    %v4319 = vunpack.c.l.b16 %v4241
    %v4320 = vunpack.c.l.b16 %v4242
    %v4321 = vunpack.c.h.b16 %v4242
    %v4322 = vunpack.c.l.b16 %v4243
    %v4323 = vunpack.c.l.b16 %v4244
    %v4324 = vunpack.c.h.b16 %v4244
    %v4325 = vunpack.c.l.b16 %v4245
    %v4326 = vpack.c.b16 %v4281, %v4278
    %v4327 = vpack.c.b16 %v4282, %v4279
    %v4328 = vpack.c.b16 %v4283, %v4280
    %v4329 = vpack.c.b16 %v4287, %v4284
    %v4330 = vpack.c.b16 %v4288, %v4285
    %v4331 = vpack.c.b16 %v4289, %v4286
    %v4332 = vpack.c.b16 %v4293, %v4290
    %v4333 = vpack.c.b16 %v4294, %v4291
    %v4334 = vpack.c.b16 %v4295, %v4292
    %v4335 = vpack.c.b16 %v4299, %v4296
    %v4336 = vpack.c.b16 %v4300, %v4297
    %v4337 = vpack.c.b16 %v4301, %v4298
    %v4338 = vpack.c.b16 %v4305, %v4302
    %v4339 = vpack.c.b16 %v4306, %v4303
    %v4340 = vpack.c.b16 %v4307, %v4304
    %v4341 = vpack.c.b16 %v4311, %v4308
    %v4342 = vpack.c.b16 %v4312, %v4309
    %v4343 = vpack.c.b16 %v4313, %v4310
    %v4344 = vpack.c.b16 %v4317, %v4314
    %v4345 = vpack.c.b16 %v4318, %v4315
    %v4346 = vpack.c.b16 %v4319, %v4316
    %v4347 = vpack.c.b16 %v4323, %v4320
    %v4348 = vpack.c.b16 %v4324, %v4321
    %v4349 = vpack.c.b16 %v4325, %v4322
    %4374 = vmatprep.subr.bf16.mxu0 %v4327
    %4375 = vmatpush1.bf16.msra.mxu0 %v4326
    %4376 = vmatprep.subr.bf16.mxu0 %v4330
    %4377 = vmatpush1.bf16.msra.mxu0 %v4329
    %4378 = vmatprep.subr.bf16.mxu0 %v4333
    %4379 = vmatpush1.bf16.msra.mxu0 %v4332
    %4380 = vmatprep.subr.bf16.mxu0 %v4336
    %4381 = vmatpush1.bf16.msra.mxu0 %v4335
    %4382 = vmatprep.subr.bf16.mxu0 %v4339
    %4383 = vmatpush1.bf16.msra.mxu0 %v4338
    %4384 = vmatprep.subr.bf16.mxu0 %v4342
    %4385 = vmatpush1.bf16.msra.mxu0 %v4341
    %4386 = vmatprep.subr.bf16.mxu0 %v4345
    %4387 = vmatpush1.bf16.msra.mxu0 %v4344
    %4388 = vmatprep.subr.bf16.mxu0 %v4348
    %4389 = vmatpush1.bf16.msra.mxu0 %v4347
    %4390 = vmatprep.subr.bf16.mxu0 0
    %4391 = vmatpush1.bf16.msra.mxu0 0
    %4392 = vmatprep.subr.bf16.mxu0 0
    %4393 = vmatpush1.bf16.msra.mxu0 0
    %4394 = vmatprep.subr.bf16.mxu0 0
    %4395 = vmatpush1.bf16.msra.mxu0 0
    %4396 = vmatprep.subr.bf16.mxu0 0
    %4397 = vmatpush1.bf16.msra.mxu0 0
    %4398 = vmatprep.subr.bf16.mxu0 0
    %4399 = vmatpush1.bf16.msra.mxu0 0
    %4400 = vmatprep.subr.bf16.mxu0 0
    %4401 = vmatpush1.bf16.msra.mxu0 0
    %4402 = vmatprep.subr.bf16.mxu0 0
    %4403 = vmatpush1.bf16.msra.mxu0 0
    %4404 = vmatprep.subr.bf16.mxu0 0
    %4405 = vmatpush1.bf16.msra.mxu0 0
    %4406 = vmatprep.mubr.bf16.mxu0 0
    %4407 = vmatmul.mubr.bf16.gmra.mrb[0].mxu0 %v4213
    %v4408 = vpop.f32.mrb[0].mxu0
    %v4409 = vadd.f32 0.0, %v4408
    %v4410 = vpop.f32.mrb[0].mxu0
    %v4411 = vadd.f32 0.0, %v4410
    %v4412 = vpop.f32.mrb[0].mxu0
    %v4413 = vpop.f32.mrb[0].mxu0
    %4414 = vdwg.mxu0
    %4415 = vmatprep.subr.bf16.mxu0 0
    %4416 = vmatpush1.bf16.msra.mxu0 %v4328
    %4417 = vmatprep.subr.bf16.mxu0 0
    %4418 = vmatpush1.bf16.msra.mxu0 %v4331
    %4419 = vmatprep.subr.bf16.mxu0 0
    %4420 = vmatpush1.bf16.msra.mxu0 %v4334
    %4421 = vmatprep.subr.bf16.mxu0 0
    %4422 = vmatpush1.bf16.msra.mxu0 %v4337
    %4423 = vmatprep.subr.bf16.mxu0 0
    %4424 = vmatpush1.bf16.msra.mxu0 %v4340
    %4425 = vmatprep.subr.bf16.mxu0 0
    %4426 = vmatpush1.bf16.msra.mxu0 %v4343
    %4427 = vmatprep.subr.bf16.mxu0 0
    %4428 = vmatpush1.bf16.msra.mxu0 %v4346
    %4429 = vmatprep.subr.bf16.mxu0 0
    %4430 = vmatpush1.bf16.msra.mxu0 %v4349
    %4431 = vmatprep.subr.bf16.mxu0 0
    %4432 = vmatpush1.bf16.msra.mxu0 0
    %4433 = vmatprep.subr.bf16.mxu0 0
    %4434 = vmatpush1.bf16.msra.mxu0 0
    %4435 = vmatprep.subr.bf16.mxu0 0
    %4436 = vmatpush1.bf16.msra.mxu0 0
    %4437 = vmatprep.subr.bf16.mxu0 0
    %4438 = vmatpush1.bf16.msra.mxu0 0
    %4439 = vmatprep.subr.bf16.mxu0 0
    %4440 = vmatpush1.bf16.msra.mxu0 0
    %4441 = vmatprep.subr.bf16.mxu0 0
    %4442 = vmatpush1.bf16.msra.mxu0 0
    %4443 = vmatprep.subr.bf16.mxu0 0
    %4444 = vmatpush1.bf16.msra.mxu0 0
    %4445 = vmatprep.subr.bf16.mxu0 0
    %4446 = vmatpush1.bf16.msra.mxu0 0
    %4447 = vmatprep.mubr.bf16.mxu0 0
    %4448 = vmatmul.mubr.bf16.gmra.mrb[0].mxu0 %v4213
    %v4449 = vpop.f32.mrb[0].mxu0
    %v4450 = vadd.f32 0.0, %v4449
    %v4451 = vpop.f32.mrb[0].mxu0
    %v4452 = vpop.f32.mrb[0].mxu0
    %v4453 = vpop.f32.mrb[0].mxu0
    %4454 = vdwg.mxu0
    %v4455 = vld [vmem:[#allocation2 + $0x20] sm:$0xc0]
    %v4456 = vld [vmem:[#allocation2 + $0x28] sm:$0xc0]
    %v4457 = vld [vmem:[#allocation3] sm:$0xc]
    %v4458 = vld [vmem:[#allocation3 + $0x8] sm:$0xc]
    %v4460 = vrot.slane %v4409, 2
    %v4462 = vadd.f32 %v4455, %v4460
    %v4463 = vxor.u32 %v4462, 2147483648
    %v4464 = vmul.f32 %v4463, 1.442695
    %v4465 = vpow.pop %v4464
    %v4466 = vadd.f32 %v4465, 1.0
    %v4467 = vrcp.pop %v4466
    %v4468 = vmul.f32 1.0, %v4467
    %v4470 = vrot.slane %v4411, 6
    %v4472 = vadd.f32 %v4457, %v4470
    %v4473 = vxor.u32 %v4472, 2147483648
    %v4474 = vmul.f32 %v4473, 1.442695
    %v4475 = vpow.pop %v4474
    %v4476 = vadd.f32 %v4475, 1.0
    %v4477 = vrcp.pop %v4476
    %v4478 = vmul.f32 1.0, %v4477
    %v4479 = vadd.f32 %v4450, %v365
    %v4481 = vrot.slane %v4479, 2
    %v4483 = vmul.f32 %v4468, %v4481
    %v4484 = vadd.f32 %v4456, %v4483
    %v4485 = vtanh.pop %v4484
    %v4486 = vadd.f32 %v4450, %v642
    %v4488 = vrot.slane %v4486, 6
    %4489 = vrot.lane.b32.xlu0 %v4488, 64
    %v4490 = vpop.permute.xlu0 %4489
    %v4492 = vmul.f32 %v4478, %v4490
    %v4493 = vadd.f32 %v4458, %v4492
    %v4494 = vtanh.pop %v4493
    %s4495 = sadd.s32 %s374, 11
    %v4496 = vstv %s4495
    %vm4497 = vcmp.lt.s32.totalorder %v4496, %v359
    %v4498 = vsub.f32 1.0, %v4468
    %4500 = vrot.lane.b32.xlu0 %v4485, 64
    %v4501 = vpop.permute.xlu0 %4500
    %v4503 = vmul.f32 %v4498, %v4501
    %v4505 = vrot.slane %v4198, 2
    %4506 = vrot.lane.b32.xlu0 %v4505, 64
    %v4507 = vpop.permute.xlu0 %4506
    %v4509 = vmul.f32 %v4468, %v4507
    %v4510 = vadd.f32 %v4503, %v4509
    %v4511 = vsel %vm4497, 1, 0
    %4512 = vset.pattern.permute.xlu0 0
    %4513 = vperm.xlu0 %4512, %v4511
    %v4514 = vpop.permute.xlu0 %4513
    %vm4515 = vcmp.eq.s32.totalorder %v4514, 1
    %v4517 = vrot.slane %v4510, 6
    %4518 = vrot.lane.b32.xlu0 %v4517, 64
    %v4519 = vpop.permute.xlu0 %4518
    %v4521 = vsel %vm4515, %v4519, %v4198
    %s4522 = sadd.s32 %s376, 1
    %v4523 = vstv %s4522
    %vm4524 = vcmp.lt.s32.totalorder %v4523, %v359
    %v4525 = vsub.f32 1.0, %v4478
    %4527 = vrot.lane.b32.xlu0 %v4494, 64
    %v4528 = vpop.permute.xlu0 %4527
    %v4530 = vmul.f32 %v4525, %v4528
    %v4531 = vrot.slane %v4198, 6
    %v4533 = vmul.f32 %v4478, %v4531
    %v4534 = vadd.f32 %v4530, %v4533
    %v4535 = vsel %vm4524, 1, 0
    %4536 = vset.pattern.permute.xlu0 0
    %4537 = vperm.xlu0 %4536, %v4535
    %v4538 = vpop.permute.xlu0 %4537
    %vm4539 = vcmp.eq.s32.totalorder %v4538, 1
    %v4541 = vrot.slane %v4534, 2
    %4542 = vrot.lane.b32.xlu0 %v4541, 64
    %v4543 = vpop.permute.xlu0 %4542
    %4545 = vrot.lane.b32.xlu0 %v4198, 64
    %v4546 = vpop.permute.xlu0 %4545
    %v4548 = vsel %vm4539, %v4543, %v4546
    %4550 = vrot.lane.b32.xlu0 %v4548, 64
    %v4551 = vpop.permute.xlu0 %4550
    %v4553 = vsel %vm233, %v4521, %v4551
    %v4554 = vpack.c.bf16 %v4521, %v4521
    %v4556 = vunpack.c.l.b16 %v4554
    %v4557 = vpack.c.b16 %v4556, %v4556
    %v4558 = vrot.slane %v4557, 5
    %4560 = vst.msk [vmem:[#allocation14 + $0x8] sm:$0x8] %vm1066, %v4558
    %v4561 = vpack.c.bf16 %v4548, %v4548
    %v4563 = vunpack.c.l.b16 %v4561
    %v4564 = vpack.c.b16 %v4563, %v4563
    %v4565 = vrot.slane %v4564, 7
    %4567 = vst.msk [vmem:[#allocation15] sm:$0x2] %vm1058, %v4565
    %v4568 = vpack.c.bf16 %v4553, %v4553
    %v4569 = vld [vmem:[#allocation13] sm:$0xff]
    %v4570 = vld [vmem:[#allocation13 + $0x8] sm:$0xf]
    %v4571 = vld [vmem:[#allocation13 + $0xc] sm:$0xff]
    %v4572 = vld [vmem:[#allocation13 + $0x14] sm:$0xf]
    %v4573 = vld [vmem:[#allocation13 + $0x18] sm:$0xff]
    %v4574 = vld [vmem:[#allocation13 + $0x20] sm:$0xf]
    %v4575 = vld [vmem:[#allocation13 + $0x24] sm:$0xff]
    %v4576 = vld [vmem:[#allocation13 + $0x2c] sm:$0xf]
    %v4577 = vld [vmem:[#allocation13 + $0x30] sm:$0xff]
    %v4578 = vld [vmem:[#allocation13 + $0x38] sm:$0xf]
    %v4579 = vld [vmem:[#allocation13 + $0x3c] sm:$0xff]
    %v4580 = vld [vmem:[#allocation13 + $0x44] sm:$0xf]
    %v4581 = vld [vmem:[#allocation13 + $0x48] sm:$0xff]
    %v4582 = vld [vmem:[#allocation13 + $0x50] sm:$0xf]
    %v4583 = vld [vmem:[#allocation13 + $0x54] sm:$0xff]
    %v4584 = vld [vmem:[#allocation13 + $0x5c] sm:$0xf]
    %v4585 = vld [vmem:[#allocation13 + $0x60] sm:$0xff]
    %v4586 = vld [vmem:[#allocation13 + $0x68] sm:$0xf]
    %v4587 = vld [vmem:[#allocation13 + $0x6c] sm:$0xff]
    %v4588 = vld [vmem:[#allocation13 + $0x74] sm:$0xf]
    %v4589 = vld [vmem:[#allocation13 + $0x78] sm:$0xff]
    %v4590 = vld [vmem:[#allocation13 + $0x80] sm:$0xf]
    %v4591 = vld [vmem:[#allocation13 + $0x84] sm:$0xff]
    %v4592 = vld [vmem:[#allocation13 + $0x8c] sm:$0xf]
    %v4593 = vld [vmem:[#allocation13 + $0x90] sm:$0xff]
    %v4594 = vld [vmem:[#allocation13 + $0x98] sm:$0xf]
    %v4595 = vld [vmem:[#allocation13 + $0x9c] sm:$0xff]
    %v4596 = vld [vmem:[#allocation13 + $0xa4] sm:$0xf]
    %v4597 = vld [vmem:[#allocation13 + $0xa8] sm:$0xff]
    %v4598 = vld [vmem:[#allocation13 + $0xb0] sm:$0xf]
    %v4599 = vld [vmem:[#allocation13 + $0xb4] sm:$0xff]
    %v4600 = vld [vmem:[#allocation13 + $0xbc] sm:$0xf]
    %v4633 = vunpack.c.l.b16 %v4569
    %v4634 = vunpack.c.h.b16 %v4569
    %v4635 = vunpack.c.l.b16 %v4570
    %v4636 = vunpack.c.l.b16 %v4571
    %v4637 = vunpack.c.h.b16 %v4571
    %v4638 = vunpack.c.l.b16 %v4572
    %v4639 = vunpack.c.l.b16 %v4573
    %v4640 = vunpack.c.h.b16 %v4573
    %v4641 = vunpack.c.l.b16 %v4574
    %v4642 = vunpack.c.l.b16 %v4575
    %v4643 = vunpack.c.h.b16 %v4575
    %v4644 = vunpack.c.l.b16 %v4576
    %v4645 = vunpack.c.l.b16 %v4577
    %v4646 = vunpack.c.h.b16 %v4577
    %v4647 = vunpack.c.l.b16 %v4578
    %v4648 = vunpack.c.l.b16 %v4579
    %v4649 = vunpack.c.h.b16 %v4579
    %v4650 = vunpack.c.l.b16 %v4580
    %v4651 = vunpack.c.l.b16 %v4581
    %v4652 = vunpack.c.h.b16 %v4581
    %v4653 = vunpack.c.l.b16 %v4582
    %v4654 = vunpack.c.l.b16 %v4583
    %v4655 = vunpack.c.h.b16 %v4583
    %v4656 = vunpack.c.l.b16 %v4584
    %v4657 = vunpack.c.l.b16 %v4585
    %v4658 = vunpack.c.h.b16 %v4585
    %v4659 = vunpack.c.l.b16 %v4586
    %v4660 = vunpack.c.l.b16 %v4587
    %v4661 = vunpack.c.h.b16 %v4587
    %v4662 = vunpack.c.l.b16 %v4588
    %v4663 = vunpack.c.l.b16 %v4589
    %v4664 = vunpack.c.h.b16 %v4589
    %v4665 = vunpack.c.l.b16 %v4590
    %v4666 = vunpack.c.l.b16 %v4591
    %v4667 = vunpack.c.h.b16 %v4591
    %v4668 = vunpack.c.l.b16 %v4592
    %v4669 = vunpack.c.l.b16 %v4593
    %v4670 = vunpack.c.h.b16 %v4593
    %v4671 = vunpack.c.l.b16 %v4594
    %v4672 = vunpack.c.l.b16 %v4595
    %v4673 = vunpack.c.h.b16 %v4595
    %v4674 = vunpack.c.l.b16 %v4596
    %v4675 = vunpack.c.l.b16 %v4597
    %v4676 = vunpack.c.h.b16 %v4597
    %v4677 = vunpack.c.l.b16 %v4598
    %v4678 = vunpack.c.l.b16 %v4599
    %v4679 = vunpack.c.h.b16 %v4599
    %v4680 = vunpack.c.l.b16 %v4600
    %v4681 = vpack.c.b16 %v4636, %v4633
    %v4682 = vpack.c.b16 %v4637, %v4634
    %v4683 = vpack.c.b16 %v4638, %v4635
    %v4684 = vpack.c.b16 %v4642, %v4639
    %v4685 = vpack.c.b16 %v4643, %v4640
    %v4686 = vpack.c.b16 %v4644, %v4641
    %v4687 = vpack.c.b16 %v4648, %v4645
    %v4688 = vpack.c.b16 %v4649, %v4646
    %v4689 = vpack.c.b16 %v4650, %v4647
    %v4690 = vpack.c.b16 %v4654, %v4651
    %v4691 = vpack.c.b16 %v4655, %v4652
    %v4692 = vpack.c.b16 %v4656, %v4653
    %v4693 = vpack.c.b16 %v4660, %v4657
    %v4694 = vpack.c.b16 %v4661, %v4658
    %v4695 = vpack.c.b16 %v4662, %v4659
    %v4696 = vpack.c.b16 %v4666, %v4663
    %v4697 = vpack.c.b16 %v4667, %v4664
    %v4698 = vpack.c.b16 %v4668, %v4665
    %v4699 = vpack.c.b16 %v4672, %v4669
    %v4700 = vpack.c.b16 %v4673, %v4670
    %v4701 = vpack.c.b16 %v4674, %v4671
    %v4702 = vpack.c.b16 %v4678, %v4675
    %v4703 = vpack.c.b16 %v4679, %v4676
    %v4704 = vpack.c.b16 %v4680, %v4677
    %4729 = vmatprep.subr.bf16.mxu0 %v4682
    %4730 = vmatpush1.bf16.msra.mxu0 %v4681
    %4731 = vmatprep.subr.bf16.mxu0 %v4685
    %4732 = vmatpush1.bf16.msra.mxu0 %v4684
    %4733 = vmatprep.subr.bf16.mxu0 %v4688
    %4734 = vmatpush1.bf16.msra.mxu0 %v4687
    %4735 = vmatprep.subr.bf16.mxu0 %v4691
    %4736 = vmatpush1.bf16.msra.mxu0 %v4690
    %4737 = vmatprep.subr.bf16.mxu0 %v4694
    %4738 = vmatpush1.bf16.msra.mxu0 %v4693
    %4739 = vmatprep.subr.bf16.mxu0 %v4697
    %4740 = vmatpush1.bf16.msra.mxu0 %v4696
    %4741 = vmatprep.subr.bf16.mxu0 %v4700
    %4742 = vmatpush1.bf16.msra.mxu0 %v4699
    %4743 = vmatprep.subr.bf16.mxu0 %v4703
    %4744 = vmatpush1.bf16.msra.mxu0 %v4702
    %4745 = vmatprep.subr.bf16.mxu0 0
    %4746 = vmatpush1.bf16.msra.mxu0 0
    %4747 = vmatprep.subr.bf16.mxu0 0
    %4748 = vmatpush1.bf16.msra.mxu0 0
    %4749 = vmatprep.subr.bf16.mxu0 0
    %4750 = vmatpush1.bf16.msra.mxu0 0
    %4751 = vmatprep.subr.bf16.mxu0 0
    %4752 = vmatpush1.bf16.msra.mxu0 0
    %4753 = vmatprep.subr.bf16.mxu0 0
    %4754 = vmatpush1.bf16.msra.mxu0 0
    %4755 = vmatprep.subr.bf16.mxu0 0
    %4756 = vmatpush1.bf16.msra.mxu0 0
    %4757 = vmatprep.subr.bf16.mxu0 0
    %4758 = vmatpush1.bf16.msra.mxu0 0
    %4759 = vmatprep.subr.bf16.mxu0 0
    %4760 = vmatpush1.bf16.msra.mxu0 0
    %4761 = vmatprep.mubr.bf16.mxu0 0
    %4762 = vmatmul.mubr.bf16.gmra.mrb[0].mxu0 %v4568
    %v4763 = vpop.f32.mrb[0].mxu0
    %v4764 = vadd.f32 0.0, %v4763
    %v4765 = vpop.f32.mrb[0].mxu0
    %v4766 = vadd.f32 0.0, %v4765
    %v4767 = vpop.f32.mrb[0].mxu0
    %v4768 = vpop.f32.mrb[0].mxu0
    %4769 = vdwg.mxu0
    %4770 = vmatprep.subr.bf16.mxu0 0
    %4771 = vmatpush1.bf16.msra.mxu0 %v4683
    %4772 = vmatprep.subr.bf16.mxu0 0
    %4773 = vmatpush1.bf16.msra.mxu0 %v4686
    %4774 = vmatprep.subr.bf16.mxu0 0
    %4775 = vmatpush1.bf16.msra.mxu0 %v4689
    %4776 = vmatprep.subr.bf16.mxu0 0
    %4777 = vmatpush1.bf16.msra.mxu0 %v4692
    %4778 = vmatprep.subr.bf16.mxu0 0
    %4779 = vmatpush1.bf16.msra.mxu0 %v4695
    %4780 = vmatprep.subr.bf16.mxu0 0
    %4781 = vmatpush1.bf16.msra.mxu0 %v4698
    %4782 = vmatprep.subr.bf16.mxu0 0
    %4783 = vmatpush1.bf16.msra.mxu0 %v4701
    %4784 = vmatprep.subr.bf16.mxu0 0
    %4785 = vmatpush1.bf16.msra.mxu0 %v4704
    %4786 = vmatprep.subr.bf16.mxu0 0
    %4787 = vmatpush1.bf16.msra.mxu0 0
    %4788 = vmatprep.subr.bf16.mxu0 0
    %4789 = vmatpush1.bf16.msra.mxu0 0
    %4790 = vmatprep.subr.bf16.mxu0 0
    %4791 = vmatpush1.bf16.msra.mxu0 0
    %4792 = vmatprep.subr.bf16.mxu0 0
    %4793 = vmatpush1.bf16.msra.mxu0 0
    %4794 = vmatprep.subr.bf16.mxu0 0
    %4795 = vmatpush1.bf16.msra.mxu0 0
    %4796 = vmatprep.subr.bf16.mxu0 0
    %4797 = vmatpush1.bf16.msra.mxu0 0
    %4798 = vmatprep.subr.bf16.mxu0 0
    %4799 = vmatpush1.bf16.msra.mxu0 0
    %4800 = vmatprep.subr.bf16.mxu0 0
    %4801 = vmatpush1.bf16.msra.mxu0 0
    %4802 = vmatprep.mubr.bf16.mxu0 0
    %4803 = vmatmul.mubr.bf16.gmra.mrb[0].mxu0 %v4568
    %v4804 = vpop.f32.mrb[0].mxu0
    %v4805 = vadd.f32 0.0, %v4804
    %v4806 = vpop.f32.mrb[0].mxu0
    %v4807 = vpop.f32.mrb[0].mxu0
    %v4808 = vpop.f32.mrb[0].mxu0
    %4809 = vdwg.mxu0
    %v4810 = vld [vmem:[#allocation2 + $0x30] sm:$0x3]
    %v4811 = vld [vmem:[#allocation2 + $0x38] sm:$0x3]
    %v4812 = vld [vmem:[#allocation3] sm:$0x3]
    %v4813 = vld [vmem:[#allocation3 + $0x8] sm:$0x3]
    %v4814 = vadd.f32 %v4810, %v4764
    %v4815 = vxor.u32 %v4814, 2147483648
    %v4816 = vmul.f32 %v4815, 1.442695
    %v4817 = vpow.pop %v4816
    %v4818 = vadd.f32 %v4817, 1.0
    %v4819 = vrcp.pop %v4818
    %v4820 = vmul.f32 1.0, %v4819
    %v4821 = vadd.f32 %v4812, %v4766
    %v4822 = vxor.u32 %v4821, 2147483648
    %v4823 = vmul.f32 %v4822, 1.442695
    %v4824 = vpow.pop %v4823
    %v4825 = vadd.f32 %v4824, 1.0
    %v4826 = vrcp.pop %v4825
    %v4827 = vmul.f32 1.0, %v4826
    %v4828 = vadd.f32 %v4805, %v365
    %v4829 = vmul.f32 %v4820, %v4828
    %v4830 = vadd.f32 %v4811, %v4829
    %v4831 = vtanh.pop %v4830
    %v4832 = vadd.f32 %v4805, %v642
    %4834 = vrot.lane.b32.xlu0 %v4832, 64
    %v4835 = vpop.permute.xlu0 %4834
    %v4837 = vmul.f32 %v4827, %v4835
    %v4838 = vadd.f32 %v4813, %v4837
    %v4839 = vtanh.pop %v4838
    %s4840 = sadd.s32 %s374, 12
    %v4841 = vstv %s4840
    %vm4842 = vcmp.lt.s32.totalorder %v4841, %v359
    %v4843 = vsub.f32 1.0, %v4820
    %4845 = vrot.lane.b32.xlu0 %v4831, 64
    %v4846 = vpop.permute.xlu0 %4845
    %v4848 = vmul.f32 %v4843, %v4846
    %4850 = vrot.lane.b32.xlu0 %v4553, 64
    %v4851 = vpop.permute.xlu0 %4850
    %v4853 = vmul.f32 %v4820, %v4851
    %v4854 = vadd.f32 %v4848, %v4853
    %v4855 = vsel %vm4842, 1, 0
    %4856 = vset.pattern.permute.xlu0 0
    %4857 = vperm.xlu0 %4856, %v4855
    %v4858 = vpop.permute.xlu0 %4857
    %vm4859 = vcmp.eq.s32.totalorder %v4858, 1
    %v4860 = vsel %vm4859, %v4854, %v4851
    %v4861 = vstv %s376
    %vm4862 = vcmp.lt.s32.totalorder %v4861, %v359
    %v4863 = vsub.f32 1.0, %v4827
    %4865 = vrot.lane.b32.xlu0 %v4839, 64
    %v4866 = vpop.permute.xlu0 %4865
    %v4868 = vmul.f32 %v4863, %v4866
    %v4869 = vmul.f32 %v4827, %v4553
    %v4870 = vadd.f32 %v4868, %v4869
    %v4871 = vsel %vm4862, 1, 0
    %4872 = vset.pattern.permute.xlu0 0
    %4873 = vperm.xlu0 %4872, %v4871
    %v4874 = vpop.permute.xlu0 %4873
    %vm4875 = vcmp.eq.s32.totalorder %v4874, 1
    %v4876 = vsel %vm4875, %v4870, %v4553
    %4878 = vrot.lane.b32.xlu0 %v4860, 64
    %v4879 = vpop.permute.xlu0 %4878
    %v4881 = vsel %vm233, %v4879, %v4876
    %v4882 = vpack.c.bf16 %v4860, %v4860
    %v4884 = vunpack.c.l.b16 %v4882
    %v4885 = vpack.c.b16 %v4884, %v4884
    %4886 = vrot.lane.b32.xlu0 %v4885, 64
    %v4887 = vpop.permute.xlu0 %4886
    %4889 = vst.msk [vmem:[#allocation14 + $0xc] sm:$0x1] %vm701, %v4887
    %v4890 = vpack.c.bf16 %v4876, %v4876
    %v4892 = vunpack.c.l.b16 %v4890
    %v4893 = vpack.c.b16 %v4892, %v4892
    %4894 = vrot.lane.b32.xlu0 %v4893, 64
    %v4895 = vpop.permute.xlu0 %4894
    %4897 = vst.msk [vmem:[#allocation15] sm:$0x1] %vm701, %v4895
    %4898 = vst [vmem:[#allocation4] sm:$0x3] %v4881
    // Predicated region
    $region66: #{tpu_custom_call.1} parent=1 // pred_check
      %p4899 = pneg %p117
    $region67: #{tpu_custom_call.1} parent=1 // pred_check_branch
      %4901 = sbr.rel (%p4899) target = $region69
    $region68: #{tpu_custom_call.1} parent=1 // pred_region
      %4902 = vst [vmem:[#allocation17] sm:$0x3] %v4881
    $region69: #{tpu_custom_call.1} parent=1 // pred_fallthru
      _
    // Predicated region
    $region70: #{tpu_custom_call.1} parent=1 // pred_check
      _
    $region71: #{tpu_custom_call.1} parent=1 // pred_check_branch
      %4904 = sbr.rel (0) target = $region73
    $region72: #{tpu_custom_call.1} parent=1 // pred_region
      %s4906 = ssub.s32 256, 256
      %4907 = vsyncadd [#allocation7], %s4906
      %s4908 = sshll.u32 [#allocation14], 4
      %s4909 = int_to_ptr.vmem [resolvable:$true] %s4908
      %4914 = dma.vmem_to_hbm [thread:$0]  %s4909, 256, %s10, [#allocation7], 64, 64, 4
    $region73: #{tpu_custom_call.1} parent=1 // pred_fallthru
      _
    // Predicated region
    $region74: #{tpu_custom_call.1} parent=1 // pred_check
      _
    $region75: #{tpu_custom_call.1} parent=1 // pred_check_branch
      %4916 = sbr.rel (0) target = $region77
    $region76: #{tpu_custom_call.1} parent=1 // pred_region
      %s4917 = ssub.s32 0, 0
      %s4918 = smul.u32 4, %s4917
      %s4920 = ssub.s32 256, 256
      %4921 = vsyncadd [#allocation16], %s4920
      %s4922 = smul.addr %s4918, 64
      %s4923 = scalar_lea.hbm %s11, %s4922
      %s4924 = sshll.u32 [#allocation15], 4
      %s4925 = int_to_ptr.vmem [resolvable:$true] %s4924
      %4930 = dma.vmem_to_hbm [thread:$0]  %s4925, 256, %s4923, [#allocation16], 64, 64, 4
    $region77: #{tpu_custom_call.1} parent=1 // pred_fallthru
      _
    // Predicated region
    $region78: #{tpu_custom_call.1} parent=1 // pred_check
      _
    $region79: #{tpu_custom_call.1} parent=1 // pred_check_branch
      %4932 = sbr.rel (0) target = $region81
    $region80: #{tpu_custom_call.1} parent=1 // pred_region
      %s4934 = ssub.s32 32, 32
      %4935 = vsyncadd [#allocation16], %s4934
      %s4937 = sshll.u32 [#allocation17], 4
      %s4938 = int_to_ptr.vmem [resolvable:$true] %s4937
      %4940 = dma.vmem_to_hbm [thread:$0]  %s4938, 32, %s12, [#allocation16]
    $region81: #{tpu_custom_call.1} parent=1 // pred_fallthru
      _
    // Predicated region
    $region82: #{tpu_custom_call.1} parent=1 // pred_check
      _
    $region83: #{tpu_custom_call.1} parent=1 // pred_check_branch
      %4942 = sbr.rel (0) target = $region85
    $region84: #{tpu_custom_call.1} parent=1 // pred_region
      %4943 = dma.done [#allocation7], 256
    $region85: #{tpu_custom_call.1} parent=1 // pred_fallthru
      _
    // Predicated region
    $region86: #{tpu_custom_call.1} parent=1 // pred_check
      _
    $region87: #{tpu_custom_call.1} parent=1 // pred_check_branch
      %4945 = sbr.rel (0) target = $region89
    $region88: #{tpu_custom_call.1} parent=1 // pred_region
      %4946 = dma.done [#allocation16], 256
    $region89: #{tpu_custom_call.1} parent=1 // pred_fallthru
      _
    // Predicated region
    $region90: #{tpu_custom_call.1} parent=1 // pred_check
      _
    $region91: #{tpu_custom_call.1} parent=1 // pred_check_branch
      %4948 = sbr.rel (0) target = $region93
    $region92: #{tpu_custom_call.1} parent=1 // pred_region
      %4949 = dma.done [#allocation16], 32
    $region93: #{tpu_custom_call.1} parent=1 // pred_fallthru
      _
    %4950 = vsyncpa [#allocation6], 1
    %4951 = vsyncpa [#allocation9], 1
    %4952 = vsyncpa [#allocation12], 1
    %4953 = vsyncpa [#allocation7], 1
    %4954 = vsyncpa [#allocation16], 1

</llo_original>
